<compile_context>
chip_gen: v7x
topology: tpu7x:2x2x1
jax: 0.10.0
libtpu: 0.0.40
codegen_flags: <defaults>
</compile_context>

<pallas_src>
import functools

import numpy as np
import jax
import jax.numpy as jnp
from jax.experimental import pallas as pl
from jax.experimental.pallas import tpu as pltpu


# ----------------------------------------------------------------------------
# in-kernel helpers (pure VMEM work)
# ----------------------------------------------------------------------------

def _layernorm(x, g, b, eps):
    mu = jnp.mean(x, axis=-1, keepdims=True)
    xc = x - mu
    var = jnp.mean(xc * xc, axis=-1, keepdims=True)
    return xc * jax.lax.rsqrt(var + eps) * g + b


def _nonpad(x):
    return (jnp.sum(jnp.abs(x), axis=-1, keepdims=True) > 0).astype(jnp.float32)


# ----------------------------------------------------------------------------
# fully fused Pallas kernel: pre conv -> n_layers residual layers -> tail
# ----------------------------------------------------------------------------

def _unet_mid_kernel(x_ref, pre_w_ref, pre_b_ref,
                     g_ref, bln_ref, w1_ref, b1_ref, w2_ref, b2_ref,
                     last_g_ref, last_b_ref,
                     pn1_w_ref, pn1_b_ref, post_w_ref, post_b_ref,
                     o_ref, *, n_layers, n_sub, neg_slope, eps):
    bblk, T, cin = x_ref.shape
    M = bblk * T                                  # MXU M dim: bblk sequences stacked
    L = n_layers * n_sub
    k_pre = pre_w_ref.shape[0]
    k_mid = w1_ref.shape[0] // L
    k_pn1 = pn1_w_ref.shape[0]
    k_post = post_w_ref.shape[0]

    # row index within its own sequence (hoisted once; sequences stacked on rows)
    tmod = jax.lax.broadcasted_iota(jnp.int32, (M, 1), 0) % T

    # cached per-shift boundary masks (JAX does not CSE broadcasts -> hoist)
    _masks = {}
    def seq_mask(d):
        if d not in _masks:
            if d > 0:
                _masks[d] = (tmod < (T - d)).astype(jnp.float32)
            else:
                _masks[d] = (tmod >= (-d)).astype(jnp.float32)
        return _masks[d]

    def conv(h, w_ref, base, K, b):
        """'same' Conv1d on the (M, Cin) slab as K shifted MXU dots (f32 acc).

        Time shifts use pltpu.roll along the row axis (XLU) + a per-sequence
        boundary mask so taps never cross the bblk sequence boundaries.
        w_ref[base + j] is the (Cin, Cout) weight of tap j (bf16)."""
        pad_lo = K // 2
        acc = jnp.zeros((M, w_ref.shape[-1]), jnp.float32)
        for j in range(K):
            d = j - pad_lo                        # this tap reads row t + d
            hv = h
            if d != 0:
                hv = pltpu.roll(h, shift=(-d) % M, axis=0)   # row t <- row t+d
                hv = hv * seq_mask(d)             # zero taps outside the sequence
            acc = acc + jnp.dot(hv.astype(w_ref.dtype), w_ref[base + j],
                                preferred_element_type=jnp.float32)
        return acc + b

    # ---- pre conv + nonpadding mask of its output (mask stays in VMEM) ----
    x = x_ref[...].reshape(M, cin).astype(jnp.float32)
    x = conv(x, pre_w_ref, 0, k_pre, pre_b_ref[...])
    nonpad = _nonpad(x)                           # used by the tail (as reference)

    # ---- residual layers (k**-0.5 already folded into w1/b1) ----
    li = 0
    for _ in range(n_layers):
        m = _nonpad(x)                            # per-ResidualBlock mask
        for _ in range(n_sub):
            h = _layernorm(x, g_ref[li], bln_ref[li], eps)
            h = conv(h, w1_ref, li * k_mid, k_mid, b1_ref[li])   # H -> 2H, k
            h = jnp.where(h >= 0, h, neg_slope * h)              # LeakyReLU
            h = conv(h, w2_ref, li, 1, b2_ref[li])               # 2H -> H, 1x1
            x = (x + h) * m
            li += 1

    # ---- tail: *nonpad -> last LN -> *nonpad -> post_net1 -> post ----
    x = x * nonpad
    x = _layernorm(x, last_g_ref[...], last_b_ref[...], eps) * nonpad
    x = conv(x, pn1_w_ref, 0, k_pn1, pn1_b_ref[...])
    x = conv(x, post_w_ref, 0, k_post, post_b_ref[...])
    o_ref[...] = x.reshape(bblk, T, -1).astype(o_ref.dtype)


# ----------------------------------------------------------------------------
# wrapper: one pallas_call per forward; grid over batch groups ('parallel')
# ----------------------------------------------------------------------------

_PARALLEL = pltpu.CompilerParams(dimension_semantics=("parallel",))


def _full_spec(shape):
    return pl.BlockSpec(shape, lambda i, _n=len(shape): (0,) * _n)


def _pick_batch_block(B, T):
    """Sequences per grid step: fill the MXU M dim (~128 rows) while keeping
    >=2 grid steps when B allows it (feeds both v7x TensorCores)."""
    target = max(1, pl.cdiv(128, T))
    bblk = min(B, target)
    if B >= 2:
        bblk = max(1, min(bblk, B // 2))
    while B % bblk:
        bblk -= 1
    return bblk


def unet_mid_forward(fp, x, *, n_layers, layers_in_block=2,
                     eps=1e-5, neg_slope=0.2, batch_block=None):
    """x: [B, T, in_dims] (BTC, is_BTC=True), cond=None."""
    B, T, cin = x.shape
    cout = fp["post_b"].shape[-1]
    bblk = batch_block if batch_block is not None else _pick_batch_block(B, T)
    assert B % bblk == 0, (B, bblk)

    kern = functools.partial(_unet_mid_kernel, n_layers=n_layers,
                             n_sub=layers_in_block, neg_slope=neg_slope, eps=eps)
    args = (x, fp["pre_w"], fp["pre_b"], fp["g"], fp["b_ln"], fp["w1"], fp["b1"],
            fp["w2"], fp["b2"], fp["last_g"], fp["last_b"], fp["pn1_w"],
            fp["pn1_b"], fp["post_w"], fp["post_b"])
    # weights: full blocks with constant index maps -> DMA'd once, reused
    in_specs = ([pl.BlockSpec((bblk, T, cin), lambda i: (i, 0, 0))] +
                [_full_spec(a.shape) for a in args[1:]])

    return pl.pallas_call(
        kern,
        out_shape=jax.ShapeDtypeStruct((B, T, cout), x.dtype),
        grid_spec=pltpu.PrefetchScalarGridSpec(
            num_scalar_prefetch=0, grid=(B // bblk,),
            in_specs=in_specs,
            out_specs=pl.BlockSpec((bblk, T, cout), lambda i: (i, 0, 0))),
        compiler_params=_PARALLEL,
    )(*args)


# ----------------------------------------------------------------------------
# one-time param transform: per-tap weight stacking, bf16 weights,
# conv1 k**-0.5 fold, biases/LN params as (1, C) f32 row vectors
# ----------------------------------------------------------------------------

def prepare_params(params, k, *, matmul_dtype=jnp.bfloat16):
    scale = float(k) ** -0.5

    def w_c(w):                               # weights stored in matmul dtype
        return w.astype(matmul_dtype)

    fp = {
        "pre_w":  w_c(params["pre"]["w"]),                       # (K, Cin, H)
        "pre_b":  params["pre"]["b"][None, :],
        "pn1_w":  w_c(params["post_net1"]["w"]),                 # (K1, H, H)
        "pn1_b":  params["post_net1"]["b"][None, :],
        "post_w": w_c(params["post"]["w"]),                      # (K2, H, Cout)
        "post_b": params["post"]["b"][None, :],
        "last_g": params["last_ln"]["g"][None, :],
        "last_b": params["last_ln"]["b"][None, :],
    }
    blks = [blk for layer in params["blocks"] for blk in layer]  # L = n_layers*n_sub
    fp["g"]    = jnp.stack([b["ln"]["g"][None, :] for b in blks])            # (L,1,H)
    fp["b_ln"] = jnp.stack([b["ln"]["b"][None, :] for b in blks])            # (L,1,H)
    fp["w1"]   = jnp.concatenate([w_c(b["conv1"]["w"] * scale) for b in blks], 0)  # (L*K,H,2H)
    fp["b1"]   = jnp.stack([b["conv1"]["b"][None, :] * scale for b in blks])       # (L,1,2H)
    fp["w2"]   = jnp.concatenate([w_c(b["conv2"]["w"]) for b in blks], 0)           # (L,2H,H)
    fp["b2"]   = jnp.stack([b["conv2"]["b"][None, :] for b in blks])                # (L,1,H)
    return fp


# ----------------------------------------------------------------------------
# Pure-JAX reference (cross-check against the Pallas path)
# ----------------------------------------------------------------------------

def _conv1d_ref(x, w, b):
    K = w.shape[0]
    lhs = jnp.transpose(x, (0, 2, 1))                # [B, Cin, T]
    rhs = jnp.transpose(w, (2, 1, 0))                # [Cout, Cin, K]
    out = jax.lax.conv_general_dilated(
        lhs, rhs, (1,), [(K // 2, K - 1 - K // 2)],
        dimension_numbers=("NCH", "OIH", "NCH"))
    out = out + b[None, :, None]
    return jnp.transpose(out, (0, 2, 1))


def unet_mid_ref(params, x, *, k, eps=1e-5, neg_slope=0.2):
    def ln(v, g, b):
        mu = jnp.mean(v, -1, keepdims=True)
        var = jnp.mean((v - mu) ** 2, -1, keepdims=True)
        return (v - mu) * jax.lax.rsqrt(var + eps) * g + b

    def lrelu(v):
        return jnp.where(v >= 0, v, neg_slope * v)

    def mask_of(v):
        return (jnp.sum(jnp.abs(v), -1, keepdims=True) > 0).astype(v.dtype)

    cur = _conv1d_ref(x, params["pre"]["w"], params["pre"]["b"])
    nonpad = mask_of(cur)
    for layer in params["blocks"]:
        m = mask_of(cur)
        for blk in layer:
            z = ln(cur, blk["ln"]["g"], blk["ln"]["b"])
            z = _conv1d_ref(z, blk["conv1"]["w"], blk["conv1"]["b"]) * (float(k) ** -0.5)
            z = lrelu(z)
            z = _conv1d_ref(z, blk["conv2"]["w"], blk["conv2"]["b"])
            cur = (cur + z) * m
    cur = cur * nonpad
    cur = ln(cur, params["last_ln"]["g"], params["last_ln"]["b"]) * nonpad
    cur = _conv1d_ref(cur, params["post_net1"]["w"], params["post_net1"]["b"])
    return _conv1d_ref(cur, params["post"]["w"], params["post"]["b"])


# ----------------------------------------------------------------------------
# Deterministic parameter construction (synthetic — no checkpoint)
# ----------------------------------------------------------------------------

def init_params(key, in_dims, hidden, out_dims, k, n_layers,
                c_multiple=2, layers_in_block=2, post_net_kernel=3):
    keys = iter(jax.random.split(key, 256))

    def conv_p(cin, cout, ksz):
        w = jax.random.normal(next(keys), (ksz, cin, cout), jnp.float32)
        w = w / jnp.sqrt(float(cin * ksz))
        b = 0.01 * jax.random.normal(next(keys), (cout,), jnp.float32)
        return {"w": w, "b": b}

    def ln_p(c):
        g = 1.0 + 0.1 * jax.random.normal(next(keys), (c,), jnp.float32)
        b = 0.1 * jax.random.normal(next(keys), (c,), jnp.float32)
        return {"g": g, "b": b}

    params = {
        "pre": conv_p(in_dims, hidden, k),
        "post": conv_p(hidden, out_dims, k),
        "post_net1": conv_p(hidden, hidden, post_net_kernel),
        "last_ln": ln_p(hidden),
        "blocks": [],
    }
    for _ in range(n_layers):
        layer = []
        for _ in range(layers_in_block):
            layer.append({
                "ln": ln_p(hidden),
                "conv1": conv_p(hidden, c_multiple * hidden, k),
                "conv2": conv_p(c_multiple * hidden, hidden, 1),
            })
        params["blocks"].append(layer)
    return params


# ----------------------------------------------------------------------------

if __name__ == "__main__":
    B, T = 4, 16                       # bblk=2 -> exercises multi-sequence rows
    in_dims, hidden, out_dims = 8, 32, 8
    kernel_size, n_layers = 3, 2

    key = jax.random.PRNGKey(0)
    kp, kx = jax.random.split(key)
    params = init_params(kp, in_dims, hidden, out_dims, kernel_size, n_layers)
    x = jax.random.normal(kx, (B, T, in_dims), jnp.float32)   # BTC input

    fp = prepare_params(params, kernel_size)                  # one-time transform
    fwd = jax.jit(functools.partial(unet_mid_forward,
                                    n_layers=n_layers, layers_in_block=2))
    out = jax.block_until_ready(fwd(fp, x))

    assert out.shape == (B, T, out_dims), out.shape
    ref = unet_mid_ref(params, x, k=kernel_size)
    np.testing.assert_allclose(np.asarray(out), np.asarray(ref),
                               rtol=5e-2, atol=5e-2)
    print("KERNEL_OK")
</pallas_src>

<mosaic_0001>
module attributes {stable_mosaic.version = 11 : i64} {
  func.func @_unet_mid_kernel(%arg0: i32, %arg1: memref<2x16x8xf32, #tpu.memory_space<vmem>>, %arg2: memref<3x8x32xbf16, #tpu.memory_space<vmem>>, %arg3: memref<1x32xf32, #tpu.memory_space<vmem>>, %arg4: memref<4x1x32xf32, #tpu.memory_space<vmem>>, %arg5: memref<4x1x32xf32, #tpu.memory_space<vmem>>, %arg6: memref<12x32x64xbf16, #tpu.memory_space<vmem>>, %arg7: memref<4x1x64xf32, #tpu.memory_space<vmem>>, %arg8: memref<4x64x32xbf16, #tpu.memory_space<vmem>>, %arg9: memref<4x1x32xf32, #tpu.memory_space<vmem>>, %arg10: memref<1x32xf32, #tpu.memory_space<vmem>>, %arg11: memref<1x32xf32, #tpu.memory_space<vmem>>, %arg12: memref<3x32x32xbf16, #tpu.memory_space<vmem>>, %arg13: memref<1x32xf32, #tpu.memory_space<vmem>>, %arg14: memref<3x32x8xbf16, #tpu.memory_space<vmem>>, %arg15: memref<1x8xf32, #tpu.memory_space<vmem>>, %arg16: memref<2x16x8xf32, #tpu.memory_space<vmem>>) attributes {dimension_semantics = [#tpu.dimension_semantics<parallel>], iteration_bounds = array<i64: 2>, scalar_prefetch = 0 : i64, scratch_operands = 0 : i64, tpu.core_type = #tpu.core_type<tc>, window_params = [{transform_indices = @transform_0, window_bounds = array<i64: 2, 16, 8>}, {pipeline_mode = #tpu.pipeline_mode<synchronous>, transform_indices = @transform_1, window_bounds = array<i64: 3, 8, 32>}, {pipeline_mode = #tpu.pipeline_mode<synchronous>, transform_indices = @transform_2, window_bounds = array<i64: 1, 32>}, {pipeline_mode = #tpu.pipeline_mode<synchronous>, transform_indices = @transform_3, window_bounds = array<i64: 4, 1, 32>}, {pipeline_mode = #tpu.pipeline_mode<synchronous>, transform_indices = @transform_4, window_bounds = array<i64: 4, 1, 32>}, {pipeline_mode = #tpu.pipeline_mode<synchronous>, transform_indices = @transform_5, window_bounds = array<i64: 12, 32, 64>}, {pipeline_mode = #tpu.pipeline_mode<synchronous>, transform_indices = @transform_6, window_bounds = array<i64: 4, 1, 64>}, {pipeline_mode = #tpu.pipeline_mode<synchronous>, transform_indices = @transform_7, window_bounds = array<i64: 4, 64, 32>}, {pipeline_mode = #tpu.pipeline_mode<synchronous>, transform_indices = @transform_8, window_bounds = array<i64: 4, 1, 32>}, {pipeline_mode = #tpu.pipeline_mode<synchronous>, transform_indices = @transform_9, window_bounds = array<i64: 1, 32>}, {pipeline_mode = #tpu.pipeline_mode<synchronous>, transform_indices = @transform_10, window_bounds = array<i64: 1, 32>}, {pipeline_mode = #tpu.pipeline_mode<synchronous>, transform_indices = @transform_11, window_bounds = array<i64: 3, 32, 32>}, {pipeline_mode = #tpu.pipeline_mode<synchronous>, transform_indices = @transform_12, window_bounds = array<i64: 1, 32>}, {pipeline_mode = #tpu.pipeline_mode<synchronous>, transform_indices = @transform_13, window_bounds = array<i64: 3, 32, 8>}, {pipeline_mode = #tpu.pipeline_mode<synchronous>, transform_indices = @transform_14, window_bounds = array<i64: 1, 8>}, {transform_indices = @transform_15, window_bounds = array<i64: 2, 16, 8>}]} {
    %0 = tpu.iota {dimensions = array<i32: 0>} : vector<32x1xi32>
    %c16_i32 = arith.constant 16 : i32
    %c0_i32 = arith.constant 0 : i32
    %1 = arith.cmpi eq, %c16_i32, %c0_i32 : i32
    %c1_i32 = arith.constant 1 : i32
    %2 = arith.select %1, %c1_i32, %c16_i32 : i32
    %3 = vector.broadcast %2 : i32 to vector<32x1xi32>
    %4 = arith.remsi %0, %3 : vector<32x1xi32>
    %c0_i32_0 = arith.constant 0 : i32
    %5 = vector.broadcast %c0_i32_0 : i32 to vector<32x1xi32>
    %6 = arith.cmpi ne, %4, %5 : vector<32x1xi32>
    %c0_i32_1 = arith.constant 0 : i32
    %7 = vector.broadcast %c0_i32_1 : i32 to vector<32x1xi32>
    %8 = arith.cmpi slt, %4, %7 : vector<32x1xi32>
    %c0_i32_2 = arith.constant 0 : i32
    %9 = arith.cmpi slt, %2, %c0_i32_2 : i32
    %10 = vector.broadcast %9 : i1 to vector<32x1xi1>
    %11 = vector.broadcast %10 : vector<32x1xi1> to vector<32x1xi1>
    %12 = arith.xori %8, %11 : vector<32x1xi1>
    %13 = arith.andi %12, %6 : vector<32x1xi1>
    %14 = vector.broadcast %2 : i32 to vector<32x1xi32>
    %15 = arith.addi %4, %14 : vector<32x1xi32>
    %16 = arith.select %13, %15, %4 : vector<32x1xi1>, vector<32x1xi32>
    %c0 = arith.constant 0 : index
    %c0_3 = arith.constant 0 : index
    %c0_4 = arith.constant 0 : index
    %17 = vector.load %arg1[%c0, %c0_3, %c0_4] : memref<2x16x8xf32, #tpu.memory_space<vmem>>, vector<2x16x8xf32>
    %18 = vector.shape_cast %17 : vector<2x16x8xf32> to vector<32x8xf32>
    %c0_5 = arith.constant 0 : index
    %c0_6 = arith.constant 0 : index
    %19 = vector.load %arg3[%c0_5, %c0_6] : memref<1x32xf32, #tpu.memory_space<vmem>>, vector<1x32xf32>
    %cst = arith.constant 0.000000e+00 : f32
    %20 = vector.broadcast %cst : f32 to vector<32x32xf32>
    %c1_i32_7 = arith.constant 1 : i32
    %21 = tpu.dynamic_rotate %18 by %c1_i32_7 dim 0 : vector<32x8xf32>, i32 -> vector<32x8xf32>
    %c1_i32_8 = arith.constant 1 : i32
    %22 = vector.broadcast %c1_i32_8 : i32 to vector<32x1xi32>
    %23 = arith.cmpi sge, %16, %22 : vector<32x1xi32>
    %24 = arith.extui %23 : vector<32x1xi1> to vector<32x1xi32>
    %25 = arith.sitofp %24 : vector<32x1xi32> to vector<32x1xf32>
    %26 = vector.broadcast %25 : vector<32x1xf32> to vector<32x8xf32>
    %27 = arith.mulf %21, %26 : vector<32x8xf32>
    %28 = arith.truncf %27 : vector<32x8xf32> to vector<32x8xbf16>
    %c0_9 = arith.constant 0 : index
    %c0_10 = arith.constant 0 : index
    %c0_11 = arith.constant 0 : index
    %29 = vector.load %arg2[%c0_9, %c0_10, %c0_11] : memref<3x8x32xbf16, #tpu.memory_space<vmem>>, vector<1x8x32xbf16>
    %30 = vector.shape_cast %29 : vector<1x8x32xbf16> to vector<8x32xbf16>
    %cst_12 = arith.constant dense<0.000000e+00> : vector<32x32xf32>
    %31 = tpu.matmul %28, %30, %cst_12 {dimension_numbers = #tpu.dot_dimension_numbers<[1], [0], [0], [1], [0, 0, 1, 1], [], []>} : vector<32x8xbf16>, vector<8x32xbf16>, vector<32x32xf32> -> vector<32x32xf32>
    %32 = arith.addf %20, %31 : vector<32x32xf32>
    %33 = arith.truncf %18 : vector<32x8xf32> to vector<32x8xbf16>
    %c1 = arith.constant 1 : index
    %c0_13 = arith.constant 0 : index
    %c0_14 = arith.constant 0 : index
    %34 = vector.load %arg2[%c1, %c0_13, %c0_14] : memref<3x8x32xbf16, #tpu.memory_space<vmem>>, vector<1x8x32xbf16>
    %35 = vector.shape_cast %34 : vector<1x8x32xbf16> to vector<8x32xbf16>
    %cst_15 = arith.constant dense<0.000000e+00> : vector<32x32xf32>
    %36 = tpu.matmul %33, %35, %cst_15 {dimension_numbers = #tpu.dot_dimension_numbers<[1], [0], [0], [1], [0, 0, 1, 1], [], []>} : vector<32x8xbf16>, vector<8x32xbf16>, vector<32x32xf32> -> vector<32x32xf32>
    %37 = arith.addf %32, %36 : vector<32x32xf32>
    %c31_i32 = arith.constant 31 : i32
    %38 = tpu.dynamic_rotate %18 by %c31_i32 dim 0 : vector<32x8xf32>, i32 -> vector<32x8xf32>
    %c15_i32 = arith.constant 15 : i32
    %39 = vector.broadcast %c15_i32 : i32 to vector<32x1xi32>
    %40 = arith.cmpi slt, %16, %39 : vector<32x1xi32>
    %41 = arith.extui %40 : vector<32x1xi1> to vector<32x1xi32>
    %42 = arith.sitofp %41 : vector<32x1xi32> to vector<32x1xf32>
    %43 = vector.broadcast %42 : vector<32x1xf32> to vector<32x8xf32>
    %44 = arith.mulf %38, %43 : vector<32x8xf32>
    %45 = arith.truncf %44 : vector<32x8xf32> to vector<32x8xbf16>
    %c2 = arith.constant 2 : index
    %c0_16 = arith.constant 0 : index
    %c0_17 = arith.constant 0 : index
    %46 = vector.load %arg2[%c2, %c0_16, %c0_17] : memref<3x8x32xbf16, #tpu.memory_space<vmem>>, vector<1x8x32xbf16>
    %47 = vector.shape_cast %46 : vector<1x8x32xbf16> to vector<8x32xbf16>
    %cst_18 = arith.constant dense<0.000000e+00> : vector<32x32xf32>
    %48 = tpu.matmul %45, %47, %cst_18 {dimension_numbers = #tpu.dot_dimension_numbers<[1], [0], [0], [1], [0, 0, 1, 1], [], []>} : vector<32x8xbf16>, vector<8x32xbf16>, vector<32x32xf32> -> vector<32x32xf32>
    %49 = arith.addf %37, %48 : vector<32x32xf32>
    %50 = vector.broadcast %19 : vector<1x32xf32> to vector<32x32xf32>
    %51 = arith.addf %49, %50 : vector<32x32xf32>
    %52 = math.absf %51 : vector<32x32xf32>
    %cst_19 = arith.constant dense<0.000000e+00> : vector<32xf32>
    %53 = vector.multi_reduction <add>, %52, %cst_19 [1] : vector<32x32xf32> to vector<32xf32>
    %54 = vector.shape_cast %53 : vector<32xf32> to vector<32x1xf32>
    %cst_20 = arith.constant 0.000000e+00 : f32
    %55 = vector.broadcast %cst_20 : f32 to vector<32x1xf32>
    %56 = arith.cmpf ogt, %54, %55 : vector<32x1xf32>
    %57 = arith.extui %56 : vector<32x1xi1> to vector<32x1xi32>
    %58 = arith.sitofp %57 : vector<32x1xi32> to vector<32x1xf32>
    %59 = math.absf %51 : vector<32x32xf32>
    %cst_21 = arith.constant dense<0.000000e+00> : vector<32xf32>
    %60 = vector.multi_reduction <add>, %59, %cst_21 [1] : vector<32x32xf32> to vector<32xf32>
    %61 = vector.shape_cast %60 : vector<32xf32> to vector<32x1xf32>
    %cst_22 = arith.constant 0.000000e+00 : f32
    %62 = vector.broadcast %cst_22 : f32 to vector<32x1xf32>
    %63 = arith.cmpf ogt, %61, %62 : vector<32x1xf32>
    %64 = arith.extui %63 : vector<32x1xi1> to vector<32x1xi32>
    %65 = arith.sitofp %64 : vector<32x1xi32> to vector<32x1xf32>
    %c0_23 = arith.constant 0 : index
    %c0_24 = arith.constant 0 : index
    %c0_25 = arith.constant 0 : index
    %66 = vector.load %arg4[%c0_23, %c0_24, %c0_25] : memref<4x1x32xf32, #tpu.memory_space<vmem>>, vector<1x1x32xf32>
    %67 = vector.shape_cast %66 : vector<1x1x32xf32> to vector<1x32xf32>
    %c0_26 = arith.constant 0 : index
    %c0_27 = arith.constant 0 : index
    %c0_28 = arith.constant 0 : index
    %68 = vector.load %arg5[%c0_26, %c0_27, %c0_28] : memref<4x1x32xf32, #tpu.memory_space<vmem>>, vector<1x1x32xf32>
    %69 = vector.shape_cast %68 : vector<1x1x32xf32> to vector<1x32xf32>
    %cst_29 = arith.constant dense<0.000000e+00> : vector<32xf32>
    %70 = vector.multi_reduction <add>, %51, %cst_29 [1] : vector<32x32xf32> to vector<32xf32>
    %71 = vector.shape_cast %70 : vector<32xf32> to vector<32x1xf32>
    %cst_30 = arith.constant 3.200000e+01 : f32
    %72 = vector.broadcast %cst_30 : f32 to vector<32x1xf32>
    %73 = arith.divf %71, %72 : vector<32x1xf32>
    %74 = vector.broadcast %73 : vector<32x1xf32> to vector<32x32xf32>
    %75 = arith.subf %51, %74 : vector<32x32xf32>
    %76 = arith.mulf %75, %75 : vector<32x32xf32>
    %cst_31 = arith.constant dense<0.000000e+00> : vector<32xf32>
    %77 = vector.multi_reduction <add>, %76, %cst_31 [1] : vector<32x32xf32> to vector<32xf32>
    %78 = vector.shape_cast %77 : vector<32xf32> to vector<32x1xf32>
    %cst_32 = arith.constant 3.200000e+01 : f32
    %79 = vector.broadcast %cst_32 : f32 to vector<32x1xf32>
    %80 = arith.divf %78, %79 : vector<32x1xf32>
    %cst_33 = arith.constant 9.99999974E-6 : f32
    %81 = vector.broadcast %cst_33 : f32 to vector<32x1xf32>
    %82 = arith.addf %80, %81 : vector<32x1xf32>
    %83 = math.rsqrt %82 : vector<32x1xf32>
    %84 = vector.broadcast %83 : vector<32x1xf32> to vector<32x32xf32>
    %85 = arith.mulf %75, %84 : vector<32x32xf32>
    %86 = vector.broadcast %67 : vector<1x32xf32> to vector<32x32xf32>
    %87 = arith.mulf %85, %86 : vector<32x32xf32>
    %88 = vector.broadcast %69 : vector<1x32xf32> to vector<32x32xf32>
    %89 = arith.addf %87, %88 : vector<32x32xf32>
    %c0_34 = arith.constant 0 : index
    %c0_35 = arith.constant 0 : index
    %c0_36 = arith.constant 0 : index
    %90 = vector.load %arg7[%c0_34, %c0_35, %c0_36] : memref<4x1x64xf32, #tpu.memory_space<vmem>>, vector<1x1x64xf32>
    %91 = vector.shape_cast %90 : vector<1x1x64xf32> to vector<1x64xf32>
    %cst_37 = arith.constant 0.000000e+00 : f32
    %92 = vector.broadcast %cst_37 : f32 to vector<32x64xf32>
    %c1_i32_38 = arith.constant 1 : i32
    %93 = tpu.dynamic_rotate %89 by %c1_i32_38 dim 0 : vector<32x32xf32>, i32 -> vector<32x32xf32>
    %94 = vector.broadcast %25 : vector<32x1xf32> to vector<32x32xf32>
    %95 = arith.mulf %93, %94 : vector<32x32xf32>
    %96 = arith.truncf %95 : vector<32x32xf32> to vector<32x32xbf16>
    %c0_39 = arith.constant 0 : index
    %c0_40 = arith.constant 0 : index
    %c0_41 = arith.constant 0 : index
    %97 = vector.load %arg6[%c0_39, %c0_40, %c0_41] : memref<12x32x64xbf16, #tpu.memory_space<vmem>>, vector<1x32x64xbf16>
    %98 = vector.shape_cast %97 : vector<1x32x64xbf16> to vector<32x64xbf16>
    %cst_42 = arith.constant dense<0.000000e+00> : vector<32x64xf32>
    %99 = tpu.matmul %96, %98, %cst_42 {dimension_numbers = #tpu.dot_dimension_numbers<[1], [0], [0], [1], [0, 0, 1, 1], [], []>} : vector<32x32xbf16>, vector<32x64xbf16>, vector<32x64xf32> -> vector<32x64xf32>
    %100 = arith.addf %92, %99 : vector<32x64xf32>
    %101 = arith.truncf %89 : vector<32x32xf32> to vector<32x32xbf16>
    %c1_43 = arith.constant 1 : index
    %c0_44 = arith.constant 0 : index
    %c0_45 = arith.constant 0 : index
    %102 = vector.load %arg6[%c1_43, %c0_44, %c0_45] : memref<12x32x64xbf16, #tpu.memory_space<vmem>>, vector<1x32x64xbf16>
    %103 = vector.shape_cast %102 : vector<1x32x64xbf16> to vector<32x64xbf16>
    %cst_46 = arith.constant dense<0.000000e+00> : vector<32x64xf32>
    %104 = tpu.matmul %101, %103, %cst_46 {dimension_numbers = #tpu.dot_dimension_numbers<[1], [0], [0], [1], [0, 0, 1, 1], [], []>} : vector<32x32xbf16>, vector<32x64xbf16>, vector<32x64xf32> -> vector<32x64xf32>
    %105 = arith.addf %100, %104 : vector<32x64xf32>
    %c31_i32_47 = arith.constant 31 : i32
    %106 = tpu.dynamic_rotate %89 by %c31_i32_47 dim 0 : vector<32x32xf32>, i32 -> vector<32x32xf32>
    %107 = vector.broadcast %42 : vector<32x1xf32> to vector<32x32xf32>
    %108 = arith.mulf %106, %107 : vector<32x32xf32>
    %109 = arith.truncf %108 : vector<32x32xf32> to vector<32x32xbf16>
    %c2_48 = arith.constant 2 : index
    %c0_49 = arith.constant 0 : index
    %c0_50 = arith.constant 0 : index
    %110 = vector.load %arg6[%c2_48, %c0_49, %c0_50] : memref<12x32x64xbf16, #tpu.memory_space<vmem>>, vector<1x32x64xbf16>
    %111 = vector.shape_cast %110 : vector<1x32x64xbf16> to vector<32x64xbf16>
    %cst_51 = arith.constant dense<0.000000e+00> : vector<32x64xf32>
    %112 = tpu.matmul %109, %111, %cst_51 {dimension_numbers = #tpu.dot_dimension_numbers<[1], [0], [0], [1], [0, 0, 1, 1], [], []>} : vector<32x32xbf16>, vector<32x64xbf16>, vector<32x64xf32> -> vector<32x64xf32>
    %113 = arith.addf %105, %112 : vector<32x64xf32>
    %114 = vector.broadcast %91 : vector<1x64xf32> to vector<32x64xf32>
    %115 = arith.addf %113, %114 : vector<32x64xf32>
    %cst_52 = arith.constant 0.000000e+00 : f32
    %116 = vector.broadcast %cst_52 : f32 to vector<32x64xf32>
    %117 = arith.cmpf oge, %115, %116 : vector<32x64xf32>
    %cst_53 = arith.constant 2.000000e-01 : f32
    %118 = vector.broadcast %cst_53 : f32 to vector<32x64xf32>
    %119 = arith.mulf %118, %115 : vector<32x64xf32>
    %120 = arith.select %117, %115, %119 : vector<32x64xi1>, vector<32x64xf32>
    %c0_54 = arith.constant 0 : index
    %c0_55 = arith.constant 0 : index
    %c0_56 = arith.constant 0 : index
    %121 = vector.load %arg9[%c0_54, %c0_55, %c0_56] : memref<4x1x32xf32, #tpu.memory_space<vmem>>, vector<1x1x32xf32>
    %122 = vector.shape_cast %121 : vector<1x1x32xf32> to vector<1x32xf32>
    %cst_57 = arith.constant 0.000000e+00 : f32
    %123 = vector.broadcast %cst_57 : f32 to vector<32x32xf32>
    %124 = arith.truncf %120 : vector<32x64xf32> to vector<32x64xbf16>
    %c0_58 = arith.constant 0 : index
    %c0_59 = arith.constant 0 : index
    %c0_60 = arith.constant 0 : index
    %125 = vector.load %arg8[%c0_58, %c0_59, %c0_60] : memref<4x64x32xbf16, #tpu.memory_space<vmem>>, vector<1x64x32xbf16>
    %126 = vector.shape_cast %125 : vector<1x64x32xbf16> to vector<64x32xbf16>
    %cst_61 = arith.constant dense<0.000000e+00> : vector<32x32xf32>
    %127 = tpu.matmul %124, %126, %cst_61 {dimension_numbers = #tpu.dot_dimension_numbers<[1], [0], [0], [1], [0, 0, 1, 1], [], []>} : vector<32x64xbf16>, vector<64x32xbf16>, vector<32x32xf32> -> vector<32x32xf32>
    %128 = arith.addf %123, %127 : vector<32x32xf32>
    %129 = vector.broadcast %122 : vector<1x32xf32> to vector<32x32xf32>
    %130 = arith.addf %128, %129 : vector<32x32xf32>
    %131 = arith.addf %51, %130 : vector<32x32xf32>
    %132 = vector.broadcast %65 : vector<32x1xf32> to vector<32x32xf32>
    %133 = arith.mulf %131, %132 : vector<32x32xf32>
    %c1_62 = arith.constant 1 : index
    %c0_63 = arith.constant 0 : index
    %c0_64 = arith.constant 0 : index
    %134 = vector.load %arg4[%c1_62, %c0_63, %c0_64] : memref<4x1x32xf32, #tpu.memory_space<vmem>>, vector<1x1x32xf32>
    %135 = vector.shape_cast %134 : vector<1x1x32xf32> to vector<1x32xf32>
    %c1_65 = arith.constant 1 : index
    %c0_66 = arith.constant 0 : index
    %c0_67 = arith.constant 0 : index
    %136 = vector.load %arg5[%c1_65, %c0_66, %c0_67] : memref<4x1x32xf32, #tpu.memory_space<vmem>>, vector<1x1x32xf32>
    %137 = vector.shape_cast %136 : vector<1x1x32xf32> to vector<1x32xf32>
    %cst_68 = arith.constant dense<0.000000e+00> : vector<32xf32>
    %138 = vector.multi_reduction <add>, %133, %cst_68 [1] : vector<32x32xf32> to vector<32xf32>
    %139 = vector.shape_cast %138 : vector<32xf32> to vector<32x1xf32>
    %cst_69 = arith.constant 3.200000e+01 : f32
    %140 = vector.broadcast %cst_69 : f32 to vector<32x1xf32>
    %141 = arith.divf %139, %140 : vector<32x1xf32>
    %142 = vector.broadcast %141 : vector<32x1xf32> to vector<32x32xf32>
    %143 = arith.subf %133, %142 : vector<32x32xf32>
    %144 = arith.mulf %143, %143 : vector<32x32xf32>
    %cst_70 = arith.constant dense<0.000000e+00> : vector<32xf32>
    %145 = vector.multi_reduction <add>, %144, %cst_70 [1] : vector<32x32xf32> to vector<32xf32>
    %146 = vector.shape_cast %145 : vector<32xf32> to vector<32x1xf32>
    %cst_71 = arith.constant 3.200000e+01 : f32
    %147 = vector.broadcast %cst_71 : f32 to vector<32x1xf32>
    %148 = arith.divf %146, %147 : vector<32x1xf32>
    %cst_72 = arith.constant 9.99999974E-6 : f32
    %149 = vector.broadcast %cst_72 : f32 to vector<32x1xf32>
    %150 = arith.addf %148, %149 : vector<32x1xf32>
    %151 = math.rsqrt %150 : vector<32x1xf32>
    %152 = vector.broadcast %151 : vector<32x1xf32> to vector<32x32xf32>
    %153 = arith.mulf %143, %152 : vector<32x32xf32>
    %154 = vector.broadcast %135 : vector<1x32xf32> to vector<32x32xf32>
    %155 = arith.mulf %153, %154 : vector<32x32xf32>
    %156 = vector.broadcast %137 : vector<1x32xf32> to vector<32x32xf32>
    %157 = arith.addf %155, %156 : vector<32x32xf32>
    %c1_73 = arith.constant 1 : index
    %c0_74 = arith.constant 0 : index
    %c0_75 = arith.constant 0 : index
    %158 = vector.load %arg7[%c1_73, %c0_74, %c0_75] : memref<4x1x64xf32, #tpu.memory_space<vmem>>, vector<1x1x64xf32>
    %159 = vector.shape_cast %158 : vector<1x1x64xf32> to vector<1x64xf32>
    %cst_76 = arith.constant 0.000000e+00 : f32
    %160 = vector.broadcast %cst_76 : f32 to vector<32x64xf32>
    %c1_i32_77 = arith.constant 1 : i32
    %161 = tpu.dynamic_rotate %157 by %c1_i32_77 dim 0 : vector<32x32xf32>, i32 -> vector<32x32xf32>
    %162 = vector.broadcast %25 : vector<32x1xf32> to vector<32x32xf32>
    %163 = arith.mulf %161, %162 : vector<32x32xf32>
    %164 = arith.truncf %163 : vector<32x32xf32> to vector<32x32xbf16>
    %c3 = arith.constant 3 : index
    %c0_78 = arith.constant 0 : index
    %c0_79 = arith.constant 0 : index
    %165 = vector.load %arg6[%c3, %c0_78, %c0_79] : memref<12x32x64xbf16, #tpu.memory_space<vmem>>, vector<1x32x64xbf16>
    %166 = vector.shape_cast %165 : vector<1x32x64xbf16> to vector<32x64xbf16>
    %cst_80 = arith.constant dense<0.000000e+00> : vector<32x64xf32>
    %167 = tpu.matmul %164, %166, %cst_80 {dimension_numbers = #tpu.dot_dimension_numbers<[1], [0], [0], [1], [0, 0, 1, 1], [], []>} : vector<32x32xbf16>, vector<32x64xbf16>, vector<32x64xf32> -> vector<32x64xf32>
    %168 = arith.addf %160, %167 : vector<32x64xf32>
    %169 = arith.truncf %157 : vector<32x32xf32> to vector<32x32xbf16>
    %c4 = arith.constant 4 : index
    %c0_81 = arith.constant 0 : index
    %c0_82 = arith.constant 0 : index
    %170 = vector.load %arg6[%c4, %c0_81, %c0_82] : memref<12x32x64xbf16, #tpu.memory_space<vmem>>, vector<1x32x64xbf16>
    %171 = vector.shape_cast %170 : vector<1x32x64xbf16> to vector<32x64xbf16>
    %cst_83 = arith.constant dense<0.000000e+00> : vector<32x64xf32>
    %172 = tpu.matmul %169, %171, %cst_83 {dimension_numbers = #tpu.dot_dimension_numbers<[1], [0], [0], [1], [0, 0, 1, 1], [], []>} : vector<32x32xbf16>, vector<32x64xbf16>, vector<32x64xf32> -> vector<32x64xf32>
    %173 = arith.addf %168, %172 : vector<32x64xf32>
    %c31_i32_84 = arith.constant 31 : i32
    %174 = tpu.dynamic_rotate %157 by %c31_i32_84 dim 0 : vector<32x32xf32>, i32 -> vector<32x32xf32>
    %175 = vector.broadcast %42 : vector<32x1xf32> to vector<32x32xf32>
    %176 = arith.mulf %174, %175 : vector<32x32xf32>
    %177 = arith.truncf %176 : vector<32x32xf32> to vector<32x32xbf16>
    %c5 = arith.constant 5 : index
    %c0_85 = arith.constant 0 : index
    %c0_86 = arith.constant 0 : index
    %178 = vector.load %arg6[%c5, %c0_85, %c0_86] : memref<12x32x64xbf16, #tpu.memory_space<vmem>>, vector<1x32x64xbf16>
    %179 = vector.shape_cast %178 : vector<1x32x64xbf16> to vector<32x64xbf16>
    %cst_87 = arith.constant dense<0.000000e+00> : vector<32x64xf32>
    %180 = tpu.matmul %177, %179, %cst_87 {dimension_numbers = #tpu.dot_dimension_numbers<[1], [0], [0], [1], [0, 0, 1, 1], [], []>} : vector<32x32xbf16>, vector<32x64xbf16>, vector<32x64xf32> -> vector<32x64xf32>
    %181 = arith.addf %173, %180 : vector<32x64xf32>
    %182 = vector.broadcast %159 : vector<1x64xf32> to vector<32x64xf32>
    %183 = arith.addf %181, %182 : vector<32x64xf32>
    %cst_88 = arith.constant 0.000000e+00 : f32
    %184 = vector.broadcast %cst_88 : f32 to vector<32x64xf32>
    %185 = arith.cmpf oge, %183, %184 : vector<32x64xf32>
    %cst_89 = arith.constant 2.000000e-01 : f32
    %186 = vector.broadcast %cst_89 : f32 to vector<32x64xf32>
    %187 = arith.mulf %186, %183 : vector<32x64xf32>
    %188 = arith.select %185, %183, %187 : vector<32x64xi1>, vector<32x64xf32>
    %c1_90 = arith.constant 1 : index
    %c0_91 = arith.constant 0 : index
    %c0_92 = arith.constant 0 : index
    %189 = vector.load %arg9[%c1_90, %c0_91, %c0_92] : memref<4x1x32xf32, #tpu.memory_space<vmem>>, vector<1x1x32xf32>
    %190 = vector.shape_cast %189 : vector<1x1x32xf32> to vector<1x32xf32>
    %cst_93 = arith.constant 0.000000e+00 : f32
    %191 = vector.broadcast %cst_93 : f32 to vector<32x32xf32>
    %192 = arith.truncf %188 : vector<32x64xf32> to vector<32x64xbf16>
    %c1_94 = arith.constant 1 : index
    %c0_95 = arith.constant 0 : index
    %c0_96 = arith.constant 0 : index
    %193 = vector.load %arg8[%c1_94, %c0_95, %c0_96] : memref<4x64x32xbf16, #tpu.memory_space<vmem>>, vector<1x64x32xbf16>
    %194 = vector.shape_cast %193 : vector<1x64x32xbf16> to vector<64x32xbf16>
    %cst_97 = arith.constant dense<0.000000e+00> : vector<32x32xf32>
    %195 = tpu.matmul %192, %194, %cst_97 {dimension_numbers = #tpu.dot_dimension_numbers<[1], [0], [0], [1], [0, 0, 1, 1], [], []>} : vector<32x64xbf16>, vector<64x32xbf16>, vector<32x32xf32> -> vector<32x32xf32>
    %196 = arith.addf %191, %195 : vector<32x32xf32>
    %197 = vector.broadcast %190 : vector<1x32xf32> to vector<32x32xf32>
    %198 = arith.addf %196, %197 : vector<32x32xf32>
    %199 = arith.addf %133, %198 : vector<32x32xf32>
    %200 = vector.broadcast %65 : vector<32x1xf32> to vector<32x32xf32>
    %201 = arith.mulf %199, %200 : vector<32x32xf32>
    %202 = math.absf %201 : vector<32x32xf32>
    %cst_98 = arith.constant dense<0.000000e+00> : vector<32xf32>
    %203 = vector.multi_reduction <add>, %202, %cst_98 [1] : vector<32x32xf32> to vector<32xf32>
    %204 = vector.shape_cast %203 : vector<32xf32> to vector<32x1xf32>
    %cst_99 = arith.constant 0.000000e+00 : f32
    %205 = vector.broadcast %cst_99 : f32 to vector<32x1xf32>
    %206 = arith.cmpf ogt, %204, %205 : vector<32x1xf32>
    %207 = arith.extui %206 : vector<32x1xi1> to vector<32x1xi32>
    %208 = arith.sitofp %207 : vector<32x1xi32> to vector<32x1xf32>
    %c2_100 = arith.constant 2 : index
    %c0_101 = arith.constant 0 : index
    %c0_102 = arith.constant 0 : index
    %209 = vector.load %arg4[%c2_100, %c0_101, %c0_102] : memref<4x1x32xf32, #tpu.memory_space<vmem>>, vector<1x1x32xf32>
    %210 = vector.shape_cast %209 : vector<1x1x32xf32> to vector<1x32xf32>
    %c2_103 = arith.constant 2 : index
    %c0_104 = arith.constant 0 : index
    %c0_105 = arith.constant 0 : index
    %211 = vector.load %arg5[%c2_103, %c0_104, %c0_105] : memref<4x1x32xf32, #tpu.memory_space<vmem>>, vector<1x1x32xf32>
    %212 = vector.shape_cast %211 : vector<1x1x32xf32> to vector<1x32xf32>
    %cst_106 = arith.constant dense<0.000000e+00> : vector<32xf32>
    %213 = vector.multi_reduction <add>, %201, %cst_106 [1] : vector<32x32xf32> to vector<32xf32>
    %214 = vector.shape_cast %213 : vector<32xf32> to vector<32x1xf32>
    %cst_107 = arith.constant 3.200000e+01 : f32
    %215 = vector.broadcast %cst_107 : f32 to vector<32x1xf32>
    %216 = arith.divf %214, %215 : vector<32x1xf32>
    %217 = vector.broadcast %216 : vector<32x1xf32> to vector<32x32xf32>
    %218 = arith.subf %201, %217 : vector<32x32xf32>
    %219 = arith.mulf %218, %218 : vector<32x32xf32>
    %cst_108 = arith.constant dense<0.000000e+00> : vector<32xf32>
    %220 = vector.multi_reduction <add>, %219, %cst_108 [1] : vector<32x32xf32> to vector<32xf32>
    %221 = vector.shape_cast %220 : vector<32xf32> to vector<32x1xf32>
    %cst_109 = arith.constant 3.200000e+01 : f32
    %222 = vector.broadcast %cst_109 : f32 to vector<32x1xf32>
    %223 = arith.divf %221, %222 : vector<32x1xf32>
    %cst_110 = arith.constant 9.99999974E-6 : f32
    %224 = vector.broadcast %cst_110 : f32 to vector<32x1xf32>
    %225 = arith.addf %223, %224 : vector<32x1xf32>
    %226 = math.rsqrt %225 : vector<32x1xf32>
    %227 = vector.broadcast %226 : vector<32x1xf32> to vector<32x32xf32>
    %228 = arith.mulf %218, %227 : vector<32x32xf32>
    %229 = vector.broadcast %210 : vector<1x32xf32> to vector<32x32xf32>
    %230 = arith.mulf %228, %229 : vector<32x32xf32>
    %231 = vector.broadcast %212 : vector<1x32xf32> to vector<32x32xf32>
    %232 = arith.addf %230, %231 : vector<32x32xf32>
    %c2_111 = arith.constant 2 : index
    %c0_112 = arith.constant 0 : index
    %c0_113 = arith.constant 0 : index
    %233 = vector.load %arg7[%c2_111, %c0_112, %c0_113] : memref<4x1x64xf32, #tpu.memory_space<vmem>>, vector<1x1x64xf32>
    %234 = vector.shape_cast %233 : vector<1x1x64xf32> to vector<1x64xf32>
    %cst_114 = arith.constant 0.000000e+00 : f32
    %235 = vector.broadcast %cst_114 : f32 to vector<32x64xf32>
    %c1_i32_115 = arith.constant 1 : i32
    %236 = tpu.dynamic_rotate %232 by %c1_i32_115 dim 0 : vector<32x32xf32>, i32 -> vector<32x32xf32>
    %237 = vector.broadcast %25 : vector<32x1xf32> to vector<32x32xf32>
    %238 = arith.mulf %236, %237 : vector<32x32xf32>
    %239 = arith.truncf %238 : vector<32x32xf32> to vector<32x32xbf16>
    %c6 = arith.constant 6 : index
    %c0_116 = arith.constant 0 : index
    %c0_117 = arith.constant 0 : index
    %240 = vector.load %arg6[%c6, %c0_116, %c0_117] : memref<12x32x64xbf16, #tpu.memory_space<vmem>>, vector<1x32x64xbf16>
    %241 = vector.shape_cast %240 : vector<1x32x64xbf16> to vector<32x64xbf16>
    %cst_118 = arith.constant dense<0.000000e+00> : vector<32x64xf32>
    %242 = tpu.matmul %239, %241, %cst_118 {dimension_numbers = #tpu.dot_dimension_numbers<[1], [0], [0], [1], [0, 0, 1, 1], [], []>} : vector<32x32xbf16>, vector<32x64xbf16>, vector<32x64xf32> -> vector<32x64xf32>
    %243 = arith.addf %235, %242 : vector<32x64xf32>
    %244 = arith.truncf %232 : vector<32x32xf32> to vector<32x32xbf16>
    %c7 = arith.constant 7 : index
    %c0_119 = arith.constant 0 : index
    %c0_120 = arith.constant 0 : index
    %245 = vector.load %arg6[%c7, %c0_119, %c0_120] : memref<12x32x64xbf16, #tpu.memory_space<vmem>>, vector<1x32x64xbf16>
    %246 = vector.shape_cast %245 : vector<1x32x64xbf16> to vector<32x64xbf16>
    %cst_121 = arith.constant dense<0.000000e+00> : vector<32x64xf32>
    %247 = tpu.matmul %244, %246, %cst_121 {dimension_numbers = #tpu.dot_dimension_numbers<[1], [0], [0], [1], [0, 0, 1, 1], [], []>} : vector<32x32xbf16>, vector<32x64xbf16>, vector<32x64xf32> -> vector<32x64xf32>
    %248 = arith.addf %243, %247 : vector<32x64xf32>
    %c31_i32_122 = arith.constant 31 : i32
    %249 = tpu.dynamic_rotate %232 by %c31_i32_122 dim 0 : vector<32x32xf32>, i32 -> vector<32x32xf32>
    %250 = vector.broadcast %42 : vector<32x1xf32> to vector<32x32xf32>
    %251 = arith.mulf %249, %250 : vector<32x32xf32>
    %252 = arith.truncf %251 : vector<32x32xf32> to vector<32x32xbf16>
    %c8 = arith.constant 8 : index
    %c0_123 = arith.constant 0 : index
    %c0_124 = arith.constant 0 : index
    %253 = vector.load %arg6[%c8, %c0_123, %c0_124] : memref<12x32x64xbf16, #tpu.memory_space<vmem>>, vector<1x32x64xbf16>
    %254 = vector.shape_cast %253 : vector<1x32x64xbf16> to vector<32x64xbf16>
    %cst_125 = arith.constant dense<0.000000e+00> : vector<32x64xf32>
    %255 = tpu.matmul %252, %254, %cst_125 {dimension_numbers = #tpu.dot_dimension_numbers<[1], [0], [0], [1], [0, 0, 1, 1], [], []>} : vector<32x32xbf16>, vector<32x64xbf16>, vector<32x64xf32> -> vector<32x64xf32>
    %256 = arith.addf %248, %255 : vector<32x64xf32>
    %257 = vector.broadcast %234 : vector<1x64xf32> to vector<32x64xf32>
    %258 = arith.addf %256, %257 : vector<32x64xf32>
    %cst_126 = arith.constant 0.000000e+00 : f32
    %259 = vector.broadcast %cst_126 : f32 to vector<32x64xf32>
    %260 = arith.cmpf oge, %258, %259 : vector<32x64xf32>
    %cst_127 = arith.constant 2.000000e-01 : f32
    %261 = vector.broadcast %cst_127 : f32 to vector<32x64xf32>
    %262 = arith.mulf %261, %258 : vector<32x64xf32>
    %263 = arith.select %260, %258, %262 : vector<32x64xi1>, vector<32x64xf32>
    %c2_128 = arith.constant 2 : index
    %c0_129 = arith.constant 0 : index
    %c0_130 = arith.constant 0 : index
    %264 = vector.load %arg9[%c2_128, %c0_129, %c0_130] : memref<4x1x32xf32, #tpu.memory_space<vmem>>, vector<1x1x32xf32>
    %265 = vector.shape_cast %264 : vector<1x1x32xf32> to vector<1x32xf32>
    %cst_131 = arith.constant 0.000000e+00 : f32
    %266 = vector.broadcast %cst_131 : f32 to vector<32x32xf32>
    %267 = arith.truncf %263 : vector<32x64xf32> to vector<32x64xbf16>
    %c2_132 = arith.constant 2 : index
    %c0_133 = arith.constant 0 : index
    %c0_134 = arith.constant 0 : index
    %268 = vector.load %arg8[%c2_132, %c0_133, %c0_134] : memref<4x64x32xbf16, #tpu.memory_space<vmem>>, vector<1x64x32xbf16>
    %269 = vector.shape_cast %268 : vector<1x64x32xbf16> to vector<64x32xbf16>
    %cst_135 = arith.constant dense<0.000000e+00> : vector<32x32xf32>
    %270 = tpu.matmul %267, %269, %cst_135 {dimension_numbers = #tpu.dot_dimension_numbers<[1], [0], [0], [1], [0, 0, 1, 1], [], []>} : vector<32x64xbf16>, vector<64x32xbf16>, vector<32x32xf32> -> vector<32x32xf32>
    %271 = arith.addf %266, %270 : vector<32x32xf32>
    %272 = vector.broadcast %265 : vector<1x32xf32> to vector<32x32xf32>
    %273 = arith.addf %271, %272 : vector<32x32xf32>
    %274 = arith.addf %201, %273 : vector<32x32xf32>
    %275 = vector.broadcast %208 : vector<32x1xf32> to vector<32x32xf32>
    %276 = arith.mulf %274, %275 : vector<32x32xf32>
    %c3_136 = arith.constant 3 : index
    %c0_137 = arith.constant 0 : index
    %c0_138 = arith.constant 0 : index
    %277 = vector.load %arg4[%c3_136, %c0_137, %c0_138] : memref<4x1x32xf32, #tpu.memory_space<vmem>>, vector<1x1x32xf32>
    %278 = vector.shape_cast %277 : vector<1x1x32xf32> to vector<1x32xf32>
    %c3_139 = arith.constant 3 : index
    %c0_140 = arith.constant 0 : index
    %c0_141 = arith.constant 0 : index
    %279 = vector.load %arg5[%c3_139, %c0_140, %c0_141] : memref<4x1x32xf32, #tpu.memory_space<vmem>>, vector<1x1x32xf32>
    %280 = vector.shape_cast %279 : vector<1x1x32xf32> to vector<1x32xf32>
    %cst_142 = arith.constant dense<0.000000e+00> : vector<32xf32>
    %281 = vector.multi_reduction <add>, %276, %cst_142 [1] : vector<32x32xf32> to vector<32xf32>
    %282 = vector.shape_cast %281 : vector<32xf32> to vector<32x1xf32>
    %cst_143 = arith.constant 3.200000e+01 : f32
    %283 = vector.broadcast %cst_143 : f32 to vector<32x1xf32>
    %284 = arith.divf %282, %283 : vector<32x1xf32>
    %285 = vector.broadcast %284 : vector<32x1xf32> to vector<32x32xf32>
    %286 = arith.subf %276, %285 : vector<32x32xf32>
    %287 = arith.mulf %286, %286 : vector<32x32xf32>
    %cst_144 = arith.constant dense<0.000000e+00> : vector<32xf32>
    %288 = vector.multi_reduction <add>, %287, %cst_144 [1] : vector<32x32xf32> to vector<32xf32>
    %289 = vector.shape_cast %288 : vector<32xf32> to vector<32x1xf32>
    %cst_145 = arith.constant 3.200000e+01 : f32
    %290 = vector.broadcast %cst_145 : f32 to vector<32x1xf32>
    %291 = arith.divf %289, %290 : vector<32x1xf32>
    %cst_146 = arith.constant 9.99999974E-6 : f32
    %292 = vector.broadcast %cst_146 : f32 to vector<32x1xf32>
    %293 = arith.addf %291, %292 : vector<32x1xf32>
    %294 = math.rsqrt %293 : vector<32x1xf32>
    %295 = vector.broadcast %294 : vector<32x1xf32> to vector<32x32xf32>
    %296 = arith.mulf %286, %295 : vector<32x32xf32>
    %297 = vector.broadcast %278 : vector<1x32xf32> to vector<32x32xf32>
    %298 = arith.mulf %296, %297 : vector<32x32xf32>
    %299 = vector.broadcast %280 : vector<1x32xf32> to vector<32x32xf32>
    %300 = arith.addf %298, %299 : vector<32x32xf32>
    %c3_147 = arith.constant 3 : index
    %c0_148 = arith.constant 0 : index
    %c0_149 = arith.constant 0 : index
    %301 = vector.load %arg7[%c3_147, %c0_148, %c0_149] : memref<4x1x64xf32, #tpu.memory_space<vmem>>, vector<1x1x64xf32>
    %302 = vector.shape_cast %301 : vector<1x1x64xf32> to vector<1x64xf32>
    %cst_150 = arith.constant 0.000000e+00 : f32
    %303 = vector.broadcast %cst_150 : f32 to vector<32x64xf32>
    %c1_i32_151 = arith.constant 1 : i32
    %304 = tpu.dynamic_rotate %300 by %c1_i32_151 dim 0 : vector<32x32xf32>, i32 -> vector<32x32xf32>
    %305 = vector.broadcast %25 : vector<32x1xf32> to vector<32x32xf32>
    %306 = arith.mulf %304, %305 : vector<32x32xf32>
    %307 = arith.truncf %306 : vector<32x32xf32> to vector<32x32xbf16>
    %c9 = arith.constant 9 : index
    %c0_152 = arith.constant 0 : index
    %c0_153 = arith.constant 0 : index
    %308 = vector.load %arg6[%c9, %c0_152, %c0_153] : memref<12x32x64xbf16, #tpu.memory_space<vmem>>, vector<1x32x64xbf16>
    %309 = vector.shape_cast %308 : vector<1x32x64xbf16> to vector<32x64xbf16>
    %cst_154 = arith.constant dense<0.000000e+00> : vector<32x64xf32>
    %310 = tpu.matmul %307, %309, %cst_154 {dimension_numbers = #tpu.dot_dimension_numbers<[1], [0], [0], [1], [0, 0, 1, 1], [], []>} : vector<32x32xbf16>, vector<32x64xbf16>, vector<32x64xf32> -> vector<32x64xf32>
    %311 = arith.addf %303, %310 : vector<32x64xf32>
    %312 = arith.truncf %300 : vector<32x32xf32> to vector<32x32xbf16>
    %c10 = arith.constant 10 : index
    %c0_155 = arith.constant 0 : index
    %c0_156 = arith.constant 0 : index
    %313 = vector.load %arg6[%c10, %c0_155, %c0_156] : memref<12x32x64xbf16, #tpu.memory_space<vmem>>, vector<1x32x64xbf16>
    %314 = vector.shape_cast %313 : vector<1x32x64xbf16> to vector<32x64xbf16>
    %cst_157 = arith.constant dense<0.000000e+00> : vector<32x64xf32>
    %315 = tpu.matmul %312, %314, %cst_157 {dimension_numbers = #tpu.dot_dimension_numbers<[1], [0], [0], [1], [0, 0, 1, 1], [], []>} : vector<32x32xbf16>, vector<32x64xbf16>, vector<32x64xf32> -> vector<32x64xf32>
    %316 = arith.addf %311, %315 : vector<32x64xf32>
    %c31_i32_158 = arith.constant 31 : i32
    %317 = tpu.dynamic_rotate %300 by %c31_i32_158 dim 0 : vector<32x32xf32>, i32 -> vector<32x32xf32>
    %318 = vector.broadcast %42 : vector<32x1xf32> to vector<32x32xf32>
    %319 = arith.mulf %317, %318 : vector<32x32xf32>
    %320 = arith.truncf %319 : vector<32x32xf32> to vector<32x32xbf16>
    %c11 = arith.constant 11 : index
    %c0_159 = arith.constant 0 : index
    %c0_160 = arith.constant 0 : index
    %321 = vector.load %arg6[%c11, %c0_159, %c0_160] : memref<12x32x64xbf16, #tpu.memory_space<vmem>>, vector<1x32x64xbf16>
    %322 = vector.shape_cast %321 : vector<1x32x64xbf16> to vector<32x64xbf16>
    %cst_161 = arith.constant dense<0.000000e+00> : vector<32x64xf32>
    %323 = tpu.matmul %320, %322, %cst_161 {dimension_numbers = #tpu.dot_dimension_numbers<[1], [0], [0], [1], [0, 0, 1, 1], [], []>} : vector<32x32xbf16>, vector<32x64xbf16>, vector<32x64xf32> -> vector<32x64xf32>
    %324 = arith.addf %316, %323 : vector<32x64xf32>
    %325 = vector.broadcast %302 : vector<1x64xf32> to vector<32x64xf32>
    %326 = arith.addf %324, %325 : vector<32x64xf32>
    %cst_162 = arith.constant 0.000000e+00 : f32
    %327 = vector.broadcast %cst_162 : f32 to vector<32x64xf32>
    %328 = arith.cmpf oge, %326, %327 : vector<32x64xf32>
    %cst_163 = arith.constant 2.000000e-01 : f32
    %329 = vector.broadcast %cst_163 : f32 to vector<32x64xf32>
    %330 = arith.mulf %329, %326 : vector<32x64xf32>
    %331 = arith.select %328, %326, %330 : vector<32x64xi1>, vector<32x64xf32>
    %c3_164 = arith.constant 3 : index
    %c0_165 = arith.constant 0 : index
    %c0_166 = arith.constant 0 : index
    %332 = vector.load %arg9[%c3_164, %c0_165, %c0_166] : memref<4x1x32xf32, #tpu.memory_space<vmem>>, vector<1x1x32xf32>
    %333 = vector.shape_cast %332 : vector<1x1x32xf32> to vector<1x32xf32>
    %cst_167 = arith.constant 0.000000e+00 : f32
    %334 = vector.broadcast %cst_167 : f32 to vector<32x32xf32>
    %335 = arith.truncf %331 : vector<32x64xf32> to vector<32x64xbf16>
    %c3_168 = arith.constant 3 : index
    %c0_169 = arith.constant 0 : index
    %c0_170 = arith.constant 0 : index
    %336 = vector.load %arg8[%c3_168, %c0_169, %c0_170] : memref<4x64x32xbf16, #tpu.memory_space<vmem>>, vector<1x64x32xbf16>
    %337 = vector.shape_cast %336 : vector<1x64x32xbf16> to vector<64x32xbf16>
    %cst_171 = arith.constant dense<0.000000e+00> : vector<32x32xf32>
    %338 = tpu.matmul %335, %337, %cst_171 {dimension_numbers = #tpu.dot_dimension_numbers<[1], [0], [0], [1], [0, 0, 1, 1], [], []>} : vector<32x64xbf16>, vector<64x32xbf16>, vector<32x32xf32> -> vector<32x32xf32>
    %339 = arith.addf %334, %338 : vector<32x32xf32>
    %340 = vector.broadcast %333 : vector<1x32xf32> to vector<32x32xf32>
    %341 = arith.addf %339, %340 : vector<32x32xf32>
    %342 = arith.addf %276, %341 : vector<32x32xf32>
    %343 = vector.broadcast %208 : vector<32x1xf32> to vector<32x32xf32>
    %344 = arith.mulf %342, %343 : vector<32x32xf32>
    %345 = vector.broadcast %58 : vector<32x1xf32> to vector<32x32xf32>
    %346 = arith.mulf %344, %345 : vector<32x32xf32>
    %c0_172 = arith.constant 0 : index
    %c0_173 = arith.constant 0 : index
    %347 = vector.load %arg10[%c0_172, %c0_173] : memref<1x32xf32, #tpu.memory_space<vmem>>, vector<1x32xf32>
    %c0_174 = arith.constant 0 : index
    %c0_175 = arith.constant 0 : index
    %348 = vector.load %arg11[%c0_174, %c0_175] : memref<1x32xf32, #tpu.memory_space<vmem>>, vector<1x32xf32>
    %cst_176 = arith.constant dense<0.000000e+00> : vector<32xf32>
    %349 = vector.multi_reduction <add>, %346, %cst_176 [1] : vector<32x32xf32> to vector<32xf32>
    %350 = vector.shape_cast %349 : vector<32xf32> to vector<32x1xf32>
    %cst_177 = arith.constant 3.200000e+01 : f32
    %351 = vector.broadcast %cst_177 : f32 to vector<32x1xf32>
    %352 = arith.divf %350, %351 : vector<32x1xf32>
    %353 = vector.broadcast %352 : vector<32x1xf32> to vector<32x32xf32>
    %354 = arith.subf %346, %353 : vector<32x32xf32>
    %355 = arith.mulf %354, %354 : vector<32x32xf32>
    %cst_178 = arith.constant dense<0.000000e+00> : vector<32xf32>
    %356 = vector.multi_reduction <add>, %355, %cst_178 [1] : vector<32x32xf32> to vector<32xf32>
    %357 = vector.shape_cast %356 : vector<32xf32> to vector<32x1xf32>
    %cst_179 = arith.constant 3.200000e+01 : f32
    %358 = vector.broadcast %cst_179 : f32 to vector<32x1xf32>
    %359 = arith.divf %357, %358 : vector<32x1xf32>
    %cst_180 = arith.constant 9.99999974E-6 : f32
    %360 = vector.broadcast %cst_180 : f32 to vector<32x1xf32>
    %361 = arith.addf %359, %360 : vector<32x1xf32>
    %362 = math.rsqrt %361 : vector<32x1xf32>
    %363 = vector.broadcast %362 : vector<32x1xf32> to vector<32x32xf32>
    %364 = arith.mulf %354, %363 : vector<32x32xf32>
    %365 = vector.broadcast %347 : vector<1x32xf32> to vector<32x32xf32>
    %366 = arith.mulf %364, %365 : vector<32x32xf32>
    %367 = vector.broadcast %348 : vector<1x32xf32> to vector<32x32xf32>
    %368 = arith.addf %366, %367 : vector<32x32xf32>
    %369 = vector.broadcast %58 : vector<32x1xf32> to vector<32x32xf32>
    %370 = arith.mulf %368, %369 : vector<32x32xf32>
    %c0_181 = arith.constant 0 : index
    %c0_182 = arith.constant 0 : index
    %371 = vector.load %arg13[%c0_181, %c0_182] : memref<1x32xf32, #tpu.memory_space<vmem>>, vector<1x32xf32>
    %cst_183 = arith.constant 0.000000e+00 : f32
    %372 = vector.broadcast %cst_183 : f32 to vector<32x32xf32>
    %c1_i32_184 = arith.constant 1 : i32
    %373 = tpu.dynamic_rotate %370 by %c1_i32_184 dim 0 : vector<32x32xf32>, i32 -> vector<32x32xf32>
    %374 = vector.broadcast %25 : vector<32x1xf32> to vector<32x32xf32>
    %375 = arith.mulf %373, %374 : vector<32x32xf32>
    %376 = arith.truncf %375 : vector<32x32xf32> to vector<32x32xbf16>
    %c0_185 = arith.constant 0 : index
    %c0_186 = arith.constant 0 : index
    %c0_187 = arith.constant 0 : index
    %377 = vector.load %arg12[%c0_185, %c0_186, %c0_187] : memref<3x32x32xbf16, #tpu.memory_space<vmem>>, vector<1x32x32xbf16>
    %378 = vector.shape_cast %377 : vector<1x32x32xbf16> to vector<32x32xbf16>
    %cst_188 = arith.constant dense<0.000000e+00> : vector<32x32xf32>
    %379 = tpu.matmul %376, %378, %cst_188 {dimension_numbers = #tpu.dot_dimension_numbers<[1], [0], [0], [1], [0, 0, 1, 1], [], []>} : vector<32x32xbf16>, vector<32x32xbf16>, vector<32x32xf32> -> vector<32x32xf32>
    %380 = arith.addf %372, %379 : vector<32x32xf32>
    %381 = arith.truncf %370 : vector<32x32xf32> to vector<32x32xbf16>
    %c1_189 = arith.constant 1 : index
    %c0_190 = arith.constant 0 : index
    %c0_191 = arith.constant 0 : index
    %382 = vector.load %arg12[%c1_189, %c0_190, %c0_191] : memref<3x32x32xbf16, #tpu.memory_space<vmem>>, vector<1x32x32xbf16>
    %383 = vector.shape_cast %382 : vector<1x32x32xbf16> to vector<32x32xbf16>
    %cst_192 = arith.constant dense<0.000000e+00> : vector<32x32xf32>
    %384 = tpu.matmul %381, %383, %cst_192 {dimension_numbers = #tpu.dot_dimension_numbers<[1], [0], [0], [1], [0, 0, 1, 1], [], []>} : vector<32x32xbf16>, vector<32x32xbf16>, vector<32x32xf32> -> vector<32x32xf32>
    %385 = arith.addf %380, %384 : vector<32x32xf32>
    %c31_i32_193 = arith.constant 31 : i32
    %386 = tpu.dynamic_rotate %370 by %c31_i32_193 dim 0 : vector<32x32xf32>, i32 -> vector<32x32xf32>
    %387 = vector.broadcast %42 : vector<32x1xf32> to vector<32x32xf32>
    %388 = arith.mulf %386, %387 : vector<32x32xf32>
    %389 = arith.truncf %388 : vector<32x32xf32> to vector<32x32xbf16>
    %c2_194 = arith.constant 2 : index
    %c0_195 = arith.constant 0 : index
    %c0_196 = arith.constant 0 : index
    %390 = vector.load %arg12[%c2_194, %c0_195, %c0_196] : memref<3x32x32xbf16, #tpu.memory_space<vmem>>, vector<1x32x32xbf16>
    %391 = vector.shape_cast %390 : vector<1x32x32xbf16> to vector<32x32xbf16>
    %cst_197 = arith.constant dense<0.000000e+00> : vector<32x32xf32>
    %392 = tpu.matmul %389, %391, %cst_197 {dimension_numbers = #tpu.dot_dimension_numbers<[1], [0], [0], [1], [0, 0, 1, 1], [], []>} : vector<32x32xbf16>, vector<32x32xbf16>, vector<32x32xf32> -> vector<32x32xf32>
    %393 = arith.addf %385, %392 : vector<32x32xf32>
    %394 = vector.broadcast %371 : vector<1x32xf32> to vector<32x32xf32>
    %395 = arith.addf %393, %394 : vector<32x32xf32>
    %c0_198 = arith.constant 0 : index
    %c0_199 = arith.constant 0 : index
    %396 = vector.load %arg15[%c0_198, %c0_199] : memref<1x8xf32, #tpu.memory_space<vmem>>, vector<1x8xf32>
    %cst_200 = arith.constant 0.000000e+00 : f32
    %397 = vector.broadcast %cst_200 : f32 to vector<32x8xf32>
    %c1_i32_201 = arith.constant 1 : i32
    %398 = tpu.dynamic_rotate %395 by %c1_i32_201 dim 0 : vector<32x32xf32>, i32 -> vector<32x32xf32>
    %399 = vector.broadcast %25 : vector<32x1xf32> to vector<32x32xf32>
    %400 = arith.mulf %398, %399 : vector<32x32xf32>
    %401 = arith.truncf %400 : vector<32x32xf32> to vector<32x32xbf16>
    %c0_202 = arith.constant 0 : index
    %c0_203 = arith.constant 0 : index
    %c0_204 = arith.constant 0 : index
    %402 = vector.load %arg14[%c0_202, %c0_203, %c0_204] : memref<3x32x8xbf16, #tpu.memory_space<vmem>>, vector<1x32x8xbf16>
    %403 = vector.shape_cast %402 : vector<1x32x8xbf16> to vector<32x8xbf16>
    %cst_205 = arith.constant dense<0.000000e+00> : vector<32x8xf32>
    %404 = tpu.matmul %401, %403, %cst_205 {dimension_numbers = #tpu.dot_dimension_numbers<[1], [0], [0], [1], [0, 0, 1, 1], [], []>} : vector<32x32xbf16>, vector<32x8xbf16>, vector<32x8xf32> -> vector<32x8xf32>
    %405 = arith.addf %397, %404 : vector<32x8xf32>
    %406 = arith.truncf %395 : vector<32x32xf32> to vector<32x32xbf16>
    %c1_206 = arith.constant 1 : index
    %c0_207 = arith.constant 0 : index
    %c0_208 = arith.constant 0 : index
    %407 = vector.load %arg14[%c1_206, %c0_207, %c0_208] : memref<3x32x8xbf16, #tpu.memory_space<vmem>>, vector<1x32x8xbf16>
    %408 = vector.shape_cast %407 : vector<1x32x8xbf16> to vector<32x8xbf16>
    %cst_209 = arith.constant dense<0.000000e+00> : vector<32x8xf32>
    %409 = tpu.matmul %406, %408, %cst_209 {dimension_numbers = #tpu.dot_dimension_numbers<[1], [0], [0], [1], [0, 0, 1, 1], [], []>} : vector<32x32xbf16>, vector<32x8xbf16>, vector<32x8xf32> -> vector<32x8xf32>
    %410 = arith.addf %405, %409 : vector<32x8xf32>
    %c31_i32_210 = arith.constant 31 : i32
    %411 = tpu.dynamic_rotate %395 by %c31_i32_210 dim 0 : vector<32x32xf32>, i32 -> vector<32x32xf32>
    %412 = vector.broadcast %42 : vector<32x1xf32> to vector<32x32xf32>
    %413 = arith.mulf %411, %412 : vector<32x32xf32>
    %414 = arith.truncf %413 : vector<32x32xf32> to vector<32x32xbf16>
    %c2_211 = arith.constant 2 : index
    %c0_212 = arith.constant 0 : index
    %c0_213 = arith.constant 0 : index
    %415 = vector.load %arg14[%c2_211, %c0_212, %c0_213] : memref<3x32x8xbf16, #tpu.memory_space<vmem>>, vector<1x32x8xbf16>
    %416 = vector.shape_cast %415 : vector<1x32x8xbf16> to vector<32x8xbf16>
    %cst_214 = arith.constant dense<0.000000e+00> : vector<32x8xf32>
    %417 = tpu.matmul %414, %416, %cst_214 {dimension_numbers = #tpu.dot_dimension_numbers<[1], [0], [0], [1], [0, 0, 1, 1], [], []>} : vector<32x32xbf16>, vector<32x8xbf16>, vector<32x8xf32> -> vector<32x8xf32>
    %418 = arith.addf %410, %417 : vector<32x8xf32>
    %419 = vector.broadcast %396 : vector<1x8xf32> to vector<32x8xf32>
    %420 = arith.addf %418, %419 : vector<32x8xf32>
    %421 = vector.shape_cast %420 : vector<32x8xf32> to vector<2x16x8xf32>
    %c0_215 = arith.constant 0 : index
    %c0_216 = arith.constant 0 : index
    %c0_217 = arith.constant 0 : index
    %422 = vector.load %arg16[%c0_215, %c0_216, %c0_217] : memref<2x16x8xf32, #tpu.memory_space<vmem>>, vector<2x16x8xf32>
    tpu.vector_store %arg16[%c0_215, %c0_216, %c0_217], %421 {strides = array<i32>} : memref<2x16x8xf32, #tpu.memory_space<vmem>>, vector<2x16x8xf32>,
    return
  }
  func.func @transform_0(%arg0: i32) -> (i32, i32, i32) {
    %c0_i32 = arith.constant 0 : i32
    %c0_i32_0 = arith.constant 0 : i32
    %c0_i32_1 = arith.constant 0 : i32
    return %arg0, %c0_i32, %c0_i32_0 : i32, i32, i32
  }
  func.func @transform_1(%arg0: i32) -> (i32, i32, i32) {
    %c0_i32 = arith.constant 0 : i32
    %c0_i32_0 = arith.constant 0 : i32
    %c0_i32_1 = arith.constant 0 : i32
    %c0_i32_2 = arith.constant 0 : i32
    return %c0_i32, %c0_i32_0, %c0_i32_1 : i32, i32, i32
  }
  func.func @transform_2(%arg0: i32) -> (i32, i32) {
    %c0_i32 = arith.constant 0 : i32
    %c0_i32_0 = arith.constant 0 : i32
    %c0_i32_1 = arith.constant 0 : i32
    return %c0_i32, %c0_i32_0 : i32, i32
  }
  func.func @transform_3(%arg0: i32) -> (i32, i32, i32) {
    %c0_i32 = arith.constant 0 : i32
    %c0_i32_0 = arith.constant 0 : i32
    %c0_i32_1 = arith.constant 0 : i32
    %c0_i32_2 = arith.constant 0 : i32
    return %c0_i32, %c0_i32_0, %c0_i32_1 : i32, i32, i32
  }
  func.func @transform_4(%arg0: i32) -> (i32, i32, i32) {
    %c0_i32 = arith.constant 0 : i32
    %c0_i32_0 = arith.constant 0 : i32
    %c0_i32_1 = arith.constant 0 : i32
    %c0_i32_2 = arith.constant 0 : i32
    return %c0_i32, %c0_i32_0, %c0_i32_1 : i32, i32, i32
  }
  func.func @transform_5(%arg0: i32) -> (i32, i32, i32) {
    %c0_i32 = arith.constant 0 : i32
    %c0_i32_0 = arith.constant 0 : i32
    %c0_i32_1 = arith.constant 0 : i32
    %c0_i32_2 = arith.constant 0 : i32
    return %c0_i32, %c0_i32_0, %c0_i32_1 : i32, i32, i32
  }
  func.func @transform_6(%arg0: i32) -> (i32, i32, i32) {
    %c0_i32 = arith.constant 0 : i32
    %c0_i32_0 = arith.constant 0 : i32
    %c0_i32_1 = arith.constant 0 : i32
    %c0_i32_2 = arith.constant 0 : i32
    return %c0_i32, %c0_i32_0, %c0_i32_1 : i32, i32, i32
  }
  func.func @transform_7(%arg0: i32) -> (i32, i32, i32) {
    %c0_i32 = arith.constant 0 : i32
    %c0_i32_0 = arith.constant 0 : i32
    %c0_i32_1 = arith.constant 0 : i32
    %c0_i32_2 = arith.constant 0 : i32
    return %c0_i32, %c0_i32_0, %c0_i32_1 : i32, i32, i32
  }
  func.func @transform_8(%arg0: i32) -> (i32, i32, i32) {
    %c0_i32 = arith.constant 0 : i32
    %c0_i32_0 = arith.constant 0 : i32
    %c0_i32_1 = arith.constant 0 : i32
    %c0_i32_2 = arith.constant 0 : i32
    return %c0_i32, %c0_i32_0, %c0_i32_1 : i32, i32, i32
  }
  func.func @transform_9(%arg0: i32) -> (i32, i32) {
    %c0_i32 = arith.constant 0 : i32
    %c0_i32_0 = arith.constant 0 : i32
    %c0_i32_1 = arith.constant 0 : i32
    return %c0_i32, %c0_i32_0 : i32, i32
  }
  func.func @transform_10(%arg0: i32) -> (i32, i32) {
    %c0_i32 = arith.constant 0 : i32
    %c0_i32_0 = arith.constant 0 : i32
    %c0_i32_1 = arith.constant 0 : i32
    return %c0_i32, %c0_i32_0 : i32, i32
  }
  func.func @transform_11(%arg0: i32) -> (i32, i32, i32) {
    %c0_i32 = arith.constant 0 : i32
    %c0_i32_0 = arith.constant 0 : i32
    %c0_i32_1 = arith.constant 0 : i32
    %c0_i32_2 = arith.constant 0 : i32
    return %c0_i32, %c0_i32_0, %c0_i32_1 : i32, i32, i32
  }
  func.func @transform_12(%arg0: i32) -> (i32, i32) {
    %c0_i32 = arith.constant 0 : i32
    %c0_i32_0 = arith.constant 0 : i32
    %c0_i32_1 = arith.constant 0 : i32
    return %c0_i32, %c0_i32_0 : i32, i32
  }
  func.func @transform_13(%arg0: i32) -> (i32, i32, i32) {
    %c0_i32 = arith.constant 0 : i32
    %c0_i32_0 = arith.constant 0 : i32
    %c0_i32_1 = arith.constant 0 : i32
    %c0_i32_2 = arith.constant 0 : i32
    return %c0_i32, %c0_i32_0, %c0_i32_1 : i32, i32, i32
  }
  func.func @transform_14(%arg0: i32) -> (i32, i32) {
    %c0_i32 = arith.constant 0 : i32
    %c0_i32_0 = arith.constant 0 : i32
    %c0_i32_1 = arith.constant 0 : i32
    return %c0_i32, %c0_i32_0 : i32, i32
  }
  func.func @transform_15(%arg0: i32) -> (i32, i32, i32) {
    %c0_i32 = arith.constant 0 : i32
    %c0_i32_0 = arith.constant 0 : i32
    %c0_i32_1 = arith.constant 0 : i32
    return %arg0, %c0_i32, %c0_i32_0 : i32, i32, i32
  }
}

</mosaic_0001>

<llo_original>
// kernel: unet_mid_forward.1
$region0: #{unet_mid_forward.1}
  #allocation0 [shape = 'u32[]', space=smem, size = 0x4, offset = 0x4, fixed_abs, tag = 'smem constant byte address 0x4 - core index']
  #allocation1 [shape = 'u32[144,128]{1,0:T(1,128)}', space=vmem, size = 0x12000, scoped, tag = 'internal scratch']
  %s0 = inlined_call_operand.vmem [shape: f32[4,16,8], index: 0, kind: input, shape index: {}]
  %s1 = inlined_call_operand.vmem [shape: bf16[3,8,32], index: 1, kind: input, shape index: {}]
  %s2 = inlined_call_operand.vmem [shape: f32[1,32], index: 2, kind: input, shape index: {}]
  %s3 = inlined_call_operand.vmem [shape: f32[4,1,32], index: 3, kind: input, shape index: {}]
  %s4 = inlined_call_operand.vmem [shape: f32[4,1,32], index: 4, kind: input, shape index: {}]
  %s5 = inlined_call_operand.vmem [shape: bf16[12,32,64], index: 5, kind: input, shape index: {}]
  %s6 = inlined_call_operand.vmem [shape: f32[4,1,64], index: 6, kind: input, shape index: {}]
  %s7 = inlined_call_operand.vmem [shape: bf16[4,64,32], index: 7, kind: input, shape index: {}]
  %s8 = inlined_call_operand.vmem [shape: f32[4,1,32], index: 8, kind: input, shape index: {}]
  %s9 = inlined_call_operand.vmem [shape: f32[1,32], index: 9, kind: input, shape index: {}]
  %s10 = inlined_call_operand.vmem [shape: f32[1,32], index: 10, kind: input, shape index: {}]
  %s11 = inlined_call_operand.vmem [shape: bf16[3,32,32], index: 11, kind: input, shape index: {}]
  %s12 = inlined_call_operand.vmem [shape: f32[1,32], index: 12, kind: input, shape index: {}]
  %s13 = inlined_call_operand.vmem [shape: bf16[3,32,8], index: 13, kind: input, shape index: {}]
  %s14 = inlined_call_operand.vmem [shape: f32[1,8], index: 14, kind: input, shape index: {}]
  %s15 = inlined_call_operand.vmem [shape: f32[4,16,8], index: 15, kind: output, shape index: {}]
  %s16 = sld [smem:[#allocation0]]
  $region93: #{unet_mid_forward.1} parent=0
    _
  %s18 = ssub.s32 1, %s16
  %s19 = scalar_select 0, %s18, %s16
  loop: start=0, step=1, limit=4
  $region2: #{unet_mid_forward.1} parent=0 // loop_pre_header
    _
  $region3: #{unet_mid_forward.1} parent=0 // loop_header
    %s21 = sphi 0, %s25
    %p22 = scmp.ge.s32.totalorder %s21, 4
    %s31 = sphi 0, %s33
    %s34 = sphi 0, %s31
    %s35 = sphi 0, %s34
    %s51 = sphi 0, %s35
    %s55 = sphi 0, %s55
    %s57 = sphi 0, %s55
    %s58 = sphi 0, %s57
    %s72 = sphi 0, %s58
    %s76 = sphi 0, %s76
    %s78 = sphi 0, %s76
    %s79 = sphi 0, %s78
    %s93 = sphi 0, %s79
    %s97 = sphi 0, %s97
    %s99 = sphi 0, %s97
    %s100 = sphi 0, %s99
    %s114 = sphi 0, %s100
    %s118 = sphi 0, %s118
    %s120 = sphi 0, %s118
    %s121 = sphi 0, %s120
    %s135 = sphi 0, %s121
    %s139 = sphi 0, %s139
    %s141 = sphi 0, %s139
    %s142 = sphi 0, %s141
    %s156 = sphi 0, %s142
    %s160 = sphi 0, %s160
    %s162 = sphi 0, %s160
    %s163 = sphi 0, %s162
    %s177 = sphi 0, %s163
    %s181 = sphi 0, %s181
    %s183 = sphi 0, %s181
    %s184 = sphi 0, %s183
    %s198 = sphi 0, %s184
    %s202 = sphi 0, %s202
    %s204 = sphi 0, %s202
    %s205 = sphi 0, %s204
    %s219 = sphi 0, %s205
    %s223 = sphi 0, %s223
    %s225 = sphi 0, %s223
    %s226 = sphi 0, %s225
    %s240 = sphi 0, %s226
    %s244 = sphi 0, %s244
    %s246 = sphi 0, %s244
    %s247 = sphi 0, %s246
    %s261 = sphi 0, %s247
    %s265 = sphi 0, %s265
    %s267 = sphi 0, %s265
    %s268 = sphi 0, %s267
    %s282 = sphi 0, %s268
    %s286 = sphi 0, %s286
    %s288 = sphi 0, %s286
    %s289 = sphi 0, %s288
    %s303 = sphi 0, %s289
    %s307 = sphi 0, %s307
    %s309 = sphi 0, %s307
    %s310 = sphi 0, %s309
    %s324 = sphi 0, %s310
    %s328 = sphi 0, %s328
    %s330 = sphi 0, %s328
    %s331 = sphi 0, %s330
    %s345 = sphi 0, %s331
    %s351 = sphi 0, %s353
    %s354 = sphi 0, %s351
    %s355 = sphi 0, %s354
    %s371 = sphi 0, %s355
  $region4: #{unet_mid_forward.1} parent=0 // loop_header_branch
    %24 = sbr.rel (%p22) target = $region8
  $region5: #{unet_mid_forward.1} parent=0 // loop_body
    %s26 = ssub.s32 %s21, 1
    %s27 = ssub.s32 %s21, 2
    %s28 = sadd.s32 %s21, 1
    %s29 = ssub.s32 %s21, %s28
    %p30 = scmp.eq.s32.totalorder %s29, 0
    %s32 = sadd.s32 %s31, 1
    %s33 = scalar_select %p30, %s31, %s32
    %p36 = pneg %p30
    %p37 = scmp.eq.s32.totalorder %s21, 1
    %p38 = por %p36, %p37
    %p39 = scmp.ne.s32.totalorder %s31, %s34
    %p40 = scmp.eq.s32.totalorder %s21, 0
    %p41 = por %p39, %p40
    %p42 = scmp.ne.s32.totalorder %s31, %s34
    %p43 = scmp.eq.s32.totalorder %s26, 1
    %p44 = por %p42, %p43
    %p45 = scmp.ne.s32.totalorder %s34, %s35
    %p46 = scmp.eq.s32.totalorder %s26, 0
    %p47 = por %p45, %p46
    %p48 = scmp.ne.s32.totalorder %s34, %s35
    %p49 = scmp.eq.s32.totalorder %s27, 1
    %p50 = por %p48, %p49
    %p52 = scmp.ne.s32.totalorder %s35, %s51
    %p53 = scmp.eq.s32.totalorder %s27, 0
    %p54 = por %p52, %p53
    %s56 = sadd.s32 %s55, 1
    %p59 = scmp.eq.s32.totalorder %s21, 1
    %p60 = scmp.ne.s32.totalorder %s55, %s57
    %p61 = scmp.eq.s32.totalorder %s21, 0
    %p62 = por %p60, %p61
    %p63 = scmp.ne.s32.totalorder %s55, %s57
    %p64 = scmp.eq.s32.totalorder %s26, 1
    %p65 = por %p63, %p64
    %p66 = scmp.ne.s32.totalorder %s57, %s58
    %p67 = scmp.eq.s32.totalorder %s26, 0
    %p68 = por %p66, %p67
    %p69 = scmp.ne.s32.totalorder %s57, %s58
    %p70 = scmp.eq.s32.totalorder %s27, 1
    %p71 = por %p69, %p70
    %p73 = scmp.ne.s32.totalorder %s58, %s72
    %p74 = scmp.eq.s32.totalorder %s27, 0
    %p75 = por %p73, %p74
    %s77 = sadd.s32 %s76, 1
    %p80 = scmp.eq.s32.totalorder %s21, 1
    %p81 = scmp.ne.s32.totalorder %s76, %s78
    %p82 = scmp.eq.s32.totalorder %s21, 0
    %p83 = por %p81, %p82
    %p84 = scmp.ne.s32.totalorder %s76, %s78
    %p85 = scmp.eq.s32.totalorder %s26, 1
    %p86 = por %p84, %p85
    %p87 = scmp.ne.s32.totalorder %s78, %s79
    %p88 = scmp.eq.s32.totalorder %s26, 0
    %p89 = por %p87, %p88
    %p90 = scmp.ne.s32.totalorder %s78, %s79
    %p91 = scmp.eq.s32.totalorder %s27, 1
    %p92 = por %p90, %p91
    %p94 = scmp.ne.s32.totalorder %s79, %s93
    %p95 = scmp.eq.s32.totalorder %s27, 0
    %p96 = por %p94, %p95
    %s98 = sadd.s32 %s97, 1
    %p101 = scmp.eq.s32.totalorder %s21, 1
    %p102 = scmp.ne.s32.totalorder %s97, %s99
    %p103 = scmp.eq.s32.totalorder %s21, 0
    %p104 = por %p102, %p103
    %p105 = scmp.ne.s32.totalorder %s97, %s99
    %p106 = scmp.eq.s32.totalorder %s26, 1
    %p107 = por %p105, %p106
    %p108 = scmp.ne.s32.totalorder %s99, %s100
    %p109 = scmp.eq.s32.totalorder %s26, 0
    %p110 = por %p108, %p109
    %p111 = scmp.ne.s32.totalorder %s99, %s100
    %p112 = scmp.eq.s32.totalorder %s27, 1
    %p113 = por %p111, %p112
    %p115 = scmp.ne.s32.totalorder %s100, %s114
    %p116 = scmp.eq.s32.totalorder %s27, 0
    %p117 = por %p115, %p116
    %s119 = sadd.s32 %s118, 1
    %p122 = scmp.eq.s32.totalorder %s21, 1
    %p123 = scmp.ne.s32.totalorder %s118, %s120
    %p124 = scmp.eq.s32.totalorder %s21, 0
    %p125 = por %p123, %p124
    %p126 = scmp.ne.s32.totalorder %s118, %s120
    %p127 = scmp.eq.s32.totalorder %s26, 1
    %p128 = por %p126, %p127
    %p129 = scmp.ne.s32.totalorder %s120, %s121
    %p130 = scmp.eq.s32.totalorder %s26, 0
    %p131 = por %p129, %p130
    %p132 = scmp.ne.s32.totalorder %s120, %s121
    %p133 = scmp.eq.s32.totalorder %s27, 1
    %p134 = por %p132, %p133
    %p136 = scmp.ne.s32.totalorder %s121, %s135
    %p137 = scmp.eq.s32.totalorder %s27, 0
    %p138 = por %p136, %p137
    %s140 = sadd.s32 %s139, 1
    %p143 = scmp.eq.s32.totalorder %s21, 1
    %p144 = scmp.ne.s32.totalorder %s139, %s141
    %p145 = scmp.eq.s32.totalorder %s21, 0
    %p146 = por %p144, %p145
    %p147 = scmp.ne.s32.totalorder %s139, %s141
    %p148 = scmp.eq.s32.totalorder %s26, 1
    %p149 = por %p147, %p148
    %p150 = scmp.ne.s32.totalorder %s141, %s142
    %p151 = scmp.eq.s32.totalorder %s26, 0
    %p152 = por %p150, %p151
    %p153 = scmp.ne.s32.totalorder %s141, %s142
    %p154 = scmp.eq.s32.totalorder %s27, 1
    %p155 = por %p153, %p154
    %p157 = scmp.ne.s32.totalorder %s142, %s156
    %p158 = scmp.eq.s32.totalorder %s27, 0
    %p159 = por %p157, %p158
    %s161 = sadd.s32 %s160, 1
    %p164 = scmp.eq.s32.totalorder %s21, 1
    %p165 = scmp.ne.s32.totalorder %s160, %s162
    %p166 = scmp.eq.s32.totalorder %s21, 0
    %p167 = por %p165, %p166
    %p168 = scmp.ne.s32.totalorder %s160, %s162
    %p169 = scmp.eq.s32.totalorder %s26, 1
    %p170 = por %p168, %p169
    %p171 = scmp.ne.s32.totalorder %s162, %s163
    %p172 = scmp.eq.s32.totalorder %s26, 0
    %p173 = por %p171, %p172
    %p174 = scmp.ne.s32.totalorder %s162, %s163
    %p175 = scmp.eq.s32.totalorder %s27, 1
    %p176 = por %p174, %p175
    %p178 = scmp.ne.s32.totalorder %s163, %s177
    %p179 = scmp.eq.s32.totalorder %s27, 0
    %p180 = por %p178, %p179
    %s182 = sadd.s32 %s181, 1
    %p185 = scmp.eq.s32.totalorder %s21, 1
    %p186 = scmp.ne.s32.totalorder %s181, %s183
    %p187 = scmp.eq.s32.totalorder %s21, 0
    %p188 = por %p186, %p187
    %p189 = scmp.ne.s32.totalorder %s181, %s183
    %p190 = scmp.eq.s32.totalorder %s26, 1
    %p191 = por %p189, %p190
    %p192 = scmp.ne.s32.totalorder %s183, %s184
    %p193 = scmp.eq.s32.totalorder %s26, 0
    %p194 = por %p192, %p193
    %p195 = scmp.ne.s32.totalorder %s183, %s184
    %p196 = scmp.eq.s32.totalorder %s27, 1
    %p197 = por %p195, %p196
    %p199 = scmp.ne.s32.totalorder %s184, %s198
    %p200 = scmp.eq.s32.totalorder %s27, 0
    %p201 = por %p199, %p200
    %s203 = sadd.s32 %s202, 1
    %p206 = scmp.eq.s32.totalorder %s21, 1
    %p207 = scmp.ne.s32.totalorder %s202, %s204
    %p208 = scmp.eq.s32.totalorder %s21, 0
    %p209 = por %p207, %p208
    %p210 = scmp.ne.s32.totalorder %s202, %s204
    %p211 = scmp.eq.s32.totalorder %s26, 1
    %p212 = por %p210, %p211
    %p213 = scmp.ne.s32.totalorder %s204, %s205
    %p214 = scmp.eq.s32.totalorder %s26, 0
    %p215 = por %p213, %p214
    %p216 = scmp.ne.s32.totalorder %s204, %s205
    %p217 = scmp.eq.s32.totalorder %s27, 1
    %p218 = por %p216, %p217
    %p220 = scmp.ne.s32.totalorder %s205, %s219
    %p221 = scmp.eq.s32.totalorder %s27, 0
    %p222 = por %p220, %p221
    %s224 = sadd.s32 %s223, 1
    %p227 = scmp.eq.s32.totalorder %s21, 1
    %p228 = scmp.ne.s32.totalorder %s223, %s225
    %p229 = scmp.eq.s32.totalorder %s21, 0
    %p230 = por %p228, %p229
    %p231 = scmp.ne.s32.totalorder %s223, %s225
    %p232 = scmp.eq.s32.totalorder %s26, 1
    %p233 = por %p231, %p232
    %p234 = scmp.ne.s32.totalorder %s225, %s226
    %p235 = scmp.eq.s32.totalorder %s26, 0
    %p236 = por %p234, %p235
    %p237 = scmp.ne.s32.totalorder %s225, %s226
    %p238 = scmp.eq.s32.totalorder %s27, 1
    %p239 = por %p237, %p238
    %p241 = scmp.ne.s32.totalorder %s226, %s240
    %p242 = scmp.eq.s32.totalorder %s27, 0
    %p243 = por %p241, %p242
    %s245 = sadd.s32 %s244, 1
    %p248 = scmp.eq.s32.totalorder %s21, 1
    %p249 = scmp.ne.s32.totalorder %s244, %s246
    %p250 = scmp.eq.s32.totalorder %s21, 0
    %p251 = por %p249, %p250
    %p252 = scmp.ne.s32.totalorder %s244, %s246
    %p253 = scmp.eq.s32.totalorder %s26, 1
    %p254 = por %p252, %p253
    %p255 = scmp.ne.s32.totalorder %s246, %s247
    %p256 = scmp.eq.s32.totalorder %s26, 0
    %p257 = por %p255, %p256
    %p258 = scmp.ne.s32.totalorder %s246, %s247
    %p259 = scmp.eq.s32.totalorder %s27, 1
    %p260 = por %p258, %p259
    %p262 = scmp.ne.s32.totalorder %s247, %s261
    %p263 = scmp.eq.s32.totalorder %s27, 0
    %p264 = por %p262, %p263
    %s266 = sadd.s32 %s265, 1
    %p269 = scmp.eq.s32.totalorder %s21, 1
    %p270 = scmp.ne.s32.totalorder %s265, %s267
    %p271 = scmp.eq.s32.totalorder %s21, 0
    %p272 = por %p270, %p271
    %p273 = scmp.ne.s32.totalorder %s265, %s267
    %p274 = scmp.eq.s32.totalorder %s26, 1
    %p275 = por %p273, %p274
    %p276 = scmp.ne.s32.totalorder %s267, %s268
    %p277 = scmp.eq.s32.totalorder %s26, 0
    %p278 = por %p276, %p277
    %p279 = scmp.ne.s32.totalorder %s267, %s268
    %p280 = scmp.eq.s32.totalorder %s27, 1
    %p281 = por %p279, %p280
    %p283 = scmp.ne.s32.totalorder %s268, %s282
    %p284 = scmp.eq.s32.totalorder %s27, 0
    %p285 = por %p283, %p284
    %s287 = sadd.s32 %s286, 1
    %p290 = scmp.eq.s32.totalorder %s21, 1
    %p291 = scmp.ne.s32.totalorder %s286, %s288
    %p292 = scmp.eq.s32.totalorder %s21, 0
    %p293 = por %p291, %p292
    %p294 = scmp.ne.s32.totalorder %s286, %s288
    %p295 = scmp.eq.s32.totalorder %s26, 1
    %p296 = por %p294, %p295
    %p297 = scmp.ne.s32.totalorder %s288, %s289
    %p298 = scmp.eq.s32.totalorder %s26, 0
    %p299 = por %p297, %p298
    %p300 = scmp.ne.s32.totalorder %s288, %s289
    %p301 = scmp.eq.s32.totalorder %s27, 1
    %p302 = por %p300, %p301
    %p304 = scmp.ne.s32.totalorder %s289, %s303
    %p305 = scmp.eq.s32.totalorder %s27, 0
    %p306 = por %p304, %p305
    %s308 = sadd.s32 %s307, 1
    %p311 = scmp.eq.s32.totalorder %s21, 1
    %p312 = scmp.ne.s32.totalorder %s307, %s309
    %p313 = scmp.eq.s32.totalorder %s21, 0
    %p314 = por %p312, %p313
    %p315 = scmp.ne.s32.totalorder %s307, %s309
    %p316 = scmp.eq.s32.totalorder %s26, 1
    %p317 = por %p315, %p316
    %p318 = scmp.ne.s32.totalorder %s309, %s310
    %p319 = scmp.eq.s32.totalorder %s26, 0
    %p320 = por %p318, %p319
    %p321 = scmp.ne.s32.totalorder %s309, %s310
    %p322 = scmp.eq.s32.totalorder %s27, 1
    %p323 = por %p321, %p322
    %p325 = scmp.ne.s32.totalorder %s310, %s324
    %p326 = scmp.eq.s32.totalorder %s27, 0
    %p327 = por %p325, %p326
    %s329 = sadd.s32 %s328, 1
    %p332 = scmp.eq.s32.totalorder %s21, 1
    %p333 = scmp.ne.s32.totalorder %s328, %s330
    %p334 = scmp.eq.s32.totalorder %s21, 0
    %p335 = por %p333, %p334
    %p336 = scmp.ne.s32.totalorder %s328, %s330
    %p337 = scmp.eq.s32.totalorder %s26, 1
    %p338 = por %p336, %p337
    %p339 = scmp.ne.s32.totalorder %s330, %s331
    %p340 = scmp.eq.s32.totalorder %s26, 0
    %p341 = por %p339, %p340
    %p342 = scmp.ne.s32.totalorder %s330, %s331
    %p343 = scmp.eq.s32.totalorder %s27, 1
    %p344 = por %p342, %p343
    %p346 = scmp.ne.s32.totalorder %s331, %s345
    %p347 = scmp.eq.s32.totalorder %s27, 0
    %p348 = por %p346, %p347
    %s349 = ssub.s32 %s21, %s28
    %p350 = scmp.eq.s32.totalorder %s349, 0
    %s352 = sadd.s32 %s351, 1
    %s353 = scalar_select %p350, %s351, %s352
    %p356 = pneg %p350
    %p357 = scmp.eq.s32.totalorder %s21, 1
    %p358 = por %p356, %p357
    %p359 = scmp.ne.s32.totalorder %s351, %s354
    %p360 = scmp.eq.s32.totalorder %s21, 0
    %p361 = por %p359, %p360
    %p362 = scmp.ne.s32.totalorder %s351, %s354
    %p363 = scmp.eq.s32.totalorder %s26, 1
    %p364 = por %p362, %p363
    %p365 = scmp.ne.s32.totalorder %s354, %s355
    %p366 = scmp.eq.s32.totalorder %s26, 0
    %p367 = por %p365, %p366
    %p368 = scmp.ne.s32.totalorder %s354, %s355
    %p369 = scmp.eq.s32.totalorder %s27, 1
    %p370 = por %p368, %p369
    %p372 = scmp.ne.s32.totalorder %s355, %s371
    %p373 = scmp.eq.s32.totalorder %s27, 0
    %p374 = por %p372, %p373
    %p375 = scmp.le.s32.totalorder 1, %s21
    %p376 = scmp.lt.s32.totalorder %s21, 3
    %p377 = pnand %p375, %p376
    %p378 = pneg %p377
    // Predicated region
    $region9: #{unet_mid_forward.1} parent=5 // pred_check
      _
    $region10: #{unet_mid_forward.1} parent=5 // pred_check_branch
      %380 = sbr.rel (%p377) target = $region12
    $region11: #{unet_mid_forward.1} parent=5 // pred_region
      %s381 = ssub.s32 %s21, 1
      // Predicated region
      $region13: #{unet_mid_forward.1} parent=11 // pred_check
        %p382 = pneg %p68
      $region14: #{unet_mid_forward.1} parent=11 // pred_check_branch
        %384 = sbr.rel (%p382) target = $region16
      $region15: #{unet_mid_forward.1} parent=11 // pred_region
        _
      $region16: #{unet_mid_forward.1} parent=11 // pred_fallthru
        _
      // Predicated region
      $region17: #{unet_mid_forward.1} parent=11 // pred_check
        %p385 = pneg %p89
      $region18: #{unet_mid_forward.1} parent=11 // pred_check_branch
        %387 = sbr.rel (%p385) target = $region20
      $region19: #{unet_mid_forward.1} parent=11 // pred_region
        _
      $region20: #{unet_mid_forward.1} parent=11 // pred_fallthru
        _
      // Predicated region
      $region21: #{unet_mid_forward.1} parent=11 // pred_check
        %p388 = pneg %p110
      $region22: #{unet_mid_forward.1} parent=11 // pred_check_branch
        %390 = sbr.rel (%p388) target = $region24
      $region23: #{unet_mid_forward.1} parent=11 // pred_region
        _
      $region24: #{unet_mid_forward.1} parent=11 // pred_fallthru
        _
      // Predicated region
      $region25: #{unet_mid_forward.1} parent=11 // pred_check
        %p391 = pneg %p131
      $region26: #{unet_mid_forward.1} parent=11 // pred_check_branch
        %393 = sbr.rel (%p391) target = $region28
      $region27: #{unet_mid_forward.1} parent=11 // pred_region
        _
      $region28: #{unet_mid_forward.1} parent=11 // pred_fallthru
        _
      // Predicated region
      $region29: #{unet_mid_forward.1} parent=11 // pred_check
        %p394 = pneg %p152
      $region30: #{unet_mid_forward.1} parent=11 // pred_check_branch
        %396 = sbr.rel (%p394) target = $region32
      $region31: #{unet_mid_forward.1} parent=11 // pred_region
        _
      $region32: #{unet_mid_forward.1} parent=11 // pred_fallthru
        _
      // Predicated region
      $region33: #{unet_mid_forward.1} parent=11 // pred_check
        %p397 = pneg %p173
      $region34: #{unet_mid_forward.1} parent=11 // pred_check_branch
        %399 = sbr.rel (%p397) target = $region36
      $region35: #{unet_mid_forward.1} parent=11 // pred_region
        _
      $region36: #{unet_mid_forward.1} parent=11 // pred_fallthru
        _
      // Predicated region
      $region37: #{unet_mid_forward.1} parent=11 // pred_check
        %p400 = pneg %p194
      $region38: #{unet_mid_forward.1} parent=11 // pred_check_branch
        %402 = sbr.rel (%p400) target = $region40
      $region39: #{unet_mid_forward.1} parent=11 // pred_region
        _
      $region40: #{unet_mid_forward.1} parent=11 // pred_fallthru
        _
      // Predicated region
      $region41: #{unet_mid_forward.1} parent=11 // pred_check
        %p403 = pneg %p215
      $region42: #{unet_mid_forward.1} parent=11 // pred_check_branch
        %405 = sbr.rel (%p403) target = $region44
      $region43: #{unet_mid_forward.1} parent=11 // pred_region
        _
      $region44: #{unet_mid_forward.1} parent=11 // pred_fallthru
        _
      // Predicated region
      $region45: #{unet_mid_forward.1} parent=11 // pred_check
        %p406 = pneg %p236
      $region46: #{unet_mid_forward.1} parent=11 // pred_check_branch
        %408 = sbr.rel (%p406) target = $region48
      $region47: #{unet_mid_forward.1} parent=11 // pred_region
        _
      $region48: #{unet_mid_forward.1} parent=11 // pred_fallthru
        _
      // Predicated region
      $region49: #{unet_mid_forward.1} parent=11 // pred_check
        %p409 = pneg %p257
      $region50: #{unet_mid_forward.1} parent=11 // pred_check_branch
        %411 = sbr.rel (%p409) target = $region52
      $region51: #{unet_mid_forward.1} parent=11 // pred_region
        _
      $region52: #{unet_mid_forward.1} parent=11 // pred_fallthru
        _
      // Predicated region
      $region53: #{unet_mid_forward.1} parent=11 // pred_check
        %p412 = pneg %p278
      $region54: #{unet_mid_forward.1} parent=11 // pred_check_branch
        %414 = sbr.rel (%p412) target = $region56
      $region55: #{unet_mid_forward.1} parent=11 // pred_region
        _
      $region56: #{unet_mid_forward.1} parent=11 // pred_fallthru
        _
      // Predicated region
      $region57: #{unet_mid_forward.1} parent=11 // pred_check
        %p415 = pneg %p299
      $region58: #{unet_mid_forward.1} parent=11 // pred_check_branch
        %417 = sbr.rel (%p415) target = $region60
      $region59: #{unet_mid_forward.1} parent=11 // pred_region
        _
      $region60: #{unet_mid_forward.1} parent=11 // pred_fallthru
        _
      // Predicated region
      $region61: #{unet_mid_forward.1} parent=11 // pred_check
        %p418 = pneg %p320
      $region62: #{unet_mid_forward.1} parent=11 // pred_check_branch
        %420 = sbr.rel (%p418) target = $region64
      $region63: #{unet_mid_forward.1} parent=11 // pred_region
        _
      $region64: #{unet_mid_forward.1} parent=11 // pred_fallthru
        _
      // Predicated region
      $region65: #{unet_mid_forward.1} parent=11 // pred_check
        %p421 = pneg %p341
      $region66: #{unet_mid_forward.1} parent=11 // pred_check_branch
        %423 = sbr.rel (%p421) target = $region68
      $region67: #{unet_mid_forward.1} parent=11 // pred_region
        _
      $region68: #{unet_mid_forward.1} parent=11 // pred_fallthru
        _
    $region12: #{unet_mid_forward.1} parent=5 // pred_fallthru
      _
    %p424 = scmp.lt.s32.totalorder %s21, 2
    // Predicated region
    $region69: #{unet_mid_forward.1} parent=5 // pred_check
      %p425 = pneg %p424
    $region70: #{unet_mid_forward.1} parent=5 // pred_check_branch
      %427 = sbr.rel (%p425) target = $region72
    $region71: #{unet_mid_forward.1} parent=5 // pred_region
      // Predicated region
      $region73: #{unet_mid_forward.1} parent=71 // pred_check
        %p428 = pneg %p41
      $region74: #{unet_mid_forward.1} parent=71 // pred_check_branch
        %430 = sbr.rel (%p428) target = $region76
      $region75: #{unet_mid_forward.1} parent=71 // pred_region
        %s431 = smul.u32 2, %s21
        %p432 = scmp.lt.s32.totalorder %s431, 3
        %s433 = scalar_select %p432, %s431, 3
        %s434 = smul.addr %s433, 2
        %s435 = smul.addr %s434, 8
        %s436 = scalar_lea.vmem %s0, %s435
        %s437 = smul.u32 2, %s21
      $region76: #{unet_mid_forward.1} parent=71 // pred_fallthru
        _
    $region72: #{unet_mid_forward.1} parent=5 // pred_fallthru
      _
    %p438 = scmp.le.s32.totalorder 1, %s21
    %p439 = scmp.lt.s32.totalorder %s21, 3
    %p440 = pnand %p438, %p439
    %p441 = pneg %p440
    // Predicated region
    $region77: #{unet_mid_forward.1} parent=5 // pred_check
      _
    $region78: #{unet_mid_forward.1} parent=5 // pred_check_branch
      %443 = sbr.rel (%p440) target = $region80
    $region79: #{unet_mid_forward.1} parent=5 // pred_region
      %s444 = ssub.s32 %s21, 1
      %s445 = smul.u32 2, %s26
      %p446 = scmp.lt.s32.totalorder %s445, 3
      %s447 = scalar_select %p446, %s445, 3
      %s448 = smul.addr %s447, 2
      %s449 = smul.addr %s448, 8
      %s450 = scalar_lea.vmem %s0, %s449
      %p451 = pneg %p47
      %p452 = pneg %p44
      %p453 = pneg %p68
      %p454 = pneg %p65
      %p455 = pneg %p89
      %p456 = pneg %p86
      %p457 = pneg %p110
      %p458 = pneg %p107
      %p459 = pneg %p131
      %p460 = pneg %p128
      %p461 = pneg %p152
      %p462 = pneg %p149
      %p463 = pneg %p173
      %p464 = pneg %p170
      %p465 = pneg %p194
      %p466 = pneg %p191
      %p467 = pneg %p215
      %p468 = pneg %p212
      %p469 = pneg %p236
      %p470 = pneg %p233
      %p471 = pneg %p257
      %p472 = pneg %p254
      %p473 = pneg %p278
      %p474 = pneg %p275
      %p475 = pneg %p299
      %p476 = pneg %p296
      %p477 = pneg %p320
      %p478 = pneg %p317
      %p479 = pneg %p341
      %p480 = pneg %p338
      %p481 = pneg %p367
      %p482 = pneg %p364
      %s483 = smul.u32 2, %s26
      %p484 = scmp.lt.s32.totalorder %s483, 3
      %s485 = scalar_select %p484, %s483, 3
      %s486 = smul.addr %s485, 2
      %s487 = smul.addr %s486, 8
      %s488 = scalar_lea.vmem %s15, %s487
      %s489 = smul.u32 2, %s26
      %p490 = scmp.lt.s32.totalorder %s489, 3
      %s491 = scalar_select %p490, %s489, 3
      %s492 = smul.addr %s491, 2
      %s493 = smul.addr %s492, 8
      %s494 = scalar_lea.vmem %s0, %s493
      %s495 = smul.u32 2, %s26
      %s496 = smul.u32 2, %s26
      %p497 = scmp.lt.s32.totalorder %s496, 3
      %s498 = scalar_select %p497, %s496, 3
      %s499 = smul.addr %s498, 2
      %s500 = smul.addr %s499, 8
      %s501 = scalar_lea.vmem %s15, %s500
      %s502 = smul.u32 2, %s26
      %v504 = vlaneseq
      %v505 = vshrl.u32 %v504, 7
      %v506 = vadd.s32 %v505, 8
      %v507 = vadd.s32 %v505, 16
      %v508 = vadd.s32 %v505, 24
      %vm509 = vcmp.lt.s32.totalorder %v505, 0
      %v510 = vsub.s32 0, %v505
      %v511 = vsel %vm509, %v510, %v505
      %v512 = vshrl.u32 %v511, 4
      %v513 = vand.u32 %v511, 15
      %v514 = vsub.s32 0, %v513
      %v515 = vsel %vm509, %v514, %v513
      %vm516 = vcmp.lt.s32.totalorder %v506, 0
      %v517 = vsub.s32 0, %v506
      %v518 = vsel %vm516, %v517, %v506
      %v519 = vshrl.u32 %v518, 4
      %v520 = vand.u32 %v518, 15
      %v521 = vsub.s32 0, %v520
      %v522 = vsel %vm516, %v521, %v520
      %vm523 = vcmp.lt.s32.totalorder %v507, 0
      %v524 = vsub.s32 0, %v507
      %v525 = vsel %vm523, %v524, %v507
      %v526 = vshrl.u32 %v525, 4
      %v527 = vand.u32 %v525, 15
      %v528 = vsub.s32 0, %v527
      %v529 = vsel %vm523, %v528, %v527
      %vm530 = vcmp.lt.s32.totalorder %v508, 0
      %v531 = vsub.s32 0, %v508
      %v532 = vsel %vm530, %v531, %v508
      %v533 = vshrl.u32 %v532, 4
      %v534 = vand.u32 %v532, 15
      %v535 = vsub.s32 0, %v534
      %v536 = vsel %vm530, %v535, %v534
      %vm537 = vcmp.ne.s32.totalorder %v515, 0
      %vm538 = vcmp.ne.s32.totalorder %v522, 0
      %vm539 = vcmp.ne.s32.totalorder %v529, 0
      %vm540 = vcmp.ne.s32.totalorder %v536, 0
      %vm541 = vcmp.lt.s32.totalorder %v515, 0
      %vm542 = vcmp.lt.s32.totalorder %v522, 0
      %vm543 = vcmp.lt.s32.totalorder %v529, 0
      %vm544 = vcmp.lt.s32.totalorder %v536, 0
      %vm545 = vmand %vm541, %vm537
      %vm546 = vmand %vm542, %vm538
      %vm547 = vmand %vm543, %vm539
      %vm548 = vmand %vm544, %vm540
      %v549 = vadd.s32 %v515, 16
      %v550 = vadd.s32 %v522, 16
      %v551 = vadd.s32 %v529, 16
      %v552 = vadd.s32 %v536, 16
      %v553 = vsel %vm545, %v549, %v515
      %v554 = vsel %vm546, %v550, %v522
      %v555 = vsel %vm547, %v551, %v529
      %v556 = vsel %vm548, %v552, %v536
      %v557 = vld [vmem:[%s494] sm:$0xff]
      %v558 = vld [vmem:[%s494 + $0x8] sm:$0xff]
      %v559 = vld [vmem:[%s494 + $0x10] sm:$0xff]
      %v560 = vld [vmem:[%s494 + $0x18] sm:$0xff]
      %v561 = vld [vmem:[%s2] sm:$0x1]
      %v562 = vrot.slane %v557, 7
      %v563 = vrot.slane %v558, 7
      %v564 = vrot.slane %v559, 7
      %v565 = vrot.slane %v560, 7
      %vm566 = vcmp.lt.s32.totalorder %v505, 1
      %v567 = vsel %vm566, %v564, %v565
      %v568 = vsel %vm566, %v563, %v564
      %v569 = vsel %vm566, %v562, %v563
      %v570 = vsel %vm566, %v565, %v562
      %vm571 = vcmp.ge.s32.totalorder %v553, 1
      %vm572 = vcmp.ge.s32.totalorder %v554, 1
      %vm573 = vcmp.ge.s32.totalorder %v555, 1
      %vm574 = vcmp.ge.s32.totalorder %v556, 1
      %v575 = vsel %vm571, 1, 0
      %v576 = vsel %vm572, 1, 0
      %v577 = vsel %vm573, 1, 0
      %v578 = vsel %vm574, 1, 0
      %v579 = vcvt.s32.f32 %v575
      %v580 = vcvt.s32.f32 %v576
      %v581 = vcvt.s32.f32 %v577
      %v582 = vcvt.s32.f32 %v578
      %v583 = vmul.f32 %v570, %v579
      %v584 = vmul.f32 %v569, %v580
      %v585 = vmul.f32 %v568, %v581
      %v586 = vmul.f32 %v567, %v582
      %v587 = vpack.c.bf16 %v584, %v583
      %v588 = vpack.c.bf16 %v586, %v585
      %v589 = vld [vmem:[%s1] sm:$0xf]
      %v590 = vpack.c.bf16 %v558, %v557
      %v591 = vpack.c.bf16 %v560, %v559
      %s592 = scalar_lea.vmem %s1, 4
      %v593 = vld [vmem:[%s592] sm:$0xf]
      %vm594 = vcmask 64512
      %v596 = vsel %vm594, %v590, 0
      %v599 = vsel %vm594, %v591, 0
      %vm601 = vcmask 1043456
      %v603 = vsel %vm601, %v593, 0
      %605 = vmatprep.subr.bf16.mxu0 0
      %606 = vmatpush1.bf16.msra.mxu0 %v603
      %607 = vmatprep.subr.bf16.mxu0 0
      %608 = vmatpush1.bf16.msra.mxu0 0
      %609 = vmatprep.subr.bf16.mxu0 0
      %610 = vmatpush1.bf16.msra.mxu0 0
      %611 = vmatprep.subr.bf16.mxu0 0
      %612 = vmatpush1.bf16.msra.mxu0 0
      %613 = vmatprep.subr.bf16.mxu0 0
      %614 = vmatpush1.bf16.msra.mxu0 0
      %615 = vmatprep.subr.bf16.mxu0 0
      %616 = vmatpush1.bf16.msra.mxu0 0
      %617 = vmatprep.subr.bf16.mxu0 0
      %618 = vmatpush1.bf16.msra.mxu0 0
      %619 = vmatprep.subr.bf16.mxu0 0
      %620 = vmatpush1.bf16.msra.mxu0 0
      %621 = vmatprep.subr.bf16.mxu0 0
      %622 = vmatpush1.bf16.msra.mxu0 0
      %623 = vmatprep.subr.bf16.mxu0 0
      %624 = vmatpush1.bf16.msra.mxu0 0
      %625 = vmatprep.subr.bf16.mxu0 0
      %626 = vmatpush1.bf16.msra.mxu0 0
      %627 = vmatprep.subr.bf16.mxu0 0
      %628 = vmatpush1.bf16.msra.mxu0 0
      %629 = vmatprep.subr.bf16.mxu0 0
      %630 = vmatpush1.bf16.msra.mxu0 0
      %631 = vmatprep.subr.bf16.mxu0 0
      %632 = vmatpush1.bf16.msra.mxu0 0
      %633 = vmatprep.subr.bf16.mxu0 0
      %634 = vmatpush1.bf16.msra.mxu0 0
      %635 = vmatprep.subr.bf16.mxu0 0
      %636 = vmatpush1.bf16.msra.mxu0 0
      %637 = vmatprep.mubr.bf16.mxu0 0
      %638 = vmatmul.mubr.bf16.gmra.mrb[0].mxu0 %v596
      %v639 = vpop.f32.mrb[0].mxu0
      %v640 = vadd.f32 0.0, %v639
      %v641 = vpop.f32.mrb[0].mxu0
      %v642 = vpop.f32.mrb[0].mxu0
      %v643 = vadd.f32 0.0, %v642
      %v644 = vpop.f32.mrb[0].mxu0
      %645 = vmatprep.mubr.bf16.mxu0 0
      %646 = vmatmul.mubr.bf16.gmra.mrb[0].mxu0 %v599
      %v647 = vpop.f32.mrb[0].mxu0
      %v648 = vadd.f32 0.0, %v647
      %v649 = vpop.f32.mrb[0].mxu0
      %v650 = vpop.f32.mrb[0].mxu0
      %v651 = vadd.f32 0.0, %v650
      %v652 = vpop.f32.mrb[0].mxu0
      %653 = vdwg.mxu0
      %v655 = vsel %vm594, %v587, 0
      %v658 = vsel %vm594, %v588, 0
      %v661 = vsel %vm601, %v589, 0
      %663 = vmatprep.subr.bf16.mxu0 0
      %664 = vmatpush1.bf16.msra.mxu0 %v661
      %665 = vmatprep.subr.bf16.mxu0 0
      %666 = vmatpush1.bf16.msra.mxu0 0
      %667 = vmatprep.subr.bf16.mxu0 0
      %668 = vmatpush1.bf16.msra.mxu0 0
      %669 = vmatprep.subr.bf16.mxu0 0
      %670 = vmatpush1.bf16.msra.mxu0 0
      %671 = vmatprep.subr.bf16.mxu0 0
      %672 = vmatpush1.bf16.msra.mxu0 0
      %673 = vmatprep.subr.bf16.mxu0 0
      %674 = vmatpush1.bf16.msra.mxu0 0
      %675 = vmatprep.subr.bf16.mxu0 0
      %676 = vmatpush1.bf16.msra.mxu0 0
      %677 = vmatprep.subr.bf16.mxu0 0
      %678 = vmatpush1.bf16.msra.mxu0 0
      %679 = vmatprep.subr.bf16.mxu0 0
      %680 = vmatpush1.bf16.msra.mxu0 0
      %681 = vmatprep.subr.bf16.mxu0 0
      %682 = vmatpush1.bf16.msra.mxu0 0
      %683 = vmatprep.subr.bf16.mxu0 0
      %684 = vmatpush1.bf16.msra.mxu0 0
      %685 = vmatprep.subr.bf16.mxu0 0
      %686 = vmatpush1.bf16.msra.mxu0 0
      %687 = vmatprep.subr.bf16.mxu0 0
      %688 = vmatpush1.bf16.msra.mxu0 0
      %689 = vmatprep.subr.bf16.mxu0 0
      %690 = vmatpush1.bf16.msra.mxu0 0
      %691 = vmatprep.subr.bf16.mxu0 0
      %692 = vmatpush1.bf16.msra.mxu0 0
      %693 = vmatprep.subr.bf16.mxu0 0
      %694 = vmatpush1.bf16.msra.mxu0 0
      %695 = vmatprep.mubr.bf16.mxu0 0
      %696 = vmatmul.mubr.bf16.gmra.mrb[0].mxu0 %v655
      %v697 = vpop.f32.mrb[0].mxu0
      %v698 = vadd.f32 %v640, %v697
      %v699 = vpop.f32.mrb[0].mxu0
      %v700 = vpop.f32.mrb[0].mxu0
      %v701 = vadd.f32 %v643, %v700
      %v702 = vpop.f32.mrb[0].mxu0
      %703 = vmatprep.mubr.bf16.mxu0 0
      %704 = vmatmul.mubr.bf16.gmra.mrb[0].mxu0 %v658
      %v705 = vpop.f32.mrb[0].mxu0
      %v706 = vadd.f32 %v648, %v705
      %v707 = vpop.f32.mrb[0].mxu0
      %v708 = vpop.f32.mrb[0].mxu0
      %v709 = vadd.f32 %v651, %v708
      %v710 = vpop.f32.mrb[0].mxu0
      %711 = vdwg.mxu0
      %v712 = vrot.slane %v557, 1
      %v713 = vrot.slane %v558, 1
      %v714 = vrot.slane %v559, 1
      %v715 = vrot.slane %v560, 1
      %vm716 = vcmp.lt.s32.totalorder %v505, 7
      %v717 = vsel %vm716, %v714, %v715
      %v718 = vsel %vm716, %v713, %v714
      %v719 = vsel %vm716, %v712, %v713
      %v720 = vsel %vm716, %v715, %v712
      %vm721 = vcmp.lt.s32.totalorder %v553, 15
      %vm722 = vcmp.lt.s32.totalorder %v554, 15
      %vm723 = vcmp.lt.s32.totalorder %v555, 15
      %vm724 = vcmp.lt.s32.totalorder %v556, 15
      %v725 = vsel %vm721, 1, 0
      %v726 = vsel %vm722, 1, 0
      %v727 = vsel %vm723, 1, 0
      %v728 = vsel %vm724, 1, 0
      %v729 = vcvt.s32.f32 %v725
      %v730 = vcvt.s32.f32 %v726
      %v731 = vcvt.s32.f32 %v727
      %v732 = vcvt.s32.f32 %v728
      %v733 = vmul.f32 %v719, %v729
      %v734 = vmul.f32 %v718, %v730
      %v735 = vmul.f32 %v717, %v731
      %v736 = vmul.f32 %v720, %v732
      %v737 = vpack.c.bf16 %v734, %v733
      %v738 = vpack.c.bf16 %v736, %v735
      %s739 = scalar_lea.vmem %s1, 8
      %v740 = vld [vmem:[%s739] sm:$0xf]
      %v742 = vsel %vm594, %v737, 0
      %v745 = vsel %vm594, %v738, 0
      %v748 = vsel %vm601, %v740, 0
      %750 = vmatprep.subr.bf16.mxu0 0
      %751 = vmatpush1.bf16.msra.mxu0 %v748
      %752 = vmatprep.subr.bf16.mxu0 0
      %753 = vmatpush1.bf16.msra.mxu0 0
      %754 = vmatprep.subr.bf16.mxu0 0
      %755 = vmatpush1.bf16.msra.mxu0 0
      %756 = vmatprep.subr.bf16.mxu0 0
      %757 = vmatpush1.bf16.msra.mxu0 0
      %758 = vmatprep.subr.bf16.mxu0 0
      %759 = vmatpush1.bf16.msra.mxu0 0
      %760 = vmatprep.subr.bf16.mxu0 0
      %761 = vmatpush1.bf16.msra.mxu0 0
      %762 = vmatprep.subr.bf16.mxu0 0
      %763 = vmatpush1.bf16.msra.mxu0 0
      %764 = vmatprep.subr.bf16.mxu0 0
      %765 = vmatpush1.bf16.msra.mxu0 0
      %766 = vmatprep.subr.bf16.mxu0 0
      %767 = vmatpush1.bf16.msra.mxu0 0
      %768 = vmatprep.subr.bf16.mxu0 0
      %769 = vmatpush1.bf16.msra.mxu0 0
      %770 = vmatprep.subr.bf16.mxu0 0
      %771 = vmatpush1.bf16.msra.mxu0 0
      %772 = vmatprep.subr.bf16.mxu0 0
      %773 = vmatpush1.bf16.msra.mxu0 0
      %774 = vmatprep.subr.bf16.mxu0 0
      %775 = vmatpush1.bf16.msra.mxu0 0
      %776 = vmatprep.subr.bf16.mxu0 0
      %777 = vmatpush1.bf16.msra.mxu0 0
      %778 = vmatprep.subr.bf16.mxu0 0
      %779 = vmatpush1.bf16.msra.mxu0 0
      %780 = vmatprep.subr.bf16.mxu0 0
      %781 = vmatpush1.bf16.msra.mxu0 0
      %782 = vmatprep.mubr.bf16.mxu0 0
      %783 = vmatmul.mubr.bf16.gmra.mrb[0].mxu0 %v742
      %v784 = vpop.f32.mrb[0].mxu0
      %v785 = vadd.f32 0.0, %v784
      %v786 = vpop.f32.mrb[0].mxu0
      %v787 = vpop.f32.mrb[0].mxu0
      %v788 = vadd.f32 0.0, %v787
      %v789 = vpop.f32.mrb[0].mxu0
      %790 = vmatprep.mubr.bf16.mxu0 0
      %791 = vmatmul.mubr.bf16.gmra.mrb[0].mxu0 %v745
      %v792 = vpop.f32.mrb[0].mxu0
      %v793 = vadd.f32 0.0, %v792
      %v794 = vpop.f32.mrb[0].mxu0
      %v795 = vpop.f32.mrb[0].mxu0
      %v796 = vadd.f32 0.0, %v795
      %v797 = vpop.f32.mrb[0].mxu0
      %798 = vdwg.mxu0
      %v799 = vadd.f32 %v698, %v785
      %v800 = vadd.f32 %v701, %v788
      %v801 = vadd.f32 %v706, %v793
      %v802 = vadd.f32 %v709, %v796
      %v804 = vlaneseq
      %v805 = vshrl.u32 %v804, 7
      %v806 = vsub.s32 0, %v805
      %v807 = vrot.slane %v561, %v806
      %v809 = vadd.f32 %v799, %v807
      %v810 = vadd.f32 %v800, %v807
      %v811 = vadd.f32 %v801, %v807
      %v812 = vadd.f32 %v802, %v807
      %v813 = vand.u32 2147483647, %v809
      %v814 = vand.u32 2147483647, %v810
      %v815 = vand.u32 2147483647, %v811
      %v816 = vand.u32 2147483647, %v812
      %vm817 = vcmask 261120
      %v818 = vsel %vm817, %v813, 0.0
      %819 = vadd.xlane.f32.xlu0 %v818
      %v820 = vpop.xlane.xlu0 %819
      %v821 = vsel %vm817, %v814, 0.0
      %822 = vadd.xlane.f32.xlu0 %v821
      %v823 = vpop.xlane.xlu0 %822
      %v824 = vsel %vm817, %v815, 0.0
      %825 = vadd.xlane.f32.xlu0 %v824
      %v826 = vpop.xlane.xlu0 %825
      %v827 = vsel %vm817, %v816, 0.0
      %828 = vadd.xlane.f32.xlu0 %v827
      %v829 = vpop.xlane.xlu0 %828
      %vm830 = vcmp.gt.f32.partialorder %v820, 0.0
      %vm831 = vcmp.gt.f32.partialorder %v823, 0.0
      %vm832 = vcmp.gt.f32.partialorder %v826, 0.0
      %vm833 = vcmp.gt.f32.partialorder %v829, 0.0
      %v834 = vsel %vm830, 1, 0
      %v835 = vsel %vm831, 1, 0
      %v836 = vsel %vm832, 1, 0
      %v837 = vsel %vm833, 1, 0
      %v838 = vcvt.s32.f32 %v834
      %v839 = vcvt.s32.f32 %v835
      %v840 = vcvt.s32.f32 %v836
      %v841 = vcvt.s32.f32 %v837
      %v842 = vld [vmem:[%s3] sm:$0x1]
      %v843 = vld [vmem:[%s4] sm:$0x1]
      %v844 = vsel %vm817, %v809, 0.0
      %845 = vadd.xlane.f32.xlu0 %v844
      %v846 = vpop.xlane.xlu0 %845
      %v847 = vsel %vm817, %v810, 0.0
      %848 = vadd.xlane.f32.xlu0 %v847
      %v849 = vpop.xlane.xlu0 %848
      %v850 = vsel %vm817, %v811, 0.0
      %851 = vadd.xlane.f32.xlu0 %v850
      %v852 = vpop.xlane.xlu0 %851
      %v853 = vsel %vm817, %v812, 0.0
      %854 = vadd.xlane.f32.xlu0 %v853
      %v855 = vpop.xlane.xlu0 %854
      %v856 = vrcp.pop 32.0
      %v857 = vmul.f32 %v846, %v856
      %v858 = vmul.f32 %v849, %v856
      %v859 = vmul.f32 %v852, %v856
      %v860 = vmul.f32 %v855, %v856
      %v861 = vsub.f32 %v809, %v857
      %v862 = vsub.f32 %v810, %v858
      %v863 = vsub.f32 %v811, %v859
      %v864 = vsub.f32 %v812, %v860
      %v865 = vmul.f32 %v861, %v861
      %v866 = vmul.f32 %v862, %v862
      %v867 = vmul.f32 %v863, %v863
      %v868 = vmul.f32 %v864, %v864
      %v869 = vsel %vm817, %v865, 0.0
      %870 = vadd.xlane.f32.xlu0 %v869
      %v871 = vpop.xlane.xlu0 %870
      %v872 = vsel %vm817, %v866, 0.0
      %873 = vadd.xlane.f32.xlu0 %v872
      %v874 = vpop.xlane.xlu0 %873
      %v875 = vsel %vm817, %v867, 0.0
      %876 = vadd.xlane.f32.xlu0 %v875
      %v877 = vpop.xlane.xlu0 %876
      %v878 = vsel %vm817, %v868, 0.0
      %879 = vadd.xlane.f32.xlu0 %v878
      %v880 = vpop.xlane.xlu0 %879
      %v881 = vmul.f32 %v871, %v856
      %v882 = vmul.f32 %v874, %v856
      %v883 = vmul.f32 %v877, %v856
      %v884 = vmul.f32 %v880, %v856
      %v885 = vadd.f32 %v881, 1e-05
      %v886 = vadd.f32 %v882, 1e-05
      %v887 = vadd.f32 %v883, 1e-05
      %v888 = vadd.f32 %v884, 1e-05
      %v889 = vrsqrt.pop %v885
      %v890 = vrsqrt.pop %v886
      %v891 = vrsqrt.pop %v887
      %v892 = vrsqrt.pop %v888
      %v893 = vmul.f32 %v861, %v889
      %v894 = vmul.f32 %v862, %v890
      %v895 = vmul.f32 %v863, %v891
      %v896 = vmul.f32 %v864, %v892
      %v898 = vlaneseq
      %v899 = vshrl.u32 %v898, 7
      %v900 = vsub.s32 0, %v899
      %v901 = vrot.slane %v842, %v900
      %v903 = vmul.f32 %v893, %v901
      %v904 = vmul.f32 %v894, %v901
      %v905 = vmul.f32 %v895, %v901
      %v906 = vmul.f32 %v896, %v901
      %v908 = vlaneseq
      %v909 = vshrl.u32 %v908, 7
      %v910 = vsub.s32 0, %v909
      %v911 = vrot.slane %v843, %v910
      %v913 = vadd.f32 %v903, %v911
      %v914 = vadd.f32 %v904, %v911
      %v915 = vadd.f32 %v905, %v911
      %v916 = vadd.f32 %v906, %v911
      %v917 = vld [vmem:[%s6] sm:$0x1]
      %v918 = vrot.slane %v913, 7
      %v919 = vrot.slane %v914, 7
      %v920 = vrot.slane %v915, 7
      %v921 = vrot.slane %v916, 7
      %v922 = vsel %vm566, %v920, %v921
      %v923 = vsel %vm566, %v919, %v920
      %v924 = vsel %vm566, %v918, %v919
      %v925 = vsel %vm566, %v921, %v918
      %v926 = vmul.f32 %v925, %v579
      %v927 = vmul.f32 %v924, %v580
      %v928 = vmul.f32 %v923, %v581
      %v929 = vmul.f32 %v922, %v582
      %v930 = vpack.c.bf16 %v927, %v926
      %v931 = vpack.c.bf16 %v929, %v928
      %v932 = vld [vmem:[%s5] sm:$0xf]
      %v933 = vld [vmem:[%s5 + $0x4] sm:$0xf]
      %v934 = vld [vmem:[%s5 + $0x8] sm:$0xf]
      %v935 = vld [vmem:[%s5 + $0xc] sm:$0xf]
      %v936 = vpack.c.bf16 %v914, %v913
      %v937 = vpack.c.bf16 %v916, %v915
      %s938 = scalar_lea.vmem %s5, 16
      %v939 = vld [vmem:[%s938] sm:$0xf]
      %v940 = vld [vmem:[%s938 + $0x4] sm:$0xf]
      %v941 = vld [vmem:[%s938 + $0x8] sm:$0xf]
      %v942 = vld [vmem:[%s938 + $0xc] sm:$0xf]
      %v947 = vunpack.c.l.b16 %v939
      %v948 = vunpack.c.l.b16 %v940
      %v949 = vunpack.c.l.b16 %v941
      %v950 = vunpack.c.l.b16 %v942
      %v951 = vpack.c.b16 %v948, %v947
      %v952 = vpack.c.b16 %v950, %v949
      %v956 = vsel %vm817, %v936, 0
      %v959 = vsel %vm817, %v937, 0
      %961 = vmatprep.subr.bf16.mxu0 0
      %962 = vmatpush1.bf16.msra.mxu0 %v951
      %963 = vmatprep.subr.bf16.mxu0 0
      %964 = vmatpush1.bf16.msra.mxu0 %v952
      %965 = vmatprep.subr.bf16.mxu0 0
      %966 = vmatpush1.bf16.msra.mxu0 0
      %967 = vmatprep.subr.bf16.mxu0 0
      %968 = vmatpush1.bf16.msra.mxu0 0
      %969 = vmatprep.subr.bf16.mxu0 0
      %970 = vmatpush1.bf16.msra.mxu0 0
      %971 = vmatprep.subr.bf16.mxu0 0
      %972 = vmatpush1.bf16.msra.mxu0 0
      %973 = vmatprep.subr.bf16.mxu0 0
      %974 = vmatpush1.bf16.msra.mxu0 0
      %975 = vmatprep.subr.bf16.mxu0 0
      %976 = vmatpush1.bf16.msra.mxu0 0
      %977 = vmatprep.subr.bf16.mxu0 0
      %978 = vmatpush1.bf16.msra.mxu0 0
      %979 = vmatprep.subr.bf16.mxu0 0
      %980 = vmatpush1.bf16.msra.mxu0 0
      %981 = vmatprep.subr.bf16.mxu0 0
      %982 = vmatpush1.bf16.msra.mxu0 0
      %983 = vmatprep.subr.bf16.mxu0 0
      %984 = vmatpush1.bf16.msra.mxu0 0
      %985 = vmatprep.subr.bf16.mxu0 0
      %986 = vmatpush1.bf16.msra.mxu0 0
      %987 = vmatprep.subr.bf16.mxu0 0
      %988 = vmatpush1.bf16.msra.mxu0 0
      %989 = vmatprep.subr.bf16.mxu0 0
      %990 = vmatpush1.bf16.msra.mxu0 0
      %991 = vmatprep.subr.bf16.mxu0 0
      %992 = vmatpush1.bf16.msra.mxu0 0
      %993 = vmatprep.mubr.bf16.mxu0 0
      %994 = vmatmul.mubr.bf16.gmra.mrb[0].mxu0 %v956
      %v995 = vpop.f32.mrb[0].mxu0
      %v996 = vadd.f32 0.0, %v995
      %v997 = vpop.f32.mrb[0].mxu0
      %v998 = vpop.f32.mrb[0].mxu0
      %v999 = vadd.f32 0.0, %v998
      %v1000 = vpop.f32.mrb[0].mxu0
      %1001 = vmatprep.mubr.bf16.mxu0 0
      %1002 = vmatmul.mubr.bf16.gmra.mrb[0].mxu0 %v959
      %v1003 = vpop.f32.mrb[0].mxu0
      %v1004 = vadd.f32 0.0, %v1003
      %v1005 = vpop.f32.mrb[0].mxu0
      %v1006 = vpop.f32.mrb[0].mxu0
      %v1007 = vadd.f32 0.0, %v1006
      %v1008 = vpop.f32.mrb[0].mxu0
      %1009 = vdwg.mxu0
      %v1014 = vunpack.c.l.b16 %v932
      %v1015 = vunpack.c.l.b16 %v933
      %v1016 = vunpack.c.l.b16 %v934
      %v1017 = vunpack.c.l.b16 %v935
      %v1018 = vpack.c.b16 %v1015, %v1014
      %v1019 = vpack.c.b16 %v1017, %v1016
      %v1023 = vsel %vm817, %v930, 0
      %v1026 = vsel %vm817, %v931, 0
      %1028 = vmatprep.subr.bf16.mxu0 0
      %1029 = vmatpush1.bf16.msra.mxu0 %v1018
      %1030 = vmatprep.subr.bf16.mxu0 0
      %1031 = vmatpush1.bf16.msra.mxu0 %v1019
      %1032 = vmatprep.subr.bf16.mxu0 0
      %1033 = vmatpush1.bf16.msra.mxu0 0
      %1034 = vmatprep.subr.bf16.mxu0 0
      %1035 = vmatpush1.bf16.msra.mxu0 0
      %1036 = vmatprep.subr.bf16.mxu0 0
      %1037 = vmatpush1.bf16.msra.mxu0 0
      %1038 = vmatprep.subr.bf16.mxu0 0
      %1039 = vmatpush1.bf16.msra.mxu0 0
      %1040 = vmatprep.subr.bf16.mxu0 0
      %1041 = vmatpush1.bf16.msra.mxu0 0
      %1042 = vmatprep.subr.bf16.mxu0 0
      %1043 = vmatpush1.bf16.msra.mxu0 0
      %1044 = vmatprep.subr.bf16.mxu0 0
      %1045 = vmatpush1.bf16.msra.mxu0 0
      %1046 = vmatprep.subr.bf16.mxu0 0
      %1047 = vmatpush1.bf16.msra.mxu0 0
      %1048 = vmatprep.subr.bf16.mxu0 0
      %1049 = vmatpush1.bf16.msra.mxu0 0
      %1050 = vmatprep.subr.bf16.mxu0 0
      %1051 = vmatpush1.bf16.msra.mxu0 0
      %1052 = vmatprep.subr.bf16.mxu0 0
      %1053 = vmatpush1.bf16.msra.mxu0 0
      %1054 = vmatprep.subr.bf16.mxu0 0
      %1055 = vmatpush1.bf16.msra.mxu0 0
      %1056 = vmatprep.subr.bf16.mxu0 0
      %1057 = vmatpush1.bf16.msra.mxu0 0
      %1058 = vmatprep.subr.bf16.mxu0 0
      %1059 = vmatpush1.bf16.msra.mxu0 0
      %1060 = vmatprep.mubr.bf16.mxu0 0
      %1061 = vmatmul.mubr.bf16.gmra.mrb[0].mxu0 %v1023
      %v1062 = vpop.f32.mrb[0].mxu0
      %v1063 = vadd.f32 %v996, %v1062
      %v1064 = vpop.f32.mrb[0].mxu0
      %v1065 = vpop.f32.mrb[0].mxu0
      %v1066 = vadd.f32 %v999, %v1065
      %v1067 = vpop.f32.mrb[0].mxu0
      %1068 = vmatprep.mubr.bf16.mxu0 0
      %1069 = vmatmul.mubr.bf16.gmra.mrb[0].mxu0 %v1026
      %v1070 = vpop.f32.mrb[0].mxu0
      %v1071 = vadd.f32 %v1004, %v1070
      %v1072 = vpop.f32.mrb[0].mxu0
      %v1073 = vpop.f32.mrb[0].mxu0
      %v1074 = vadd.f32 %v1007, %v1073
      %v1075 = vpop.f32.mrb[0].mxu0
      %1076 = vdwg.mxu0
      %v1077 = vrot.slane %v913, 1
      %v1078 = vrot.slane %v914, 1
      %v1079 = vrot.slane %v915, 1
      %v1080 = vrot.slane %v916, 1
      %v1081 = vsel %vm716, %v1079, %v1080
      %v1082 = vsel %vm716, %v1078, %v1079
      %v1083 = vsel %vm716, %v1077, %v1078
      %v1084 = vsel %vm716, %v1080, %v1077
      %v1085 = vmul.f32 %v1083, %v729
      %v1086 = vmul.f32 %v1082, %v730
      %v1087 = vmul.f32 %v1081, %v731
      %v1088 = vmul.f32 %v1084, %v732
      %v1089 = vpack.c.bf16 %v1086, %v1085
      %v1090 = vpack.c.bf16 %v1088, %v1087
      %s1091 = scalar_lea.vmem %s5, 32
      %v1092 = vld [vmem:[%s1091] sm:$0xf]
      %v1093 = vld [vmem:[%s1091 + $0x4] sm:$0xf]
      %v1094 = vld [vmem:[%s1091 + $0x8] sm:$0xf]
      %v1095 = vld [vmem:[%s1091 + $0xc] sm:$0xf]
      %v1100 = vunpack.c.l.b16 %v1092
      %v1101 = vunpack.c.l.b16 %v1093
      %v1102 = vunpack.c.l.b16 %v1094
      %v1103 = vunpack.c.l.b16 %v1095
      %v1104 = vpack.c.b16 %v1101, %v1100
      %v1105 = vpack.c.b16 %v1103, %v1102
      %v1109 = vsel %vm817, %v1089, 0
      %v1112 = vsel %vm817, %v1090, 0
      %1114 = vmatprep.subr.bf16.mxu0 0
      %1115 = vmatpush1.bf16.msra.mxu0 %v1104
      %1116 = vmatprep.subr.bf16.mxu0 0
      %1117 = vmatpush1.bf16.msra.mxu0 %v1105
      %1118 = vmatprep.subr.bf16.mxu0 0
      %1119 = vmatpush1.bf16.msra.mxu0 0
      %1120 = vmatprep.subr.bf16.mxu0 0
      %1121 = vmatpush1.bf16.msra.mxu0 0
      %1122 = vmatprep.subr.bf16.mxu0 0
      %1123 = vmatpush1.bf16.msra.mxu0 0
      %1124 = vmatprep.subr.bf16.mxu0 0
      %1125 = vmatpush1.bf16.msra.mxu0 0
      %1126 = vmatprep.subr.bf16.mxu0 0
      %1127 = vmatpush1.bf16.msra.mxu0 0
      %1128 = vmatprep.subr.bf16.mxu0 0
      %1129 = vmatpush1.bf16.msra.mxu0 0
      %1130 = vmatprep.subr.bf16.mxu0 0
      %1131 = vmatpush1.bf16.msra.mxu0 0
      %1132 = vmatprep.subr.bf16.mxu0 0
      %1133 = vmatpush1.bf16.msra.mxu0 0
      %1134 = vmatprep.subr.bf16.mxu0 0
      %1135 = vmatpush1.bf16.msra.mxu0 0
      %1136 = vmatprep.subr.bf16.mxu0 0
      %1137 = vmatpush1.bf16.msra.mxu0 0
      %1138 = vmatprep.subr.bf16.mxu0 0
      %1139 = vmatpush1.bf16.msra.mxu0 0
      %1140 = vmatprep.subr.bf16.mxu0 0
      %1141 = vmatpush1.bf16.msra.mxu0 0
      %1142 = vmatprep.subr.bf16.mxu0 0
      %1143 = vmatpush1.bf16.msra.mxu0 0
      %1144 = vmatprep.subr.bf16.mxu0 0
      %1145 = vmatpush1.bf16.msra.mxu0 0
      %1146 = vmatprep.mubr.bf16.mxu0 0
      %1147 = vmatmul.mubr.bf16.gmra.mrb[0].mxu0 %v1109
      %v1148 = vpop.f32.mrb[0].mxu0
      %v1149 = vadd.f32 0.0, %v1148
      %v1150 = vpop.f32.mrb[0].mxu0
      %v1151 = vpop.f32.mrb[0].mxu0
      %v1152 = vadd.f32 0.0, %v1151
      %v1153 = vpop.f32.mrb[0].mxu0
      %1154 = vmatprep.mubr.bf16.mxu0 0
      %1155 = vmatmul.mubr.bf16.gmra.mrb[0].mxu0 %v1112
      %v1156 = vpop.f32.mrb[0].mxu0
      %v1157 = vadd.f32 0.0, %v1156
      %v1158 = vpop.f32.mrb[0].mxu0
      %v1159 = vpop.f32.mrb[0].mxu0
      %v1160 = vadd.f32 0.0, %v1159
      %v1161 = vpop.f32.mrb[0].mxu0
      %1162 = vdwg.mxu0
      %v1163 = vadd.f32 %v1063, %v1149
      %v1164 = vadd.f32 %v1066, %v1152
      %v1165 = vadd.f32 %v1071, %v1157
      %v1166 = vadd.f32 %v1074, %v1160
      %v1168 = vlaneseq
      %v1169 = vshrl.u32 %v1168, 7
      %v1170 = vsub.s32 0, %v1169
      %v1171 = vrot.slane %v917, %v1170
      %v1173 = vadd.f32 %v1163, %v1171
      %v1174 = vadd.f32 %v1164, %v1171
      %v1175 = vadd.f32 %v1165, %v1171
      %v1176 = vadd.f32 %v1166, %v1171
      %vm1177 = vcmp.ge.f32.partialorder %v1173, 0.0
      %vm1178 = vcmp.ge.f32.partialorder %v1174, 0.0
      %vm1179 = vcmp.ge.f32.partialorder %v1175, 0.0
      %vm1180 = vcmp.ge.f32.partialorder %v1176, 0.0
      %v1181 = vmul.f32 %v1173, 0.2
      %v1182 = vmul.f32 %v1174, 0.2
      %v1183 = vmul.f32 %v1175, 0.2
      %v1184 = vmul.f32 %v1176, 0.2
      %v1185 = vsel %vm1177, %v1173, %v1181
      %v1186 = vsel %vm1178, %v1174, %v1182
      %v1187 = vsel %vm1179, %v1175, %v1183
      %v1188 = vsel %vm1180, %v1176, %v1184
      %v1189 = vld [vmem:[%s8] sm:$0x1]
      %v1190 = vpack.c.bf16 %v1186, %v1185
      %v1191 = vpack.c.bf16 %v1188, %v1187
      %v1192 = vld [vmem:[%s7] sm:$0xf]
      %v1193 = vld [vmem:[%s7 + $0x4] sm:$0xf]
      %v1194 = vld [vmem:[%s7 + $0x8] sm:$0xf]
      %v1195 = vld [vmem:[%s7 + $0xc] sm:$0xf]
      %v1196 = vld [vmem:[%s7 + $0x10] sm:$0xf]
      %v1197 = vld [vmem:[%s7 + $0x14] sm:$0xf]
      %v1198 = vld [vmem:[%s7 + $0x18] sm:$0xf]
      %v1199 = vld [vmem:[%s7 + $0x1c] sm:$0xf]
      %v1201 = vlaneseq
      %v1202 = vshrl.u32 %v1201, 7
      %v1203 = vsub.s32 0, %v1202
      %v1204 = vrot.slane %v1189, %v1203
      %v1214 = vunpack.c.l.b16 %v1192
      %v1215 = vunpack.c.l.b16 %v1193
      %v1216 = vunpack.c.l.b16 %v1194
      %v1217 = vunpack.c.l.b16 %v1195
      %v1218 = vunpack.c.l.b16 %v1196
      %v1219 = vunpack.c.l.b16 %v1197
      %v1220 = vunpack.c.l.b16 %v1198
      %v1221 = vunpack.c.l.b16 %v1199
      %v1222 = vpack.c.b16 %v1215, %v1214
      %v1223 = vpack.c.b16 %v1217, %v1216
      %v1224 = vpack.c.b16 %v1219, %v1218
      %v1225 = vpack.c.b16 %v1221, %v1220
      %vm1230 = vcmask 523264
      %v1232 = vsel %vm1230, %v1190, 0
      %v1235 = vsel %vm1230, %v1191, 0
      %1237 = vmatprep.subr.bf16.mxu0 0
      %1238 = vmatpush1.bf16.msra.mxu0 %v1222
      %1239 = vmatprep.subr.bf16.mxu0 0
      %1240 = vmatpush1.bf16.msra.mxu0 %v1223
      %1241 = vmatprep.subr.bf16.mxu0 0
      %1242 = vmatpush1.bf16.msra.mxu0 %v1224
      %1243 = vmatprep.subr.bf16.mxu0 0
      %1244 = vmatpush1.bf16.msra.mxu0 %v1225
      %1245 = vmatprep.subr.bf16.mxu0 0
      %1246 = vmatpush1.bf16.msra.mxu0 0
      %1247 = vmatprep.subr.bf16.mxu0 0
      %1248 = vmatpush1.bf16.msra.mxu0 0
      %1249 = vmatprep.subr.bf16.mxu0 0
      %1250 = vmatpush1.bf16.msra.mxu0 0
      %1251 = vmatprep.subr.bf16.mxu0 0
      %1252 = vmatpush1.bf16.msra.mxu0 0
      %1253 = vmatprep.subr.bf16.mxu0 0
      %1254 = vmatpush1.bf16.msra.mxu0 0
      %1255 = vmatprep.subr.bf16.mxu0 0
      %1256 = vmatpush1.bf16.msra.mxu0 0
      %1257 = vmatprep.subr.bf16.mxu0 0
      %1258 = vmatpush1.bf16.msra.mxu0 0
      %1259 = vmatprep.subr.bf16.mxu0 0
      %1260 = vmatpush1.bf16.msra.mxu0 0
      %1261 = vmatprep.subr.bf16.mxu0 0
      %1262 = vmatpush1.bf16.msra.mxu0 0
      %1263 = vmatprep.subr.bf16.mxu0 0
      %1264 = vmatpush1.bf16.msra.mxu0 0
      %1265 = vmatprep.subr.bf16.mxu0 0
      %1266 = vmatpush1.bf16.msra.mxu0 0
      %1267 = vmatprep.subr.bf16.mxu0 0
      %1268 = vmatpush1.bf16.msra.mxu0 0
      %1269 = vmatprep.mubr.bf16.mxu0 0
      %1270 = vmatmul.mubr.bf16.gmra.mrb[0].mxu0 %v1232
      %v1271 = vpop.f32.mrb[0].mxu0
      %v1272 = vadd.f32 %v1204, %v1271
      %v1273 = vpop.f32.mrb[0].mxu0
      %v1274 = vpop.f32.mrb[0].mxu0
      %v1275 = vadd.f32 %v1204, %v1274
      %v1276 = vpop.f32.mrb[0].mxu0
      %1277 = vmatprep.mubr.bf16.mxu0 0
      %1278 = vmatmul.mubr.bf16.gmra.mrb[0].mxu0 %v1235
      %v1279 = vpop.f32.mrb[0].mxu0
      %v1280 = vadd.f32 %v1204, %v1279
      %v1281 = vpop.f32.mrb[0].mxu0
      %v1282 = vpop.f32.mrb[0].mxu0
      %v1283 = vadd.f32 %v1204, %v1282
      %v1284 = vpop.f32.mrb[0].mxu0
      %1285 = vdwg.mxu0
      %v1286 = vadd.f32 %v809, %v1272
      %v1287 = vadd.f32 %v810, %v1275
      %v1288 = vadd.f32 %v811, %v1280
      %v1289 = vadd.f32 %v812, %v1283
      %v1290 = vmul.f32 %v1286, %v838
      %v1291 = vmul.f32 %v1287, %v839
      %v1292 = vmul.f32 %v1288, %v840
      %v1293 = vmul.f32 %v1289, %v841
      %s1294 = scalar_lea.vmem %s3, 1
      %v1295 = vld [vmem:[%s1294] sm:$0x1]
      %s1296 = scalar_lea.vmem %s4, 1
      %v1297 = vld [vmem:[%s1296] sm:$0x1]
      %v1298 = vsel %vm817, %v1290, 0.0
      %1299 = vadd.xlane.f32.xlu0 %v1298
      %v1300 = vpop.xlane.xlu0 %1299
      %v1301 = vsel %vm817, %v1291, 0.0
      %1302 = vadd.xlane.f32.xlu0 %v1301
      %v1303 = vpop.xlane.xlu0 %1302
      %v1304 = vsel %vm817, %v1292, 0.0
      %1305 = vadd.xlane.f32.xlu0 %v1304
      %v1306 = vpop.xlane.xlu0 %1305
      %v1307 = vsel %vm817, %v1293, 0.0
      %1308 = vadd.xlane.f32.xlu0 %v1307
      %v1309 = vpop.xlane.xlu0 %1308
      %v1310 = vmul.f32 %v1300, %v856
      %v1311 = vmul.f32 %v1303, %v856
      %v1312 = vmul.f32 %v1306, %v856
      %v1313 = vmul.f32 %v1309, %v856
      %v1314 = vsub.f32 %v1290, %v1310
      %v1315 = vsub.f32 %v1291, %v1311
      %v1316 = vsub.f32 %v1292, %v1312
      %v1317 = vsub.f32 %v1293, %v1313
      %v1318 = vmul.f32 %v1314, %v1314
      %v1319 = vmul.f32 %v1315, %v1315
      %v1320 = vmul.f32 %v1316, %v1316
      %v1321 = vmul.f32 %v1317, %v1317
      %v1322 = vsel %vm817, %v1318, 0.0
      %1323 = vadd.xlane.f32.xlu0 %v1322
      %v1324 = vpop.xlane.xlu0 %1323
      %v1325 = vsel %vm817, %v1319, 0.0
      %1326 = vadd.xlane.f32.xlu0 %v1325
      %v1327 = vpop.xlane.xlu0 %1326
      %v1328 = vsel %vm817, %v1320, 0.0
      %1329 = vadd.xlane.f32.xlu0 %v1328
      %v1330 = vpop.xlane.xlu0 %1329
      %v1331 = vsel %vm817, %v1321, 0.0
      %1332 = vadd.xlane.f32.xlu0 %v1331
      %v1333 = vpop.xlane.xlu0 %1332
      %v1334 = vmul.f32 %v1324, %v856
      %v1335 = vmul.f32 %v1327, %v856
      %v1336 = vmul.f32 %v1330, %v856
      %v1337 = vmul.f32 %v1333, %v856
      %v1338 = vadd.f32 %v1334, 1e-05
      %v1339 = vadd.f32 %v1335, 1e-05
      %v1340 = vadd.f32 %v1336, 1e-05
      %v1341 = vadd.f32 %v1337, 1e-05
      %v1342 = vrsqrt.pop %v1338
      %v1343 = vrsqrt.pop %v1339
      %v1344 = vrsqrt.pop %v1340
      %v1345 = vrsqrt.pop %v1341
      %v1346 = vmul.f32 %v1314, %v1342
      %v1347 = vmul.f32 %v1315, %v1343
      %v1348 = vmul.f32 %v1316, %v1344
      %v1349 = vmul.f32 %v1317, %v1345
      %v1351 = vlaneseq
      %v1352 = vshrl.u32 %v1351, 7
      %v1353 = vsub.s32 0, %v1352
      %v1354 = vrot.slane %v1295, %v1353
      %v1356 = vmul.f32 %v1346, %v1354
      %v1357 = vmul.f32 %v1347, %v1354
      %v1358 = vmul.f32 %v1348, %v1354
      %v1359 = vmul.f32 %v1349, %v1354
      %v1361 = vlaneseq
      %v1362 = vshrl.u32 %v1361, 7
      %v1363 = vsub.s32 0, %v1362
      %v1364 = vrot.slane %v1297, %v1363
      %v1366 = vadd.f32 %v1356, %v1364
      %v1367 = vadd.f32 %v1357, %v1364
      %v1368 = vadd.f32 %v1358, %v1364
      %v1369 = vadd.f32 %v1359, %v1364
      %s1370 = scalar_lea.vmem %s6, 1
      %v1371 = vld [vmem:[%s1370] sm:$0x1]
      %v1372 = vrot.slane %v1366, 7
      %v1373 = vrot.slane %v1367, 7
      %v1374 = vrot.slane %v1368, 7
      %v1375 = vrot.slane %v1369, 7
      %v1376 = vsel %vm566, %v1374, %v1375
      %v1377 = vsel %vm566, %v1373, %v1374
      %v1378 = vsel %vm566, %v1372, %v1373
      %v1379 = vsel %vm566, %v1375, %v1372
      %v1380 = vmul.f32 %v1379, %v579
      %v1381 = vmul.f32 %v1378, %v580
      %v1382 = vmul.f32 %v1377, %v581
      %v1383 = vmul.f32 %v1376, %v582
      %v1384 = vpack.c.bf16 %v1381, %v1380
      %v1385 = vpack.c.bf16 %v1383, %v1382
      %s1386 = scalar_lea.vmem %s5, 48
      %v1387 = vld [vmem:[%s1386] sm:$0xf]
      %v1388 = vld [vmem:[%s1386 + $0x4] sm:$0xf]
      %v1389 = vld [vmem:[%s1386 + $0x8] sm:$0xf]
      %v1390 = vld [vmem:[%s1386 + $0xc] sm:$0xf]
      %v1391 = vpack.c.bf16 %v1367, %v1366
      %v1392 = vpack.c.bf16 %v1369, %v1368
      %s1393 = scalar_lea.vmem %s5, 64
      %v1394 = vld [vmem:[%s1393] sm:$0xf]
      %v1395 = vld [vmem:[%s1393 + $0x4] sm:$0xf]
      %v1396 = vld [vmem:[%s1393 + $0x8] sm:$0xf]
      %v1397 = vld [vmem:[%s1393 + $0xc] sm:$0xf]
      %v1402 = vunpack.c.l.b16 %v1394
      %v1403 = vunpack.c.l.b16 %v1395
      %v1404 = vunpack.c.l.b16 %v1396
      %v1405 = vunpack.c.l.b16 %v1397
      %v1406 = vpack.c.b16 %v1403, %v1402
      %v1407 = vpack.c.b16 %v1405, %v1404
      %v1411 = vsel %vm817, %v1391, 0
      %v1414 = vsel %vm817, %v1392, 0
      %1416 = vmatprep.subr.bf16.mxu0 0
      %1417 = vmatpush1.bf16.msra.mxu0 %v1406
      %1418 = vmatprep.subr.bf16.mxu0 0
      %1419 = vmatpush1.bf16.msra.mxu0 %v1407
      %1420 = vmatprep.subr.bf16.mxu0 0
      %1421 = vmatpush1.bf16.msra.mxu0 0
      %1422 = vmatprep.subr.bf16.mxu0 0
      %1423 = vmatpush1.bf16.msra.mxu0 0
      %1424 = vmatprep.subr.bf16.mxu0 0
      %1425 = vmatpush1.bf16.msra.mxu0 0
      %1426 = vmatprep.subr.bf16.mxu0 0
      %1427 = vmatpush1.bf16.msra.mxu0 0
      %1428 = vmatprep.subr.bf16.mxu0 0
      %1429 = vmatpush1.bf16.msra.mxu0 0
      %1430 = vmatprep.subr.bf16.mxu0 0
      %1431 = vmatpush1.bf16.msra.mxu0 0
      %1432 = vmatprep.subr.bf16.mxu0 0
      %1433 = vmatpush1.bf16.msra.mxu0 0
      %1434 = vmatprep.subr.bf16.mxu0 0
      %1435 = vmatpush1.bf16.msra.mxu0 0
      %1436 = vmatprep.subr.bf16.mxu0 0
      %1437 = vmatpush1.bf16.msra.mxu0 0
      %1438 = vmatprep.subr.bf16.mxu0 0
      %1439 = vmatpush1.bf16.msra.mxu0 0
      %1440 = vmatprep.subr.bf16.mxu0 0
      %1441 = vmatpush1.bf16.msra.mxu0 0
      %1442 = vmatprep.subr.bf16.mxu0 0
      %1443 = vmatpush1.bf16.msra.mxu0 0
      %1444 = vmatprep.subr.bf16.mxu0 0
      %1445 = vmatpush1.bf16.msra.mxu0 0
      %1446 = vmatprep.subr.bf16.mxu0 0
      %1447 = vmatpush1.bf16.msra.mxu0 0
      %1448 = vmatprep.mubr.bf16.mxu0 0
      %1449 = vmatmul.mubr.bf16.gmra.mrb[0].mxu0 %v1411
      %v1450 = vpop.f32.mrb[0].mxu0
      %v1451 = vadd.f32 0.0, %v1450
      %v1452 = vpop.f32.mrb[0].mxu0
      %v1453 = vpop.f32.mrb[0].mxu0
      %v1454 = vadd.f32 0.0, %v1453
      %v1455 = vpop.f32.mrb[0].mxu0
      %1456 = vmatprep.mubr.bf16.mxu0 0
      %1457 = vmatmul.mubr.bf16.gmra.mrb[0].mxu0 %v1414
      %v1458 = vpop.f32.mrb[0].mxu0
      %v1459 = vadd.f32 0.0, %v1458
      %v1460 = vpop.f32.mrb[0].mxu0
      %v1461 = vpop.f32.mrb[0].mxu0
      %v1462 = vadd.f32 0.0, %v1461
      %v1463 = vpop.f32.mrb[0].mxu0
      %1464 = vdwg.mxu0
      %v1469 = vunpack.c.l.b16 %v1387
      %v1470 = vunpack.c.l.b16 %v1388
      %v1471 = vunpack.c.l.b16 %v1389
      %v1472 = vunpack.c.l.b16 %v1390
      %v1473 = vpack.c.b16 %v1470, %v1469
      %v1474 = vpack.c.b16 %v1472, %v1471
      %v1478 = vsel %vm817, %v1384, 0
      %v1481 = vsel %vm817, %v1385, 0
      %1483 = vmatprep.subr.bf16.mxu0 0
      %1484 = vmatpush1.bf16.msra.mxu0 %v1473
      %1485 = vmatprep.subr.bf16.mxu0 0
      %1486 = vmatpush1.bf16.msra.mxu0 %v1474
      %1487 = vmatprep.subr.bf16.mxu0 0
      %1488 = vmatpush1.bf16.msra.mxu0 0
      %1489 = vmatprep.subr.bf16.mxu0 0
      %1490 = vmatpush1.bf16.msra.mxu0 0
      %1491 = vmatprep.subr.bf16.mxu0 0
      %1492 = vmatpush1.bf16.msra.mxu0 0
      %1493 = vmatprep.subr.bf16.mxu0 0
      %1494 = vmatpush1.bf16.msra.mxu0 0
      %1495 = vmatprep.subr.bf16.mxu0 0
      %1496 = vmatpush1.bf16.msra.mxu0 0
      %1497 = vmatprep.subr.bf16.mxu0 0
      %1498 = vmatpush1.bf16.msra.mxu0 0
      %1499 = vmatprep.subr.bf16.mxu0 0
      %1500 = vmatpush1.bf16.msra.mxu0 0
      %1501 = vmatprep.subr.bf16.mxu0 0
      %1502 = vmatpush1.bf16.msra.mxu0 0
      %1503 = vmatprep.subr.bf16.mxu0 0
      %1504 = vmatpush1.bf16.msra.mxu0 0
      %1505 = vmatprep.subr.bf16.mxu0 0
      %1506 = vmatpush1.bf16.msra.mxu0 0
      %1507 = vmatprep.subr.bf16.mxu0 0
      %1508 = vmatpush1.bf16.msra.mxu0 0
      %1509 = vmatprep.subr.bf16.mxu0 0
      %1510 = vmatpush1.bf16.msra.mxu0 0
      %1511 = vmatprep.subr.bf16.mxu0 0
      %1512 = vmatpush1.bf16.msra.mxu0 0
      %1513 = vmatprep.subr.bf16.mxu0 0
      %1514 = vmatpush1.bf16.msra.mxu0 0
      %1515 = vmatprep.mubr.bf16.mxu0 0
      %1516 = vmatmul.mubr.bf16.gmra.mrb[0].mxu0 %v1478
      %v1517 = vpop.f32.mrb[0].mxu0
      %v1518 = vadd.f32 %v1451, %v1517
      %v1519 = vpop.f32.mrb[0].mxu0
      %v1520 = vpop.f32.mrb[0].mxu0
      %v1521 = vadd.f32 %v1454, %v1520
      %v1522 = vpop.f32.mrb[0].mxu0
      %1523 = vmatprep.mubr.bf16.mxu0 0
      %1524 = vmatmul.mubr.bf16.gmra.mrb[0].mxu0 %v1481
      %v1525 = vpop.f32.mrb[0].mxu0
      %v1526 = vadd.f32 %v1459, %v1525
      %v1527 = vpop.f32.mrb[0].mxu0
      %v1528 = vpop.f32.mrb[0].mxu0
      %v1529 = vadd.f32 %v1462, %v1528
      %v1530 = vpop.f32.mrb[0].mxu0
      %1531 = vdwg.mxu0
      %v1532 = vrot.slane %v1366, 1
      %v1533 = vrot.slane %v1367, 1
      %v1534 = vrot.slane %v1368, 1
      %v1535 = vrot.slane %v1369, 1
      %v1536 = vsel %vm716, %v1534, %v1535
      %v1537 = vsel %vm716, %v1533, %v1534
      %v1538 = vsel %vm716, %v1532, %v1533
      %v1539 = vsel %vm716, %v1535, %v1532
      %v1540 = vmul.f32 %v1538, %v729
      %v1541 = vmul.f32 %v1537, %v730
      %v1542 = vmul.f32 %v1536, %v731
      %v1543 = vmul.f32 %v1539, %v732
      %v1544 = vpack.c.bf16 %v1541, %v1540
      %v1545 = vpack.c.bf16 %v1543, %v1542
      %s1546 = scalar_lea.vmem %s5, 80
      %v1547 = vld [vmem:[%s1546] sm:$0xf]
      %v1548 = vld [vmem:[%s1546 + $0x4] sm:$0xf]
      %v1549 = vld [vmem:[%s1546 + $0x8] sm:$0xf]
      %v1550 = vld [vmem:[%s1546 + $0xc] sm:$0xf]
      %v1555 = vunpack.c.l.b16 %v1547
      %v1556 = vunpack.c.l.b16 %v1548
      %v1557 = vunpack.c.l.b16 %v1549
      %v1558 = vunpack.c.l.b16 %v1550
      %v1559 = vpack.c.b16 %v1556, %v1555
      %v1560 = vpack.c.b16 %v1558, %v1557
      %v1564 = vsel %vm817, %v1544, 0
      %v1567 = vsel %vm817, %v1545, 0
      %1569 = vmatprep.subr.bf16.mxu0 0
      %1570 = vmatpush1.bf16.msra.mxu0 %v1559
      %1571 = vmatprep.subr.bf16.mxu0 0
      %1572 = vmatpush1.bf16.msra.mxu0 %v1560
      %1573 = vmatprep.subr.bf16.mxu0 0
      %1574 = vmatpush1.bf16.msra.mxu0 0
      %1575 = vmatprep.subr.bf16.mxu0 0
      %1576 = vmatpush1.bf16.msra.mxu0 0
      %1577 = vmatprep.subr.bf16.mxu0 0
      %1578 = vmatpush1.bf16.msra.mxu0 0
      %1579 = vmatprep.subr.bf16.mxu0 0
      %1580 = vmatpush1.bf16.msra.mxu0 0
      %1581 = vmatprep.subr.bf16.mxu0 0
      %1582 = vmatpush1.bf16.msra.mxu0 0
      %1583 = vmatprep.subr.bf16.mxu0 0
      %1584 = vmatpush1.bf16.msra.mxu0 0
      %1585 = vmatprep.subr.bf16.mxu0 0
      %1586 = vmatpush1.bf16.msra.mxu0 0
      %1587 = vmatprep.subr.bf16.mxu0 0
      %1588 = vmatpush1.bf16.msra.mxu0 0
      %1589 = vmatprep.subr.bf16.mxu0 0
      %1590 = vmatpush1.bf16.msra.mxu0 0
      %1591 = vmatprep.subr.bf16.mxu0 0
      %1592 = vmatpush1.bf16.msra.mxu0 0
      %1593 = vmatprep.subr.bf16.mxu0 0
      %1594 = vmatpush1.bf16.msra.mxu0 0
      %1595 = vmatprep.subr.bf16.mxu0 0
      %1596 = vmatpush1.bf16.msra.mxu0 0
      %1597 = vmatprep.subr.bf16.mxu0 0
      %1598 = vmatpush1.bf16.msra.mxu0 0
      %1599 = vmatprep.subr.bf16.mxu0 0
      %1600 = vmatpush1.bf16.msra.mxu0 0
      %1601 = vmatprep.mubr.bf16.mxu0 0
      %1602 = vmatmul.mubr.bf16.gmra.mrb[0].mxu0 %v1564
      %v1603 = vpop.f32.mrb[0].mxu0
      %v1604 = vadd.f32 0.0, %v1603
      %v1605 = vpop.f32.mrb[0].mxu0
      %v1606 = vpop.f32.mrb[0].mxu0
      %v1607 = vadd.f32 0.0, %v1606
      %v1608 = vpop.f32.mrb[0].mxu0
      %1609 = vmatprep.mubr.bf16.mxu0 0
      %1610 = vmatmul.mubr.bf16.gmra.mrb[0].mxu0 %v1567
      %v1611 = vpop.f32.mrb[0].mxu0
      %v1612 = vadd.f32 0.0, %v1611
      %v1613 = vpop.f32.mrb[0].mxu0
      %v1614 = vpop.f32.mrb[0].mxu0
      %v1615 = vadd.f32 0.0, %v1614
      %v1616 = vpop.f32.mrb[0].mxu0
      %1617 = vdwg.mxu0
      %v1618 = vadd.f32 %v1518, %v1604
      %v1619 = vadd.f32 %v1521, %v1607
      %v1620 = vadd.f32 %v1526, %v1612
      %v1621 = vadd.f32 %v1529, %v1615
      %v1623 = vlaneseq
      %v1624 = vshrl.u32 %v1623, 7
      %v1625 = vsub.s32 0, %v1624
      %v1626 = vrot.slane %v1371, %v1625
      %v1628 = vadd.f32 %v1618, %v1626
      %v1629 = vadd.f32 %v1619, %v1626
      %v1630 = vadd.f32 %v1620, %v1626
      %v1631 = vadd.f32 %v1621, %v1626
      %vm1632 = vcmp.ge.f32.partialorder %v1628, 0.0
      %vm1633 = vcmp.ge.f32.partialorder %v1629, 0.0
      %vm1634 = vcmp.ge.f32.partialorder %v1630, 0.0
      %vm1635 = vcmp.ge.f32.partialorder %v1631, 0.0
      %v1636 = vmul.f32 %v1628, 0.2
      %v1637 = vmul.f32 %v1629, 0.2
      %v1638 = vmul.f32 %v1630, 0.2
      %v1639 = vmul.f32 %v1631, 0.2
      %v1640 = vsel %vm1632, %v1628, %v1636
      %v1641 = vsel %vm1633, %v1629, %v1637
      %v1642 = vsel %vm1634, %v1630, %v1638
      %v1643 = vsel %vm1635, %v1631, %v1639
      %s1644 = scalar_lea.vmem %s8, 1
      %v1645 = vld [vmem:[%s1644] sm:$0x1]
      %v1646 = vpack.c.bf16 %v1641, %v1640
      %v1647 = vpack.c.bf16 %v1643, %v1642
      %s1648 = scalar_lea.vmem %s7, 32
      %v1649 = vld [vmem:[%s1648] sm:$0xf]
      %v1650 = vld [vmem:[%s1648 + $0x4] sm:$0xf]
      %v1651 = vld [vmem:[%s1648 + $0x8] sm:$0xf]
      %v1652 = vld [vmem:[%s1648 + $0xc] sm:$0xf]
      %v1653 = vld [vmem:[%s1648 + $0x10] sm:$0xf]
      %v1654 = vld [vmem:[%s1648 + $0x14] sm:$0xf]
      %v1655 = vld [vmem:[%s1648 + $0x18] sm:$0xf]
      %v1656 = vld [vmem:[%s1648 + $0x1c] sm:$0xf]
      %v1658 = vlaneseq
      %v1659 = vshrl.u32 %v1658, 7
      %v1660 = vsub.s32 0, %v1659
      %v1661 = vrot.slane %v1645, %v1660
      %v1671 = vunpack.c.l.b16 %v1649
      %v1672 = vunpack.c.l.b16 %v1650
      %v1673 = vunpack.c.l.b16 %v1651
      %v1674 = vunpack.c.l.b16 %v1652
      %v1675 = vunpack.c.l.b16 %v1653
      %v1676 = vunpack.c.l.b16 %v1654
      %v1677 = vunpack.c.l.b16 %v1655
      %v1678 = vunpack.c.l.b16 %v1656
      %v1679 = vpack.c.b16 %v1672, %v1671
      %v1680 = vpack.c.b16 %v1674, %v1673
      %v1681 = vpack.c.b16 %v1676, %v1675
      %v1682 = vpack.c.b16 %v1678, %v1677
      %v1688 = vsel %vm1230, %v1646, 0
      %v1691 = vsel %vm1230, %v1647, 0
      %1693 = vmatprep.subr.bf16.mxu0 0
      %1694 = vmatpush1.bf16.msra.mxu0 %v1679
      %1695 = vmatprep.subr.bf16.mxu0 0
      %1696 = vmatpush1.bf16.msra.mxu0 %v1680
      %1697 = vmatprep.subr.bf16.mxu0 0
      %1698 = vmatpush1.bf16.msra.mxu0 %v1681
      %1699 = vmatprep.subr.bf16.mxu0 0
      %1700 = vmatpush1.bf16.msra.mxu0 %v1682
      %1701 = vmatprep.subr.bf16.mxu0 0
      %1702 = vmatpush1.bf16.msra.mxu0 0
      %1703 = vmatprep.subr.bf16.mxu0 0
      %1704 = vmatpush1.bf16.msra.mxu0 0
      %1705 = vmatprep.subr.bf16.mxu0 0
      %1706 = vmatpush1.bf16.msra.mxu0 0
      %1707 = vmatprep.subr.bf16.mxu0 0
      %1708 = vmatpush1.bf16.msra.mxu0 0
      %1709 = vmatprep.subr.bf16.mxu0 0
      %1710 = vmatpush1.bf16.msra.mxu0 0
      %1711 = vmatprep.subr.bf16.mxu0 0
      %1712 = vmatpush1.bf16.msra.mxu0 0
      %1713 = vmatprep.subr.bf16.mxu0 0
      %1714 = vmatpush1.bf16.msra.mxu0 0
      %1715 = vmatprep.subr.bf16.mxu0 0
      %1716 = vmatpush1.bf16.msra.mxu0 0
      %1717 = vmatprep.subr.bf16.mxu0 0
      %1718 = vmatpush1.bf16.msra.mxu0 0
      %1719 = vmatprep.subr.bf16.mxu0 0
      %1720 = vmatpush1.bf16.msra.mxu0 0
      %1721 = vmatprep.subr.bf16.mxu0 0
      %1722 = vmatpush1.bf16.msra.mxu0 0
      %1723 = vmatprep.subr.bf16.mxu0 0
      %1724 = vmatpush1.bf16.msra.mxu0 0
      %1725 = vmatprep.mubr.bf16.mxu0 0
      %1726 = vmatmul.mubr.bf16.gmra.mrb[0].mxu0 %v1688
      %v1727 = vpop.f32.mrb[0].mxu0
      %v1728 = vadd.f32 %v1661, %v1727
      %v1729 = vpop.f32.mrb[0].mxu0
      %v1730 = vpop.f32.mrb[0].mxu0
      %v1731 = vadd.f32 %v1661, %v1730
      %v1732 = vpop.f32.mrb[0].mxu0
      %1733 = vmatprep.mubr.bf16.mxu0 0
      %1734 = vmatmul.mubr.bf16.gmra.mrb[0].mxu0 %v1691
      %v1735 = vpop.f32.mrb[0].mxu0
      %v1736 = vadd.f32 %v1661, %v1735
      %v1737 = vpop.f32.mrb[0].mxu0
      %v1738 = vpop.f32.mrb[0].mxu0
      %v1739 = vadd.f32 %v1661, %v1738
      %v1740 = vpop.f32.mrb[0].mxu0
      %1741 = vdwg.mxu0
      %v1742 = vadd.f32 %v1290, %v1728
      %v1743 = vadd.f32 %v1291, %v1731
      %v1744 = vadd.f32 %v1292, %v1736
      %v1745 = vadd.f32 %v1293, %v1739
      %v1746 = vmul.f32 %v1742, %v838
      %v1747 = vmul.f32 %v1743, %v839
      %v1748 = vmul.f32 %v1744, %v840
      %v1749 = vmul.f32 %v1745, %v841
      %v1750 = vand.u32 2147483647, %v1746
      %v1751 = vand.u32 2147483647, %v1747
      %v1752 = vand.u32 2147483647, %v1748
      %v1753 = vand.u32 2147483647, %v1749
      %v1754 = vsel %vm817, %v1750, 0.0
      %1755 = vadd.xlane.f32.xlu0 %v1754
      %v1756 = vpop.xlane.xlu0 %1755
      %v1757 = vsel %vm817, %v1751, 0.0
      %1758 = vadd.xlane.f32.xlu0 %v1757
      %v1759 = vpop.xlane.xlu0 %1758
      %v1760 = vsel %vm817, %v1752, 0.0
      %1761 = vadd.xlane.f32.xlu0 %v1760
      %v1762 = vpop.xlane.xlu0 %1761
      %v1763 = vsel %vm817, %v1753, 0.0
      %1764 = vadd.xlane.f32.xlu0 %v1763
      %v1765 = vpop.xlane.xlu0 %1764
      %vm1766 = vcmp.gt.f32.partialorder %v1756, 0.0
      %vm1767 = vcmp.gt.f32.partialorder %v1759, 0.0
      %vm1768 = vcmp.gt.f32.partialorder %v1762, 0.0
      %vm1769 = vcmp.gt.f32.partialorder %v1765, 0.0
      %v1770 = vsel %vm1766, 1, 0
      %v1771 = vsel %vm1767, 1, 0
      %v1772 = vsel %vm1768, 1, 0
      %v1773 = vsel %vm1769, 1, 0
      %v1774 = vcvt.s32.f32 %v1770
      %v1775 = vcvt.s32.f32 %v1771
      %v1776 = vcvt.s32.f32 %v1772
      %v1777 = vcvt.s32.f32 %v1773
      %s1778 = scalar_lea.vmem %s3, 2
      %v1779 = vld [vmem:[%s1778] sm:$0x1]
      %s1780 = scalar_lea.vmem %s4, 2
      %v1781 = vld [vmem:[%s1780] sm:$0x1]
      %v1782 = vsel %vm817, %v1746, 0.0
      %1783 = vadd.xlane.f32.xlu0 %v1782
      %v1784 = vpop.xlane.xlu0 %1783
      %v1785 = vsel %vm817, %v1747, 0.0
      %1786 = vadd.xlane.f32.xlu0 %v1785
      %v1787 = vpop.xlane.xlu0 %1786
      %v1788 = vsel %vm817, %v1748, 0.0
      %1789 = vadd.xlane.f32.xlu0 %v1788
      %v1790 = vpop.xlane.xlu0 %1789
      %v1791 = vsel %vm817, %v1749, 0.0
      %1792 = vadd.xlane.f32.xlu0 %v1791
      %v1793 = vpop.xlane.xlu0 %1792
      %v1794 = vmul.f32 %v1784, %v856
      %v1795 = vmul.f32 %v1787, %v856
      %v1796 = vmul.f32 %v1790, %v856
      %v1797 = vmul.f32 %v1793, %v856
      %v1798 = vsub.f32 %v1746, %v1794
      %v1799 = vsub.f32 %v1747, %v1795
      %v1800 = vsub.f32 %v1748, %v1796
      %v1801 = vsub.f32 %v1749, %v1797
      %v1802 = vmul.f32 %v1798, %v1798
      %v1803 = vmul.f32 %v1799, %v1799
      %v1804 = vmul.f32 %v1800, %v1800
      %v1805 = vmul.f32 %v1801, %v1801
      %v1806 = vsel %vm817, %v1802, 0.0
      %1807 = vadd.xlane.f32.xlu0 %v1806
      %v1808 = vpop.xlane.xlu0 %1807
      %v1809 = vsel %vm817, %v1803, 0.0
      %1810 = vadd.xlane.f32.xlu0 %v1809
      %v1811 = vpop.xlane.xlu0 %1810
      %v1812 = vsel %vm817, %v1804, 0.0
      %1813 = vadd.xlane.f32.xlu0 %v1812
      %v1814 = vpop.xlane.xlu0 %1813
      %v1815 = vsel %vm817, %v1805, 0.0
      %1816 = vadd.xlane.f32.xlu0 %v1815
      %v1817 = vpop.xlane.xlu0 %1816
      %v1818 = vmul.f32 %v1808, %v856
      %v1819 = vmul.f32 %v1811, %v856
      %v1820 = vmul.f32 %v1814, %v856
      %v1821 = vmul.f32 %v1817, %v856
      %v1822 = vadd.f32 %v1818, 1e-05
      %v1823 = vadd.f32 %v1819, 1e-05
      %v1824 = vadd.f32 %v1820, 1e-05
      %v1825 = vadd.f32 %v1821, 1e-05
      %v1826 = vrsqrt.pop %v1822
      %v1827 = vrsqrt.pop %v1823
      %v1828 = vrsqrt.pop %v1824
      %v1829 = vrsqrt.pop %v1825
      %v1830 = vmul.f32 %v1798, %v1826
      %v1831 = vmul.f32 %v1799, %v1827
      %v1832 = vmul.f32 %v1800, %v1828
      %v1833 = vmul.f32 %v1801, %v1829
      %v1835 = vlaneseq
      %v1836 = vshrl.u32 %v1835, 7
      %v1837 = vsub.s32 0, %v1836
      %v1838 = vrot.slane %v1779, %v1837
      %v1840 = vmul.f32 %v1830, %v1838
      %v1841 = vmul.f32 %v1831, %v1838
      %v1842 = vmul.f32 %v1832, %v1838
      %v1843 = vmul.f32 %v1833, %v1838
      %v1845 = vlaneseq
      %v1846 = vshrl.u32 %v1845, 7
      %v1847 = vsub.s32 0, %v1846
      %v1848 = vrot.slane %v1781, %v1847
      %v1850 = vadd.f32 %v1840, %v1848
      %v1851 = vadd.f32 %v1841, %v1848
      %v1852 = vadd.f32 %v1842, %v1848
      %v1853 = vadd.f32 %v1843, %v1848
      %s1854 = scalar_lea.vmem %s6, 2
      %v1855 = vld [vmem:[%s1854] sm:$0x1]
      %v1856 = vrot.slane %v1850, 7
      %v1857 = vrot.slane %v1851, 7
      %v1858 = vrot.slane %v1852, 7
      %v1859 = vrot.slane %v1853, 7
      %v1860 = vsel %vm566, %v1858, %v1859
      %v1861 = vsel %vm566, %v1857, %v1858
      %v1862 = vsel %vm566, %v1856, %v1857
      %v1863 = vsel %vm566, %v1859, %v1856
      %v1864 = vmul.f32 %v1863, %v579
      %v1865 = vmul.f32 %v1862, %v580
      %v1866 = vmul.f32 %v1861, %v581
      %v1867 = vmul.f32 %v1860, %v582
      %v1868 = vpack.c.bf16 %v1865, %v1864
      %v1869 = vpack.c.bf16 %v1867, %v1866
      %s1870 = scalar_lea.vmem %s5, 96
      %v1871 = vld [vmem:[%s1870] sm:$0xf]
      %v1872 = vld [vmem:[%s1870 + $0x4] sm:$0xf]
      %v1873 = vld [vmem:[%s1870 + $0x8] sm:$0xf]
      %v1874 = vld [vmem:[%s1870 + $0xc] sm:$0xf]
      %v1875 = vpack.c.bf16 %v1851, %v1850
      %v1876 = vpack.c.bf16 %v1853, %v1852
      %s1877 = scalar_lea.vmem %s5, 112
      %v1878 = vld [vmem:[%s1877] sm:$0xf]
      %v1879 = vld [vmem:[%s1877 + $0x4] sm:$0xf]
      %v1880 = vld [vmem:[%s1877 + $0x8] sm:$0xf]
      %v1881 = vld [vmem:[%s1877 + $0xc] sm:$0xf]
      %v1886 = vunpack.c.l.b16 %v1878
      %v1887 = vunpack.c.l.b16 %v1879
      %v1888 = vunpack.c.l.b16 %v1880
      %v1889 = vunpack.c.l.b16 %v1881
      %v1890 = vpack.c.b16 %v1887, %v1886
      %v1891 = vpack.c.b16 %v1889, %v1888
      %v1895 = vsel %vm817, %v1875, 0
      %v1898 = vsel %vm817, %v1876, 0
      %1900 = vmatprep.subr.bf16.mxu0 0
      %1901 = vmatpush1.bf16.msra.mxu0 %v1890
      %1902 = vmatprep.subr.bf16.mxu0 0
      %1903 = vmatpush1.bf16.msra.mxu0 %v1891
      %1904 = vmatprep.subr.bf16.mxu0 0
      %1905 = vmatpush1.bf16.msra.mxu0 0
      %1906 = vmatprep.subr.bf16.mxu0 0
      %1907 = vmatpush1.bf16.msra.mxu0 0
      %1908 = vmatprep.subr.bf16.mxu0 0
      %1909 = vmatpush1.bf16.msra.mxu0 0
      %1910 = vmatprep.subr.bf16.mxu0 0
      %1911 = vmatpush1.bf16.msra.mxu0 0
      %1912 = vmatprep.subr.bf16.mxu0 0
      %1913 = vmatpush1.bf16.msra.mxu0 0
      %1914 = vmatprep.subr.bf16.mxu0 0
      %1915 = vmatpush1.bf16.msra.mxu0 0
      %1916 = vmatprep.subr.bf16.mxu0 0
      %1917 = vmatpush1.bf16.msra.mxu0 0
      %1918 = vmatprep.subr.bf16.mxu0 0
      %1919 = vmatpush1.bf16.msra.mxu0 0
      %1920 = vmatprep.subr.bf16.mxu0 0
      %1921 = vmatpush1.bf16.msra.mxu0 0
      %1922 = vmatprep.subr.bf16.mxu0 0
      %1923 = vmatpush1.bf16.msra.mxu0 0
      %1924 = vmatprep.subr.bf16.mxu0 0
      %1925 = vmatpush1.bf16.msra.mxu0 0
      %1926 = vmatprep.subr.bf16.mxu0 0
      %1927 = vmatpush1.bf16.msra.mxu0 0
      %1928 = vmatprep.subr.bf16.mxu0 0
      %1929 = vmatpush1.bf16.msra.mxu0 0
      %1930 = vmatprep.subr.bf16.mxu0 0
      %1931 = vmatpush1.bf16.msra.mxu0 0
      %1932 = vmatprep.mubr.bf16.mxu0 0
      %1933 = vmatmul.mubr.bf16.gmra.mrb[0].mxu0 %v1895
      %v1934 = vpop.f32.mrb[0].mxu0
      %v1935 = vadd.f32 0.0, %v1934
      %v1936 = vpop.f32.mrb[0].mxu0
      %v1937 = vpop.f32.mrb[0].mxu0
      %v1938 = vadd.f32 0.0, %v1937
      %v1939 = vpop.f32.mrb[0].mxu0
      %1940 = vmatprep.mubr.bf16.mxu0 0
      %1941 = vmatmul.mubr.bf16.gmra.mrb[0].mxu0 %v1898
      %v1942 = vpop.f32.mrb[0].mxu0
      %v1943 = vadd.f32 0.0, %v1942
      %v1944 = vpop.f32.mrb[0].mxu0
      %v1945 = vpop.f32.mrb[0].mxu0
      %v1946 = vadd.f32 0.0, %v1945
      %v1947 = vpop.f32.mrb[0].mxu0
      %1948 = vdwg.mxu0
      %v1953 = vunpack.c.l.b16 %v1871
      %v1954 = vunpack.c.l.b16 %v1872
      %v1955 = vunpack.c.l.b16 %v1873
      %v1956 = vunpack.c.l.b16 %v1874
      %v1957 = vpack.c.b16 %v1954, %v1953
      %v1958 = vpack.c.b16 %v1956, %v1955
      %v1962 = vsel %vm817, %v1868, 0
      %v1965 = vsel %vm817, %v1869, 0
      %1967 = vmatprep.subr.bf16.mxu0 0
      %1968 = vmatpush1.bf16.msra.mxu0 %v1957
      %1969 = vmatprep.subr.bf16.mxu0 0
      %1970 = vmatpush1.bf16.msra.mxu0 %v1958
      %1971 = vmatprep.subr.bf16.mxu0 0
      %1972 = vmatpush1.bf16.msra.mxu0 0
      %1973 = vmatprep.subr.bf16.mxu0 0
      %1974 = vmatpush1.bf16.msra.mxu0 0
      %1975 = vmatprep.subr.bf16.mxu0 0
      %1976 = vmatpush1.bf16.msra.mxu0 0
      %1977 = vmatprep.subr.bf16.mxu0 0
      %1978 = vmatpush1.bf16.msra.mxu0 0
      %1979 = vmatprep.subr.bf16.mxu0 0
      %1980 = vmatpush1.bf16.msra.mxu0 0
      %1981 = vmatprep.subr.bf16.mxu0 0
      %1982 = vmatpush1.bf16.msra.mxu0 0
      %1983 = vmatprep.subr.bf16.mxu0 0
      %1984 = vmatpush1.bf16.msra.mxu0 0
      %1985 = vmatprep.subr.bf16.mxu0 0
      %1986 = vmatpush1.bf16.msra.mxu0 0
      %1987 = vmatprep.subr.bf16.mxu0 0
      %1988 = vmatpush1.bf16.msra.mxu0 0
      %1989 = vmatprep.subr.bf16.mxu0 0
      %1990 = vmatpush1.bf16.msra.mxu0 0
      %1991 = vmatprep.subr.bf16.mxu0 0
      %1992 = vmatpush1.bf16.msra.mxu0 0
      %1993 = vmatprep.subr.bf16.mxu0 0
      %1994 = vmatpush1.bf16.msra.mxu0 0
      %1995 = vmatprep.subr.bf16.mxu0 0
      %1996 = vmatpush1.bf16.msra.mxu0 0
      %1997 = vmatprep.subr.bf16.mxu0 0
      %1998 = vmatpush1.bf16.msra.mxu0 0
      %1999 = vmatprep.mubr.bf16.mxu0 0
      %2000 = vmatmul.mubr.bf16.gmra.mrb[0].mxu0 %v1962
      %v2001 = vpop.f32.mrb[0].mxu0
      %v2002 = vadd.f32 %v1935, %v2001
      %v2003 = vpop.f32.mrb[0].mxu0
      %v2004 = vpop.f32.mrb[0].mxu0
      %v2005 = vadd.f32 %v1938, %v2004
      %v2006 = vpop.f32.mrb[0].mxu0
      %2007 = vmatprep.mubr.bf16.mxu0 0
      %2008 = vmatmul.mubr.bf16.gmra.mrb[0].mxu0 %v1965
      %v2009 = vpop.f32.mrb[0].mxu0
      %v2010 = vadd.f32 %v1943, %v2009
      %v2011 = vpop.f32.mrb[0].mxu0
      %v2012 = vpop.f32.mrb[0].mxu0
      %v2013 = vadd.f32 %v1946, %v2012
      %v2014 = vpop.f32.mrb[0].mxu0
      %2015 = vdwg.mxu0
      %v2016 = vrot.slane %v1850, 1
      %v2017 = vrot.slane %v1851, 1
      %v2018 = vrot.slane %v1852, 1
      %v2019 = vrot.slane %v1853, 1
      %v2020 = vsel %vm716, %v2018, %v2019
      %v2021 = vsel %vm716, %v2017, %v2018
      %v2022 = vsel %vm716, %v2016, %v2017
      %v2023 = vsel %vm716, %v2019, %v2016
      %v2024 = vmul.f32 %v2022, %v729
      %v2025 = vmul.f32 %v2021, %v730
      %v2026 = vmul.f32 %v2020, %v731
      %v2027 = vmul.f32 %v2023, %v732
      %v2028 = vpack.c.bf16 %v2025, %v2024
      %v2029 = vpack.c.bf16 %v2027, %v2026
      %s2030 = scalar_lea.vmem %s5, 128
      %v2031 = vld [vmem:[%s2030] sm:$0xf]
      %v2032 = vld [vmem:[%s2030 + $0x4] sm:$0xf]
      %v2033 = vld [vmem:[%s2030 + $0x8] sm:$0xf]
      %v2034 = vld [vmem:[%s2030 + $0xc] sm:$0xf]
      %v2039 = vunpack.c.l.b16 %v2031
      %v2040 = vunpack.c.l.b16 %v2032
      %v2041 = vunpack.c.l.b16 %v2033
      %v2042 = vunpack.c.l.b16 %v2034
      %v2043 = vpack.c.b16 %v2040, %v2039
      %v2044 = vpack.c.b16 %v2042, %v2041
      %v2048 = vsel %vm817, %v2028, 0
      %v2051 = vsel %vm817, %v2029, 0
      %2053 = vmatprep.subr.bf16.mxu0 0
      %2054 = vmatpush1.bf16.msra.mxu0 %v2043
      %2055 = vmatprep.subr.bf16.mxu0 0
      %2056 = vmatpush1.bf16.msra.mxu0 %v2044
      %2057 = vmatprep.subr.bf16.mxu0 0
      %2058 = vmatpush1.bf16.msra.mxu0 0
      %2059 = vmatprep.subr.bf16.mxu0 0
      %2060 = vmatpush1.bf16.msra.mxu0 0
      %2061 = vmatprep.subr.bf16.mxu0 0
      %2062 = vmatpush1.bf16.msra.mxu0 0
      %2063 = vmatprep.subr.bf16.mxu0 0
      %2064 = vmatpush1.bf16.msra.mxu0 0
      %2065 = vmatprep.subr.bf16.mxu0 0
      %2066 = vmatpush1.bf16.msra.mxu0 0
      %2067 = vmatprep.subr.bf16.mxu0 0
      %2068 = vmatpush1.bf16.msra.mxu0 0
      %2069 = vmatprep.subr.bf16.mxu0 0
      %2070 = vmatpush1.bf16.msra.mxu0 0
      %2071 = vmatprep.subr.bf16.mxu0 0
      %2072 = vmatpush1.bf16.msra.mxu0 0
      %2073 = vmatprep.subr.bf16.mxu0 0
      %2074 = vmatpush1.bf16.msra.mxu0 0
      %2075 = vmatprep.subr.bf16.mxu0 0
      %2076 = vmatpush1.bf16.msra.mxu0 0
      %2077 = vmatprep.subr.bf16.mxu0 0
      %2078 = vmatpush1.bf16.msra.mxu0 0
      %2079 = vmatprep.subr.bf16.mxu0 0
      %2080 = vmatpush1.bf16.msra.mxu0 0
      %2081 = vmatprep.subr.bf16.mxu0 0
      %2082 = vmatpush1.bf16.msra.mxu0 0
      %2083 = vmatprep.subr.bf16.mxu0 0
      %2084 = vmatpush1.bf16.msra.mxu0 0
      %2085 = vmatprep.mubr.bf16.mxu0 0
      %2086 = vmatmul.mubr.bf16.gmra.mrb[0].mxu0 %v2048
      %v2087 = vpop.f32.mrb[0].mxu0
      %v2088 = vadd.f32 0.0, %v2087
      %v2089 = vpop.f32.mrb[0].mxu0
      %v2090 = vpop.f32.mrb[0].mxu0
      %v2091 = vadd.f32 0.0, %v2090
      %v2092 = vpop.f32.mrb[0].mxu0
      %2093 = vmatprep.mubr.bf16.mxu0 0
      %2094 = vmatmul.mubr.bf16.gmra.mrb[0].mxu0 %v2051
      %v2095 = vpop.f32.mrb[0].mxu0
      %v2096 = vadd.f32 0.0, %v2095
      %v2097 = vpop.f32.mrb[0].mxu0
      %v2098 = vpop.f32.mrb[0].mxu0
      %v2099 = vadd.f32 0.0, %v2098
      %v2100 = vpop.f32.mrb[0].mxu0
      %2101 = vdwg.mxu0
      %v2102 = vadd.f32 %v2002, %v2088
      %v2103 = vadd.f32 %v2005, %v2091
      %v2104 = vadd.f32 %v2010, %v2096
      %v2105 = vadd.f32 %v2013, %v2099
      %v2107 = vlaneseq
      %v2108 = vshrl.u32 %v2107, 7
      %v2109 = vsub.s32 0, %v2108
      %v2110 = vrot.slane %v1855, %v2109
      %v2112 = vadd.f32 %v2102, %v2110
      %v2113 = vadd.f32 %v2103, %v2110
      %v2114 = vadd.f32 %v2104, %v2110
      %v2115 = vadd.f32 %v2105, %v2110
      %vm2116 = vcmp.ge.f32.partialorder %v2112, 0.0
      %vm2117 = vcmp.ge.f32.partialorder %v2113, 0.0
      %vm2118 = vcmp.ge.f32.partialorder %v2114, 0.0
      %vm2119 = vcmp.ge.f32.partialorder %v2115, 0.0
      %v2120 = vmul.f32 %v2112, 0.2
      %v2121 = vmul.f32 %v2113, 0.2
      %v2122 = vmul.f32 %v2114, 0.2
      %v2123 = vmul.f32 %v2115, 0.2
      %v2124 = vsel %vm2116, %v2112, %v2120
      %v2125 = vsel %vm2117, %v2113, %v2121
      %v2126 = vsel %vm2118, %v2114, %v2122
      %v2127 = vsel %vm2119, %v2115, %v2123
      %s2128 = scalar_lea.vmem %s8, 2
      %v2129 = vld [vmem:[%s2128] sm:$0x1]
      %v2130 = vpack.c.bf16 %v2125, %v2124
      %v2131 = vpack.c.bf16 %v2127, %v2126
      %s2132 = scalar_lea.vmem %s7, 64
      %v2133 = vld [vmem:[%s2132] sm:$0xf]
      %v2134 = vld [vmem:[%s2132 + $0x4] sm:$0xf]
      %v2135 = vld [vmem:[%s2132 + $0x8] sm:$0xf]
      %v2136 = vld [vmem:[%s2132 + $0xc] sm:$0xf]
      %v2137 = vld [vmem:[%s2132 + $0x10] sm:$0xf]
      %v2138 = vld [vmem:[%s2132 + $0x14] sm:$0xf]
      %v2139 = vld [vmem:[%s2132 + $0x18] sm:$0xf]
      %v2140 = vld [vmem:[%s2132 + $0x1c] sm:$0xf]
      %v2142 = vlaneseq
      %v2143 = vshrl.u32 %v2142, 7
      %v2144 = vsub.s32 0, %v2143
      %v2145 = vrot.slane %v2129, %v2144
      %v2155 = vunpack.c.l.b16 %v2133
      %v2156 = vunpack.c.l.b16 %v2134
      %v2157 = vunpack.c.l.b16 %v2135
      %v2158 = vunpack.c.l.b16 %v2136
      %v2159 = vunpack.c.l.b16 %v2137
      %v2160 = vunpack.c.l.b16 %v2138
      %v2161 = vunpack.c.l.b16 %v2139
      %v2162 = vunpack.c.l.b16 %v2140
      %v2163 = vpack.c.b16 %v2156, %v2155
      %v2164 = vpack.c.b16 %v2158, %v2157
      %v2165 = vpack.c.b16 %v2160, %v2159
      %v2166 = vpack.c.b16 %v2162, %v2161
      %v2172 = vsel %vm1230, %v2130, 0
      %v2175 = vsel %vm1230, %v2131, 0
      %2177 = vmatprep.subr.bf16.mxu0 0
      %2178 = vmatpush1.bf16.msra.mxu0 %v2163
      %2179 = vmatprep.subr.bf16.mxu0 0
      %2180 = vmatpush1.bf16.msra.mxu0 %v2164
      %2181 = vmatprep.subr.bf16.mxu0 0
      %2182 = vmatpush1.bf16.msra.mxu0 %v2165
      %2183 = vmatprep.subr.bf16.mxu0 0
      %2184 = vmatpush1.bf16.msra.mxu0 %v2166
      %2185 = vmatprep.subr.bf16.mxu0 0
      %2186 = vmatpush1.bf16.msra.mxu0 0
      %2187 = vmatprep.subr.bf16.mxu0 0
      %2188 = vmatpush1.bf16.msra.mxu0 0
      %2189 = vmatprep.subr.bf16.mxu0 0
      %2190 = vmatpush1.bf16.msra.mxu0 0
      %2191 = vmatprep.subr.bf16.mxu0 0
      %2192 = vmatpush1.bf16.msra.mxu0 0
      %2193 = vmatprep.subr.bf16.mxu0 0
      %2194 = vmatpush1.bf16.msra.mxu0 0
      %2195 = vmatprep.subr.bf16.mxu0 0
      %2196 = vmatpush1.bf16.msra.mxu0 0
      %2197 = vmatprep.subr.bf16.mxu0 0
      %2198 = vmatpush1.bf16.msra.mxu0 0
      %2199 = vmatprep.subr.bf16.mxu0 0
      %2200 = vmatpush1.bf16.msra.mxu0 0
      %2201 = vmatprep.subr.bf16.mxu0 0
      %2202 = vmatpush1.bf16.msra.mxu0 0
      %2203 = vmatprep.subr.bf16.mxu0 0
      %2204 = vmatpush1.bf16.msra.mxu0 0
      %2205 = vmatprep.subr.bf16.mxu0 0
      %2206 = vmatpush1.bf16.msra.mxu0 0
      %2207 = vmatprep.subr.bf16.mxu0 0
      %2208 = vmatpush1.bf16.msra.mxu0 0
      %2209 = vmatprep.mubr.bf16.mxu0 0
      %2210 = vmatmul.mubr.bf16.gmra.mrb[0].mxu0 %v2172
      %v2211 = vpop.f32.mrb[0].mxu0
      %v2212 = vadd.f32 %v2145, %v2211
      %v2213 = vpop.f32.mrb[0].mxu0
      %v2214 = vpop.f32.mrb[0].mxu0
      %v2215 = vadd.f32 %v2145, %v2214
      %v2216 = vpop.f32.mrb[0].mxu0
      %2217 = vmatprep.mubr.bf16.mxu0 0
      %2218 = vmatmul.mubr.bf16.gmra.mrb[0].mxu0 %v2175
      %v2219 = vpop.f32.mrb[0].mxu0
      %v2220 = vadd.f32 %v2145, %v2219
      %v2221 = vpop.f32.mrb[0].mxu0
      %v2222 = vpop.f32.mrb[0].mxu0
      %v2223 = vadd.f32 %v2145, %v2222
      %v2224 = vpop.f32.mrb[0].mxu0
      %2225 = vdwg.mxu0
      %v2226 = vadd.f32 %v1746, %v2212
      %v2227 = vadd.f32 %v1747, %v2215
      %v2228 = vadd.f32 %v1748, %v2220
      %v2229 = vadd.f32 %v1749, %v2223
      %v2230 = vmul.f32 %v2226, %v1774
      %v2231 = vmul.f32 %v2227, %v1775
      %v2232 = vmul.f32 %v2228, %v1776
      %v2233 = vmul.f32 %v2229, %v1777
      %s2234 = scalar_lea.vmem %s3, 3
      %v2235 = vld [vmem:[%s2234] sm:$0x1]
      %s2236 = scalar_lea.vmem %s4, 3
      %v2237 = vld [vmem:[%s2236] sm:$0x1]
      %v2238 = vsel %vm817, %v2230, 0.0
      %2239 = vadd.xlane.f32.xlu0 %v2238
      %v2240 = vpop.xlane.xlu0 %2239
      %v2241 = vsel %vm817, %v2231, 0.0
      %2242 = vadd.xlane.f32.xlu0 %v2241
      %v2243 = vpop.xlane.xlu0 %2242
      %v2244 = vsel %vm817, %v2232, 0.0
      %2245 = vadd.xlane.f32.xlu0 %v2244
      %v2246 = vpop.xlane.xlu0 %2245
      %v2247 = vsel %vm817, %v2233, 0.0
      %2248 = vadd.xlane.f32.xlu0 %v2247
      %v2249 = vpop.xlane.xlu0 %2248
      %v2250 = vmul.f32 %v2240, %v856
      %v2251 = vmul.f32 %v2243, %v856
      %v2252 = vmul.f32 %v2246, %v856
      %v2253 = vmul.f32 %v2249, %v856
      %v2254 = vsub.f32 %v2230, %v2250
      %v2255 = vsub.f32 %v2231, %v2251
      %v2256 = vsub.f32 %v2232, %v2252
      %v2257 = vsub.f32 %v2233, %v2253
      %v2258 = vmul.f32 %v2254, %v2254
      %v2259 = vmul.f32 %v2255, %v2255
      %v2260 = vmul.f32 %v2256, %v2256
      %v2261 = vmul.f32 %v2257, %v2257
      %v2262 = vsel %vm817, %v2258, 0.0
      %2263 = vadd.xlane.f32.xlu0 %v2262
      %v2264 = vpop.xlane.xlu0 %2263
      %v2265 = vsel %vm817, %v2259, 0.0
      %2266 = vadd.xlane.f32.xlu0 %v2265
      %v2267 = vpop.xlane.xlu0 %2266
      %v2268 = vsel %vm817, %v2260, 0.0
      %2269 = vadd.xlane.f32.xlu0 %v2268
      %v2270 = vpop.xlane.xlu0 %2269
      %v2271 = vsel %vm817, %v2261, 0.0
      %2272 = vadd.xlane.f32.xlu0 %v2271
      %v2273 = vpop.xlane.xlu0 %2272
      %v2274 = vmul.f32 %v2264, %v856
      %v2275 = vmul.f32 %v2267, %v856
      %v2276 = vmul.f32 %v2270, %v856
      %v2277 = vmul.f32 %v2273, %v856
      %v2278 = vadd.f32 %v2274, 1e-05
      %v2279 = vadd.f32 %v2275, 1e-05
      %v2280 = vadd.f32 %v2276, 1e-05
      %v2281 = vadd.f32 %v2277, 1e-05
      %v2282 = vrsqrt.pop %v2278
      %v2283 = vrsqrt.pop %v2279
      %v2284 = vrsqrt.pop %v2280
      %v2285 = vrsqrt.pop %v2281
      %v2286 = vmul.f32 %v2254, %v2282
      %v2287 = vmul.f32 %v2255, %v2283
      %v2288 = vmul.f32 %v2256, %v2284
      %v2289 = vmul.f32 %v2257, %v2285
      %v2291 = vlaneseq
      %v2292 = vshrl.u32 %v2291, 7
      %v2293 = vsub.s32 0, %v2292
      %v2294 = vrot.slane %v2235, %v2293
      %v2296 = vmul.f32 %v2286, %v2294
      %v2297 = vmul.f32 %v2287, %v2294
      %v2298 = vmul.f32 %v2288, %v2294
      %v2299 = vmul.f32 %v2289, %v2294
      %v2301 = vlaneseq
      %v2302 = vshrl.u32 %v2301, 7
      %v2303 = vsub.s32 0, %v2302
      %v2304 = vrot.slane %v2237, %v2303
      %v2306 = vadd.f32 %v2296, %v2304
      %v2307 = vadd.f32 %v2297, %v2304
      %v2308 = vadd.f32 %v2298, %v2304
      %v2309 = vadd.f32 %v2299, %v2304
      %s2310 = scalar_lea.vmem %s6, 3
      %v2311 = vld [vmem:[%s2310] sm:$0x1]
      %v2312 = vrot.slane %v2306, 7
      %v2313 = vrot.slane %v2307, 7
      %v2314 = vrot.slane %v2308, 7
      %v2315 = vrot.slane %v2309, 7
      %v2316 = vsel %vm566, %v2314, %v2315
      %v2317 = vsel %vm566, %v2313, %v2314
      %v2318 = vsel %vm566, %v2312, %v2313
      %v2319 = vsel %vm566, %v2315, %v2312
      %v2320 = vmul.f32 %v2319, %v579
      %v2321 = vmul.f32 %v2318, %v580
      %v2322 = vmul.f32 %v2317, %v581
      %v2323 = vmul.f32 %v2316, %v582
      %v2324 = vpack.c.bf16 %v2321, %v2320
      %v2325 = vpack.c.bf16 %v2323, %v2322
      %s2326 = scalar_lea.vmem %s5, 144
      %v2327 = vld [vmem:[%s2326] sm:$0xf]
      %v2328 = vld [vmem:[%s2326 + $0x4] sm:$0xf]
      %v2329 = vld [vmem:[%s2326 + $0x8] sm:$0xf]
      %v2330 = vld [vmem:[%s2326 + $0xc] sm:$0xf]
      %v2331 = vpack.c.bf16 %v2307, %v2306
      %v2332 = vpack.c.bf16 %v2309, %v2308
      %s2333 = scalar_lea.vmem %s5, 160
      %v2334 = vld [vmem:[%s2333] sm:$0xf]
      %v2335 = vld [vmem:[%s2333 + $0x4] sm:$0xf]
      %v2336 = vld [vmem:[%s2333 + $0x8] sm:$0xf]
      %v2337 = vld [vmem:[%s2333 + $0xc] sm:$0xf]
      %v2342 = vunpack.c.l.b16 %v2334
      %v2343 = vunpack.c.l.b16 %v2335
      %v2344 = vunpack.c.l.b16 %v2336
      %v2345 = vunpack.c.l.b16 %v2337
      %v2346 = vpack.c.b16 %v2343, %v2342
      %v2347 = vpack.c.b16 %v2345, %v2344
      %v2351 = vsel %vm817, %v2331, 0
      %v2354 = vsel %vm817, %v2332, 0
      %2356 = vmatprep.subr.bf16.mxu0 0
      %2357 = vmatpush1.bf16.msra.mxu0 %v2346
      %2358 = vmatprep.subr.bf16.mxu0 0
      %2359 = vmatpush1.bf16.msra.mxu0 %v2347
      %2360 = vmatprep.subr.bf16.mxu0 0
      %2361 = vmatpush1.bf16.msra.mxu0 0
      %2362 = vmatprep.subr.bf16.mxu0 0
      %2363 = vmatpush1.bf16.msra.mxu0 0
      %2364 = vmatprep.subr.bf16.mxu0 0
      %2365 = vmatpush1.bf16.msra.mxu0 0
      %2366 = vmatprep.subr.bf16.mxu0 0
      %2367 = vmatpush1.bf16.msra.mxu0 0
      %2368 = vmatprep.subr.bf16.mxu0 0
      %2369 = vmatpush1.bf16.msra.mxu0 0
      %2370 = vmatprep.subr.bf16.mxu0 0
      %2371 = vmatpush1.bf16.msra.mxu0 0
      %2372 = vmatprep.subr.bf16.mxu0 0
      %2373 = vmatpush1.bf16.msra.mxu0 0
      %2374 = vmatprep.subr.bf16.mxu0 0
      %2375 = vmatpush1.bf16.msra.mxu0 0
      %2376 = vmatprep.subr.bf16.mxu0 0
      %2377 = vmatpush1.bf16.msra.mxu0 0
      %2378 = vmatprep.subr.bf16.mxu0 0
      %2379 = vmatpush1.bf16.msra.mxu0 0
      %2380 = vmatprep.subr.bf16.mxu0 0
      %2381 = vmatpush1.bf16.msra.mxu0 0
      %2382 = vmatprep.subr.bf16.mxu0 0
      %2383 = vmatpush1.bf16.msra.mxu0 0
      %2384 = vmatprep.subr.bf16.mxu0 0
      %2385 = vmatpush1.bf16.msra.mxu0 0
      %2386 = vmatprep.subr.bf16.mxu0 0
      %2387 = vmatpush1.bf16.msra.mxu0 0
      %2388 = vmatprep.mubr.bf16.mxu0 0
      %2389 = vmatmul.mubr.bf16.gmra.mrb[0].mxu0 %v2351
      %v2390 = vpop.f32.mrb[0].mxu0
      %v2391 = vadd.f32 0.0, %v2390
      %v2392 = vpop.f32.mrb[0].mxu0
      %v2393 = vpop.f32.mrb[0].mxu0
      %v2394 = vadd.f32 0.0, %v2393
      %v2395 = vpop.f32.mrb[0].mxu0
      %2396 = vmatprep.mubr.bf16.mxu0 0
      %2397 = vmatmul.mubr.bf16.gmra.mrb[0].mxu0 %v2354
      %v2398 = vpop.f32.mrb[0].mxu0
      %v2399 = vadd.f32 0.0, %v2398
      %v2400 = vpop.f32.mrb[0].mxu0
      %v2401 = vpop.f32.mrb[0].mxu0
      %v2402 = vadd.f32 0.0, %v2401
      %v2403 = vpop.f32.mrb[0].mxu0
      %2404 = vdwg.mxu0
      %v2409 = vunpack.c.l.b16 %v2327
      %v2410 = vunpack.c.l.b16 %v2328
      %v2411 = vunpack.c.l.b16 %v2329
      %v2412 = vunpack.c.l.b16 %v2330
      %v2413 = vpack.c.b16 %v2410, %v2409
      %v2414 = vpack.c.b16 %v2412, %v2411
      %v2418 = vsel %vm817, %v2324, 0
      %v2421 = vsel %vm817, %v2325, 0
      %2423 = vmatprep.subr.bf16.mxu0 0
      %2424 = vmatpush1.bf16.msra.mxu0 %v2413
      %2425 = vmatprep.subr.bf16.mxu0 0
      %2426 = vmatpush1.bf16.msra.mxu0 %v2414
      %2427 = vmatprep.subr.bf16.mxu0 0
      %2428 = vmatpush1.bf16.msra.mxu0 0
      %2429 = vmatprep.subr.bf16.mxu0 0
      %2430 = vmatpush1.bf16.msra.mxu0 0
      %2431 = vmatprep.subr.bf16.mxu0 0
      %2432 = vmatpush1.bf16.msra.mxu0 0
      %2433 = vmatprep.subr.bf16.mxu0 0
      %2434 = vmatpush1.bf16.msra.mxu0 0
      %2435 = vmatprep.subr.bf16.mxu0 0
      %2436 = vmatpush1.bf16.msra.mxu0 0
      %2437 = vmatprep.subr.bf16.mxu0 0
      %2438 = vmatpush1.bf16.msra.mxu0 0
      %2439 = vmatprep.subr.bf16.mxu0 0
      %2440 = vmatpush1.bf16.msra.mxu0 0
      %2441 = vmatprep.subr.bf16.mxu0 0
      %2442 = vmatpush1.bf16.msra.mxu0 0
      %2443 = vmatprep.subr.bf16.mxu0 0
      %2444 = vmatpush1.bf16.msra.mxu0 0
      %2445 = vmatprep.subr.bf16.mxu0 0
      %2446 = vmatpush1.bf16.msra.mxu0 0
      %2447 = vmatprep.subr.bf16.mxu0 0
      %2448 = vmatpush1.bf16.msra.mxu0 0
      %2449 = vmatprep.subr.bf16.mxu0 0
      %2450 = vmatpush1.bf16.msra.mxu0 0
      %2451 = vmatprep.subr.bf16.mxu0 0
      %2452 = vmatpush1.bf16.msra.mxu0 0
      %2453 = vmatprep.subr.bf16.mxu0 0
      %2454 = vmatpush1.bf16.msra.mxu0 0
      %2455 = vmatprep.mubr.bf16.mxu0 0
      %2456 = vmatmul.mubr.bf16.gmra.mrb[0].mxu0 %v2418
      %v2457 = vpop.f32.mrb[0].mxu0
      %v2458 = vadd.f32 %v2391, %v2457
      %v2459 = vpop.f32.mrb[0].mxu0
      %v2460 = vpop.f32.mrb[0].mxu0
      %v2461 = vadd.f32 %v2394, %v2460
      %v2462 = vpop.f32.mrb[0].mxu0
      %2463 = vmatprep.mubr.bf16.mxu0 0
      %2464 = vmatmul.mubr.bf16.gmra.mrb[0].mxu0 %v2421
      %v2465 = vpop.f32.mrb[0].mxu0
      %v2466 = vadd.f32 %v2399, %v2465
      %v2467 = vpop.f32.mrb[0].mxu0
      %v2468 = vpop.f32.mrb[0].mxu0
      %v2469 = vadd.f32 %v2402, %v2468
      %v2470 = vpop.f32.mrb[0].mxu0
      %2471 = vdwg.mxu0
      %v2472 = vrot.slane %v2306, 1
      %v2473 = vrot.slane %v2307, 1
      %v2474 = vrot.slane %v2308, 1
      %v2475 = vrot.slane %v2309, 1
      %v2476 = vsel %vm716, %v2474, %v2475
      %v2477 = vsel %vm716, %v2473, %v2474
      %v2478 = vsel %vm716, %v2472, %v2473
      %v2479 = vsel %vm716, %v2475, %v2472
      %v2480 = vmul.f32 %v2478, %v729
      %v2481 = vmul.f32 %v2477, %v730
      %v2482 = vmul.f32 %v2476, %v731
      %v2483 = vmul.f32 %v2479, %v732
      %v2484 = vpack.c.bf16 %v2481, %v2480
      %v2485 = vpack.c.bf16 %v2483, %v2482
      %s2486 = scalar_lea.vmem %s5, 176
      %v2487 = vld [vmem:[%s2486] sm:$0xf]
      %v2488 = vld [vmem:[%s2486 + $0x4] sm:$0xf]
      %v2489 = vld [vmem:[%s2486 + $0x8] sm:$0xf]
      %v2490 = vld [vmem:[%s2486 + $0xc] sm:$0xf]
      %v2495 = vunpack.c.l.b16 %v2487
      %v2496 = vunpack.c.l.b16 %v2488
      %v2497 = vunpack.c.l.b16 %v2489
      %v2498 = vunpack.c.l.b16 %v2490
      %v2499 = vpack.c.b16 %v2496, %v2495
      %v2500 = vpack.c.b16 %v2498, %v2497
      %v2504 = vsel %vm817, %v2484, 0
      %v2507 = vsel %vm817, %v2485, 0
      %2509 = vmatprep.subr.bf16.mxu0 0
      %2510 = vmatpush1.bf16.msra.mxu0 %v2499
      %2511 = vmatprep.subr.bf16.mxu0 0
      %2512 = vmatpush1.bf16.msra.mxu0 %v2500
      %2513 = vmatprep.subr.bf16.mxu0 0
      %2514 = vmatpush1.bf16.msra.mxu0 0
      %2515 = vmatprep.subr.bf16.mxu0 0
      %2516 = vmatpush1.bf16.msra.mxu0 0
      %2517 = vmatprep.subr.bf16.mxu0 0
      %2518 = vmatpush1.bf16.msra.mxu0 0
      %2519 = vmatprep.subr.bf16.mxu0 0
      %2520 = vmatpush1.bf16.msra.mxu0 0
      %2521 = vmatprep.subr.bf16.mxu0 0
      %2522 = vmatpush1.bf16.msra.mxu0 0
      %2523 = vmatprep.subr.bf16.mxu0 0
      %2524 = vmatpush1.bf16.msra.mxu0 0
      %2525 = vmatprep.subr.bf16.mxu0 0
      %2526 = vmatpush1.bf16.msra.mxu0 0
      %2527 = vmatprep.subr.bf16.mxu0 0
      %2528 = vmatpush1.bf16.msra.mxu0 0
      %2529 = vmatprep.subr.bf16.mxu0 0
      %2530 = vmatpush1.bf16.msra.mxu0 0
      %2531 = vmatprep.subr.bf16.mxu0 0
      %2532 = vmatpush1.bf16.msra.mxu0 0
      %2533 = vmatprep.subr.bf16.mxu0 0
      %2534 = vmatpush1.bf16.msra.mxu0 0
      %2535 = vmatprep.subr.bf16.mxu0 0
      %2536 = vmatpush1.bf16.msra.mxu0 0
      %2537 = vmatprep.subr.bf16.mxu0 0
      %2538 = vmatpush1.bf16.msra.mxu0 0
      %2539 = vmatprep.subr.bf16.mxu0 0
      %2540 = vmatpush1.bf16.msra.mxu0 0
      %2541 = vmatprep.mubr.bf16.mxu0 0
      %2542 = vmatmul.mubr.bf16.gmra.mrb[0].mxu0 %v2504
      %v2543 = vpop.f32.mrb[0].mxu0
      %v2544 = vadd.f32 0.0, %v2543
      %v2545 = vpop.f32.mrb[0].mxu0
      %v2546 = vpop.f32.mrb[0].mxu0
      %v2547 = vadd.f32 0.0, %v2546
      %v2548 = vpop.f32.mrb[0].mxu0
      %2549 = vmatprep.mubr.bf16.mxu0 0
      %2550 = vmatmul.mubr.bf16.gmra.mrb[0].mxu0 %v2507
      %v2551 = vpop.f32.mrb[0].mxu0
      %v2552 = vadd.f32 0.0, %v2551
      %v2553 = vpop.f32.mrb[0].mxu0
      %v2554 = vpop.f32.mrb[0].mxu0
      %v2555 = vadd.f32 0.0, %v2554
      %v2556 = vpop.f32.mrb[0].mxu0
      %2557 = vdwg.mxu0
      %v2558 = vadd.f32 %v2458, %v2544
      %v2559 = vadd.f32 %v2461, %v2547
      %v2560 = vadd.f32 %v2466, %v2552
      %v2561 = vadd.f32 %v2469, %v2555
      %v2563 = vlaneseq
      %v2564 = vshrl.u32 %v2563, 7
      %v2565 = vsub.s32 0, %v2564
      %v2566 = vrot.slane %v2311, %v2565
      %v2568 = vadd.f32 %v2558, %v2566
      %v2569 = vadd.f32 %v2559, %v2566
      %v2570 = vadd.f32 %v2560, %v2566
      %v2571 = vadd.f32 %v2561, %v2566
      %vm2572 = vcmp.ge.f32.partialorder %v2568, 0.0
      %vm2573 = vcmp.ge.f32.partialorder %v2569, 0.0
      %vm2574 = vcmp.ge.f32.partialorder %v2570, 0.0
      %vm2575 = vcmp.ge.f32.partialorder %v2571, 0.0
      %v2576 = vmul.f32 %v2568, 0.2
      %v2577 = vmul.f32 %v2569, 0.2
      %v2578 = vmul.f32 %v2570, 0.2
      %v2579 = vmul.f32 %v2571, 0.2
      %v2580 = vsel %vm2572, %v2568, %v2576
      %v2581 = vsel %vm2573, %v2569, %v2577
      %v2582 = vsel %vm2574, %v2570, %v2578
      %v2583 = vsel %vm2575, %v2571, %v2579
      %s2584 = scalar_lea.vmem %s8, 3
      %v2585 = vld [vmem:[%s2584] sm:$0x1]
      %v2586 = vpack.c.bf16 %v2581, %v2580
      %v2587 = vpack.c.bf16 %v2583, %v2582
      %s2588 = scalar_lea.vmem %s7, 96
      %v2589 = vld [vmem:[%s2588] sm:$0xf]
      %v2590 = vld [vmem:[%s2588 + $0x4] sm:$0xf]
      %v2591 = vld [vmem:[%s2588 + $0x8] sm:$0xf]
      %v2592 = vld [vmem:[%s2588 + $0xc] sm:$0xf]
      %v2593 = vld [vmem:[%s2588 + $0x10] sm:$0xf]
      %v2594 = vld [vmem:[%s2588 + $0x14] sm:$0xf]
      %v2595 = vld [vmem:[%s2588 + $0x18] sm:$0xf]
      %v2596 = vld [vmem:[%s2588 + $0x1c] sm:$0xf]
      %v2598 = vlaneseq
      %v2599 = vshrl.u32 %v2598, 7
      %v2600 = vsub.s32 0, %v2599
      %v2601 = vrot.slane %v2585, %v2600
      %v2611 = vunpack.c.l.b16 %v2589
      %v2612 = vunpack.c.l.b16 %v2590
      %v2613 = vunpack.c.l.b16 %v2591
      %v2614 = vunpack.c.l.b16 %v2592
      %v2615 = vunpack.c.l.b16 %v2593
      %v2616 = vunpack.c.l.b16 %v2594
      %v2617 = vunpack.c.l.b16 %v2595
      %v2618 = vunpack.c.l.b16 %v2596
      %v2619 = vpack.c.b16 %v2612, %v2611
      %v2620 = vpack.c.b16 %v2614, %v2613
      %v2621 = vpack.c.b16 %v2616, %v2615
      %v2622 = vpack.c.b16 %v2618, %v2617
      %v2628 = vsel %vm1230, %v2586, 0
      %v2631 = vsel %vm1230, %v2587, 0
      %2633 = vmatprep.subr.bf16.mxu0 0
      %2634 = vmatpush1.bf16.msra.mxu0 %v2619
      %2635 = vmatprep.subr.bf16.mxu0 0
      %2636 = vmatpush1.bf16.msra.mxu0 %v2620
      %2637 = vmatprep.subr.bf16.mxu0 0
      %2638 = vmatpush1.bf16.msra.mxu0 %v2621
      %2639 = vmatprep.subr.bf16.mxu0 0
      %2640 = vmatpush1.bf16.msra.mxu0 %v2622
      %2641 = vmatprep.subr.bf16.mxu0 0
      %2642 = vmatpush1.bf16.msra.mxu0 0
      %2643 = vmatprep.subr.bf16.mxu0 0
      %2644 = vmatpush1.bf16.msra.mxu0 0
      %2645 = vmatprep.subr.bf16.mxu0 0
      %2646 = vmatpush1.bf16.msra.mxu0 0
      %2647 = vmatprep.subr.bf16.mxu0 0
      %2648 = vmatpush1.bf16.msra.mxu0 0
      %2649 = vmatprep.subr.bf16.mxu0 0
      %2650 = vmatpush1.bf16.msra.mxu0 0
      %2651 = vmatprep.subr.bf16.mxu0 0
      %2652 = vmatpush1.bf16.msra.mxu0 0
      %2653 = vmatprep.subr.bf16.mxu0 0
      %2654 = vmatpush1.bf16.msra.mxu0 0
      %2655 = vmatprep.subr.bf16.mxu0 0
      %2656 = vmatpush1.bf16.msra.mxu0 0
      %2657 = vmatprep.subr.bf16.mxu0 0
      %2658 = vmatpush1.bf16.msra.mxu0 0
      %2659 = vmatprep.subr.bf16.mxu0 0
      %2660 = vmatpush1.bf16.msra.mxu0 0
      %2661 = vmatprep.subr.bf16.mxu0 0
      %2662 = vmatpush1.bf16.msra.mxu0 0
      %2663 = vmatprep.subr.bf16.mxu0 0
      %2664 = vmatpush1.bf16.msra.mxu0 0
      %2665 = vmatprep.mubr.bf16.mxu0 0
      %2666 = vmatmul.mubr.bf16.gmra.mrb[0].mxu0 %v2628
      %v2667 = vpop.f32.mrb[0].mxu0
      %v2668 = vadd.f32 %v2601, %v2667
      %v2669 = vpop.f32.mrb[0].mxu0
      %v2670 = vpop.f32.mrb[0].mxu0
      %v2671 = vadd.f32 %v2601, %v2670
      %v2672 = vpop.f32.mrb[0].mxu0
      %2673 = vmatprep.mubr.bf16.mxu0 0
      %2674 = vmatmul.mubr.bf16.gmra.mrb[0].mxu0 %v2631
      %v2675 = vpop.f32.mrb[0].mxu0
      %v2676 = vadd.f32 %v2601, %v2675
      %v2677 = vpop.f32.mrb[0].mxu0
      %v2678 = vpop.f32.mrb[0].mxu0
      %v2679 = vadd.f32 %v2601, %v2678
      %v2680 = vpop.f32.mrb[0].mxu0
      %2681 = vdwg.mxu0
      %v2682 = vadd.f32 %v2230, %v2668
      %v2683 = vadd.f32 %v2231, %v2671
      %v2684 = vadd.f32 %v2232, %v2676
      %v2685 = vadd.f32 %v2233, %v2679
      %v2686 = vmul.f32 %v2682, %v1774
      %v2687 = vmul.f32 %v2683, %v1775
      %v2688 = vmul.f32 %v2684, %v1776
      %v2689 = vmul.f32 %v2685, %v1777
      %v2690 = vmul.f32 %v2686, %v838
      %v2691 = vmul.f32 %v2687, %v839
      %v2692 = vmul.f32 %v2688, %v840
      %v2693 = vmul.f32 %v2689, %v841
      %v2694 = vld [vmem:[%s9] sm:$0x1]
      %v2695 = vld [vmem:[%s10] sm:$0x1]
      %v2696 = vsel %vm817, %v2690, 0.0
      %2697 = vadd.xlane.f32.xlu0 %v2696
      %v2698 = vpop.xlane.xlu0 %2697
      %v2699 = vsel %vm817, %v2691, 0.0
      %2700 = vadd.xlane.f32.xlu0 %v2699
      %v2701 = vpop.xlane.xlu0 %2700
      %v2702 = vsel %vm817, %v2692, 0.0
      %2703 = vadd.xlane.f32.xlu0 %v2702
      %v2704 = vpop.xlane.xlu0 %2703
      %v2705 = vsel %vm817, %v2693, 0.0
      %2706 = vadd.xlane.f32.xlu0 %v2705
      %v2707 = vpop.xlane.xlu0 %2706
      %v2708 = vmul.f32 %v2698, %v856
      %v2709 = vmul.f32 %v2701, %v856
      %v2710 = vmul.f32 %v2704, %v856
      %v2711 = vmul.f32 %v2707, %v856
      %v2712 = vsub.f32 %v2690, %v2708
      %v2713 = vsub.f32 %v2691, %v2709
      %v2714 = vsub.f32 %v2692, %v2710
      %v2715 = vsub.f32 %v2693, %v2711
      %v2716 = vmul.f32 %v2712, %v2712
      %v2717 = vmul.f32 %v2713, %v2713
      %v2718 = vmul.f32 %v2714, %v2714
      %v2719 = vmul.f32 %v2715, %v2715
      %v2720 = vsel %vm817, %v2716, 0.0
      %2721 = vadd.xlane.f32.xlu0 %v2720
      %v2722 = vpop.xlane.xlu0 %2721
      %v2723 = vsel %vm817, %v2717, 0.0
      %2724 = vadd.xlane.f32.xlu0 %v2723
      %v2725 = vpop.xlane.xlu0 %2724
      %v2726 = vsel %vm817, %v2718, 0.0
      %2727 = vadd.xlane.f32.xlu0 %v2726
      %v2728 = vpop.xlane.xlu0 %2727
      %v2729 = vsel %vm817, %v2719, 0.0
      %2730 = vadd.xlane.f32.xlu0 %v2729
      %v2731 = vpop.xlane.xlu0 %2730
      %v2732 = vmul.f32 %v2722, %v856
      %v2733 = vmul.f32 %v2725, %v856
      %v2734 = vmul.f32 %v2728, %v856
      %v2735 = vmul.f32 %v2731, %v856
      %v2736 = vadd.f32 %v2732, 1e-05
      %v2737 = vadd.f32 %v2733, 1e-05
      %v2738 = vadd.f32 %v2734, 1e-05
      %v2739 = vadd.f32 %v2735, 1e-05
      %v2740 = vrsqrt.pop %v2736
      %v2741 = vrsqrt.pop %v2737
      %v2742 = vrsqrt.pop %v2738
      %v2743 = vrsqrt.pop %v2739
      %v2744 = vmul.f32 %v2712, %v2740
      %v2745 = vmul.f32 %v2713, %v2741
      %v2746 = vmul.f32 %v2714, %v2742
      %v2747 = vmul.f32 %v2715, %v2743
      %v2749 = vlaneseq
      %v2750 = vshrl.u32 %v2749, 7
      %v2751 = vsub.s32 0, %v2750
      %v2752 = vrot.slane %v2694, %v2751
      %v2754 = vmul.f32 %v2744, %v2752
      %v2755 = vmul.f32 %v2745, %v2752
      %v2756 = vmul.f32 %v2746, %v2752
      %v2757 = vmul.f32 %v2747, %v2752
      %v2759 = vlaneseq
      %v2760 = vshrl.u32 %v2759, 7
      %v2761 = vsub.s32 0, %v2760
      %v2762 = vrot.slane %v2695, %v2761
      %v2764 = vadd.f32 %v2754, %v2762
      %v2765 = vadd.f32 %v2755, %v2762
      %v2766 = vadd.f32 %v2756, %v2762
      %v2767 = vadd.f32 %v2757, %v2762
      %v2768 = vmul.f32 %v2764, %v838
      %v2769 = vmul.f32 %v2765, %v839
      %v2770 = vmul.f32 %v2766, %v840
      %v2771 = vmul.f32 %v2767, %v841
      %v2772 = vld [vmem:[%s12] sm:$0x1]
      %v2773 = vrot.slane %v2768, 7
      %v2774 = vrot.slane %v2769, 7
      %v2775 = vrot.slane %v2770, 7
      %v2776 = vrot.slane %v2771, 7
      %v2777 = vsel %vm566, %v2775, %v2776
      %v2778 = vsel %vm566, %v2774, %v2775
      %v2779 = vsel %vm566, %v2773, %v2774
      %v2780 = vsel %vm566, %v2776, %v2773
      %v2781 = vmul.f32 %v2780, %v579
      %v2782 = vmul.f32 %v2779, %v580
      %v2783 = vmul.f32 %v2778, %v581
      %v2784 = vmul.f32 %v2777, %v582
      %v2785 = vpack.c.bf16 %v2782, %v2781
      %v2786 = vpack.c.bf16 %v2784, %v2783
      %v2787 = vld [vmem:[%s11] sm:$0xf]
      %v2788 = vld [vmem:[%s11 + $0x4] sm:$0xf]
      %v2789 = vld [vmem:[%s11 + $0x8] sm:$0xf]
      %v2790 = vld [vmem:[%s11 + $0xc] sm:$0xf]
      %v2791 = vpack.c.bf16 %v2769, %v2768
      %v2792 = vpack.c.bf16 %v2771, %v2770
      %s2793 = scalar_lea.vmem %s11, 16
      %v2794 = vld [vmem:[%s2793] sm:$0xf]
      %v2795 = vld [vmem:[%s2793 + $0x4] sm:$0xf]
      %v2796 = vld [vmem:[%s2793 + $0x8] sm:$0xf]
      %v2797 = vld [vmem:[%s2793 + $0xc] sm:$0xf]
      %v2802 = vunpack.c.l.b16 %v2794
      %v2803 = vunpack.c.l.b16 %v2795
      %v2804 = vunpack.c.l.b16 %v2796
      %v2805 = vunpack.c.l.b16 %v2797
      %v2806 = vpack.c.b16 %v2803, %v2802
      %v2807 = vpack.c.b16 %v2805, %v2804
      %v2811 = vsel %vm817, %v2791, 0
      %v2814 = vsel %vm817, %v2792, 0
      %2816 = vmatprep.subr.bf16.mxu0 0
      %2817 = vmatpush1.bf16.msra.mxu0 %v2806
      %2818 = vmatprep.subr.bf16.mxu0 0
      %2819 = vmatpush1.bf16.msra.mxu0 %v2807
      %2820 = vmatprep.subr.bf16.mxu0 0
      %2821 = vmatpush1.bf16.msra.mxu0 0
      %2822 = vmatprep.subr.bf16.mxu0 0
      %2823 = vmatpush1.bf16.msra.mxu0 0
      %2824 = vmatprep.subr.bf16.mxu0 0
      %2825 = vmatpush1.bf16.msra.mxu0 0
      %2826 = vmatprep.subr.bf16.mxu0 0
      %2827 = vmatpush1.bf16.msra.mxu0 0
      %2828 = vmatprep.subr.bf16.mxu0 0
      %2829 = vmatpush1.bf16.msra.mxu0 0
      %2830 = vmatprep.subr.bf16.mxu0 0
      %2831 = vmatpush1.bf16.msra.mxu0 0
      %2832 = vmatprep.subr.bf16.mxu0 0
      %2833 = vmatpush1.bf16.msra.mxu0 0
      %2834 = vmatprep.subr.bf16.mxu0 0
      %2835 = vmatpush1.bf16.msra.mxu0 0
      %2836 = vmatprep.subr.bf16.mxu0 0
      %2837 = vmatpush1.bf16.msra.mxu0 0
      %2838 = vmatprep.subr.bf16.mxu0 0
      %2839 = vmatpush1.bf16.msra.mxu0 0
      %2840 = vmatprep.subr.bf16.mxu0 0
      %2841 = vmatpush1.bf16.msra.mxu0 0
      %2842 = vmatprep.subr.bf16.mxu0 0
      %2843 = vmatpush1.bf16.msra.mxu0 0
      %2844 = vmatprep.subr.bf16.mxu0 0
      %2845 = vmatpush1.bf16.msra.mxu0 0
      %2846 = vmatprep.subr.bf16.mxu0 0
      %2847 = vmatpush1.bf16.msra.mxu0 0
      %2848 = vmatprep.mubr.bf16.mxu0 0
      %2849 = vmatmul.mubr.bf16.gmra.mrb[0].mxu0 %v2811
      %v2850 = vpop.f32.mrb[0].mxu0
      %v2851 = vadd.f32 0.0, %v2850
      %v2852 = vpop.f32.mrb[0].mxu0
      %v2853 = vpop.f32.mrb[0].mxu0
      %v2854 = vadd.f32 0.0, %v2853
      %v2855 = vpop.f32.mrb[0].mxu0
      %2856 = vmatprep.mubr.bf16.mxu0 0
      %2857 = vmatmul.mubr.bf16.gmra.mrb[0].mxu0 %v2814
      %v2858 = vpop.f32.mrb[0].mxu0
      %v2859 = vadd.f32 0.0, %v2858
      %v2860 = vpop.f32.mrb[0].mxu0
      %v2861 = vpop.f32.mrb[0].mxu0
      %v2862 = vadd.f32 0.0, %v2861
      %v2863 = vpop.f32.mrb[0].mxu0
      %2864 = vdwg.mxu0
      %v2869 = vunpack.c.l.b16 %v2787
      %v2870 = vunpack.c.l.b16 %v2788
      %v2871 = vunpack.c.l.b16 %v2789
      %v2872 = vunpack.c.l.b16 %v2790
      %v2873 = vpack.c.b16 %v2870, %v2869
      %v2874 = vpack.c.b16 %v2872, %v2871
      %v2878 = vsel %vm817, %v2785, 0
      %v2881 = vsel %vm817, %v2786, 0
      %2883 = vmatprep.subr.bf16.mxu0 0
      %2884 = vmatpush1.bf16.msra.mxu0 %v2873
      %2885 = vmatprep.subr.bf16.mxu0 0
      %2886 = vmatpush1.bf16.msra.mxu0 %v2874
      %2887 = vmatprep.subr.bf16.mxu0 0
      %2888 = vmatpush1.bf16.msra.mxu0 0
      %2889 = vmatprep.subr.bf16.mxu0 0
      %2890 = vmatpush1.bf16.msra.mxu0 0
      %2891 = vmatprep.subr.bf16.mxu0 0
      %2892 = vmatpush1.bf16.msra.mxu0 0
      %2893 = vmatprep.subr.bf16.mxu0 0
      %2894 = vmatpush1.bf16.msra.mxu0 0
      %2895 = vmatprep.subr.bf16.mxu0 0
      %2896 = vmatpush1.bf16.msra.mxu0 0
      %2897 = vmatprep.subr.bf16.mxu0 0
      %2898 = vmatpush1.bf16.msra.mxu0 0
      %2899 = vmatprep.subr.bf16.mxu0 0
      %2900 = vmatpush1.bf16.msra.mxu0 0
      %2901 = vmatprep.subr.bf16.mxu0 0
      %2902 = vmatpush1.bf16.msra.mxu0 0
      %2903 = vmatprep.subr.bf16.mxu0 0
      %2904 = vmatpush1.bf16.msra.mxu0 0
      %2905 = vmatprep.subr.bf16.mxu0 0
      %2906 = vmatpush1.bf16.msra.mxu0 0
      %2907 = vmatprep.subr.bf16.mxu0 0
      %2908 = vmatpush1.bf16.msra.mxu0 0
      %2909 = vmatprep.subr.bf16.mxu0 0
      %2910 = vmatpush1.bf16.msra.mxu0 0
      %2911 = vmatprep.subr.bf16.mxu0 0
      %2912 = vmatpush1.bf16.msra.mxu0 0
      %2913 = vmatprep.subr.bf16.mxu0 0
      %2914 = vmatpush1.bf16.msra.mxu0 0
      %2915 = vmatprep.mubr.bf16.mxu0 0
      %2916 = vmatmul.mubr.bf16.gmra.mrb[0].mxu0 %v2878
      %v2917 = vpop.f32.mrb[0].mxu0
      %v2918 = vadd.f32 %v2851, %v2917
      %v2919 = vpop.f32.mrb[0].mxu0
      %v2920 = vpop.f32.mrb[0].mxu0
      %v2921 = vadd.f32 %v2854, %v2920
      %v2922 = vpop.f32.mrb[0].mxu0
      %2923 = vmatprep.mubr.bf16.mxu0 0
      %2924 = vmatmul.mubr.bf16.gmra.mrb[0].mxu0 %v2881
      %v2925 = vpop.f32.mrb[0].mxu0
      %v2926 = vadd.f32 %v2859, %v2925
      %v2927 = vpop.f32.mrb[0].mxu0
      %v2928 = vpop.f32.mrb[0].mxu0
      %v2929 = vadd.f32 %v2862, %v2928
      %v2930 = vpop.f32.mrb[0].mxu0
      %2931 = vdwg.mxu0
      %v2932 = vrot.slane %v2768, 1
      %v2933 = vrot.slane %v2769, 1
      %v2934 = vrot.slane %v2770, 1
      %v2935 = vrot.slane %v2771, 1
      %v2936 = vsel %vm716, %v2934, %v2935
      %v2937 = vsel %vm716, %v2933, %v2934
      %v2938 = vsel %vm716, %v2932, %v2933
      %v2939 = vsel %vm716, %v2935, %v2932
      %v2940 = vmul.f32 %v2938, %v729
      %v2941 = vmul.f32 %v2937, %v730
      %v2942 = vmul.f32 %v2936, %v731
      %v2943 = vmul.f32 %v2939, %v732
      %v2944 = vpack.c.bf16 %v2941, %v2940
      %v2945 = vpack.c.bf16 %v2943, %v2942
      %s2946 = scalar_lea.vmem %s11, 32
      %v2947 = vld [vmem:[%s2946] sm:$0xf]
      %v2948 = vld [vmem:[%s2946 + $0x4] sm:$0xf]
      %v2949 = vld [vmem:[%s2946 + $0x8] sm:$0xf]
      %v2950 = vld [vmem:[%s2946 + $0xc] sm:$0xf]
      %v2955 = vunpack.c.l.b16 %v2947
      %v2956 = vunpack.c.l.b16 %v2948
      %v2957 = vunpack.c.l.b16 %v2949
      %v2958 = vunpack.c.l.b16 %v2950
      %v2959 = vpack.c.b16 %v2956, %v2955
      %v2960 = vpack.c.b16 %v2958, %v2957
      %v2964 = vsel %vm817, %v2944, 0
      %v2967 = vsel %vm817, %v2945, 0
      %2969 = vmatprep.subr.bf16.mxu0 0
      %2970 = vmatpush1.bf16.msra.mxu0 %v2959
      %2971 = vmatprep.subr.bf16.mxu0 0
      %2972 = vmatpush1.bf16.msra.mxu0 %v2960
      %2973 = vmatprep.subr.bf16.mxu0 0
      %2974 = vmatpush1.bf16.msra.mxu0 0
      %2975 = vmatprep.subr.bf16.mxu0 0
      %2976 = vmatpush1.bf16.msra.mxu0 0
      %2977 = vmatprep.subr.bf16.mxu0 0
      %2978 = vmatpush1.bf16.msra.mxu0 0
      %2979 = vmatprep.subr.bf16.mxu0 0
      %2980 = vmatpush1.bf16.msra.mxu0 0
      %2981 = vmatprep.subr.bf16.mxu0 0
      %2982 = vmatpush1.bf16.msra.mxu0 0
      %2983 = vmatprep.subr.bf16.mxu0 0
      %2984 = vmatpush1.bf16.msra.mxu0 0
      %2985 = vmatprep.subr.bf16.mxu0 0
      %2986 = vmatpush1.bf16.msra.mxu0 0
      %2987 = vmatprep.subr.bf16.mxu0 0
      %2988 = vmatpush1.bf16.msra.mxu0 0
      %2989 = vmatprep.subr.bf16.mxu0 0
      %2990 = vmatpush1.bf16.msra.mxu0 0
      %2991 = vmatprep.subr.bf16.mxu0 0
      %2992 = vmatpush1.bf16.msra.mxu0 0
      %2993 = vmatprep.subr.bf16.mxu0 0
      %2994 = vmatpush1.bf16.msra.mxu0 0
      %2995 = vmatprep.subr.bf16.mxu0 0
      %2996 = vmatpush1.bf16.msra.mxu0 0
      %2997 = vmatprep.subr.bf16.mxu0 0
      %2998 = vmatpush1.bf16.msra.mxu0 0
      %2999 = vmatprep.subr.bf16.mxu0 0
      %3000 = vmatpush1.bf16.msra.mxu0 0
      %3001 = vmatprep.mubr.bf16.mxu0 0
      %3002 = vmatmul.mubr.bf16.gmra.mrb[0].mxu0 %v2964
      %v3003 = vpop.f32.mrb[0].mxu0
      %v3004 = vadd.f32 0.0, %v3003
      %v3005 = vpop.f32.mrb[0].mxu0
      %v3006 = vpop.f32.mrb[0].mxu0
      %v3007 = vadd.f32 0.0, %v3006
      %v3008 = vpop.f32.mrb[0].mxu0
      %3009 = vmatprep.mubr.bf16.mxu0 0
      %3010 = vmatmul.mubr.bf16.gmra.mrb[0].mxu0 %v2967
      %v3011 = vpop.f32.mrb[0].mxu0
      %v3012 = vadd.f32 0.0, %v3011
      %v3013 = vpop.f32.mrb[0].mxu0
      %v3014 = vpop.f32.mrb[0].mxu0
      %v3015 = vadd.f32 0.0, %v3014
      %v3016 = vpop.f32.mrb[0].mxu0
      %3017 = vdwg.mxu0
      %v3018 = vadd.f32 %v2918, %v3004
      %v3019 = vadd.f32 %v2921, %v3007
      %v3020 = vadd.f32 %v2926, %v3012
      %v3021 = vadd.f32 %v2929, %v3015
      %v3023 = vlaneseq
      %v3024 = vshrl.u32 %v3023, 7
      %v3025 = vsub.s32 0, %v3024
      %v3026 = vrot.slane %v2772, %v3025
      %v3028 = vadd.f32 %v3018, %v3026
      %v3029 = vadd.f32 %v3019, %v3026
      %v3030 = vadd.f32 %v3020, %v3026
      %v3031 = vadd.f32 %v3021, %v3026
      %v3032 = vld [vmem:[%s14] sm:$0x1]
      %v3033 = vrot.slane %v3028, 7
      %v3034 = vrot.slane %v3029, 7
      %v3035 = vrot.slane %v3030, 7
      %v3036 = vrot.slane %v3031, 7
      %v3037 = vsel %vm566, %v3035, %v3036
      %v3038 = vsel %vm566, %v3034, %v3035
      %v3039 = vsel %vm566, %v3033, %v3034
      %v3040 = vsel %vm566, %v3036, %v3033
      %v3041 = vmul.f32 %v3040, %v579
      %v3042 = vmul.f32 %v3039, %v580
      %v3043 = vmul.f32 %v3038, %v581
      %v3044 = vmul.f32 %v3037, %v582
      %v3045 = vpack.c.bf16 %v3042, %v3041
      %v3046 = vpack.c.bf16 %v3044, %v3043
      %v3047 = vld [vmem:[%s13] sm:$0xf]
      %v3048 = vld [vmem:[%s13 + $0x4] sm:$0xf]
      %v3049 = vld [vmem:[%s13 + $0x8] sm:$0xf]
      %v3050 = vld [vmem:[%s13 + $0xc] sm:$0xf]
      %v3051 = vpack.c.bf16 %v3029, %v3028
      %v3052 = vpack.c.bf16 %v3031, %v3030
      %s3053 = scalar_lea.vmem %s13, 16
      %v3054 = vld [vmem:[%s3053] sm:$0xf]
      %v3055 = vld [vmem:[%s3053 + $0x4] sm:$0xf]
      %v3056 = vld [vmem:[%s3053 + $0x8] sm:$0xf]
      %v3057 = vld [vmem:[%s3053 + $0xc] sm:$0xf]
      %v3062 = vunpack.c.l.b16 %v3054
      %v3063 = vunpack.c.l.b16 %v3055
      %v3064 = vunpack.c.l.b16 %v3056
      %v3065 = vunpack.c.l.b16 %v3057
      %v3066 = vpack.c.b16 %v3063, %v3062
      %v3067 = vpack.c.b16 %v3065, %v3064
      %v3071 = vsel %vm817, %v3051, 0
      %v3074 = vsel %vm817, %v3052, 0
      %3076 = vmatprep.subr.bf16.mxu0 0
      %3077 = vmatpush1.bf16.msra.mxu0 %v3066
      %3078 = vmatprep.subr.bf16.mxu0 0
      %3079 = vmatpush1.bf16.msra.mxu0 %v3067
      %3080 = vmatprep.subr.bf16.mxu0 0
      %3081 = vmatpush1.bf16.msra.mxu0 0
      %3082 = vmatprep.subr.bf16.mxu0 0
      %3083 = vmatpush1.bf16.msra.mxu0 0
      %3084 = vmatprep.subr.bf16.mxu0 0
      %3085 = vmatpush1.bf16.msra.mxu0 0
      %3086 = vmatprep.subr.bf16.mxu0 0
      %3087 = vmatpush1.bf16.msra.mxu0 0
      %3088 = vmatprep.subr.bf16.mxu0 0
      %3089 = vmatpush1.bf16.msra.mxu0 0
      %3090 = vmatprep.subr.bf16.mxu0 0
      %3091 = vmatpush1.bf16.msra.mxu0 0
      %3092 = vmatprep.subr.bf16.mxu0 0
      %3093 = vmatpush1.bf16.msra.mxu0 0
      %3094 = vmatprep.subr.bf16.mxu0 0
      %3095 = vmatpush1.bf16.msra.mxu0 0
      %3096 = vmatprep.subr.bf16.mxu0 0
      %3097 = vmatpush1.bf16.msra.mxu0 0
      %3098 = vmatprep.subr.bf16.mxu0 0
      %3099 = vmatpush1.bf16.msra.mxu0 0
      %3100 = vmatprep.subr.bf16.mxu0 0
      %3101 = vmatpush1.bf16.msra.mxu0 0
      %3102 = vmatprep.subr.bf16.mxu0 0
      %3103 = vmatpush1.bf16.msra.mxu0 0
      %3104 = vmatprep.subr.bf16.mxu0 0
      %3105 = vmatpush1.bf16.msra.mxu0 0
      %3106 = vmatprep.subr.bf16.mxu0 0
      %3107 = vmatpush1.bf16.msra.mxu0 0
      %3108 = vmatprep.mubr.bf16.mxu0 0
      %3109 = vmatmul.mubr.bf16.gmra.mrb[0].mxu0 %v3071
      %v3110 = vpop.f32.mrb[0].mxu0
      %v3111 = vadd.f32 0.0, %v3110
      %v3112 = vpop.f32.mrb[0].mxu0
      %v3113 = vpop.f32.mrb[0].mxu0
      %v3114 = vadd.f32 0.0, %v3113
      %v3115 = vpop.f32.mrb[0].mxu0
      %3116 = vmatprep.mubr.bf16.mxu0 0
      %3117 = vmatmul.mubr.bf16.gmra.mrb[0].mxu0 %v3074
      %v3118 = vpop.f32.mrb[0].mxu0
      %v3119 = vadd.f32 0.0, %v3118
      %v3120 = vpop.f32.mrb[0].mxu0
      %v3121 = vpop.f32.mrb[0].mxu0
      %v3122 = vadd.f32 0.0, %v3121
      %v3123 = vpop.f32.mrb[0].mxu0
      %3124 = vdwg.mxu0
      %v3129 = vunpack.c.l.b16 %v3047
      %v3130 = vunpack.c.l.b16 %v3048
      %v3131 = vunpack.c.l.b16 %v3049
      %v3132 = vunpack.c.l.b16 %v3050
      %v3133 = vpack.c.b16 %v3130, %v3129
      %v3134 = vpack.c.b16 %v3132, %v3131
      %v3138 = vsel %vm817, %v3045, 0
      %v3141 = vsel %vm817, %v3046, 0
      %3143 = vmatprep.subr.bf16.mxu0 0
      %3144 = vmatpush1.bf16.msra.mxu0 %v3133
      %3145 = vmatprep.subr.bf16.mxu0 0
      %3146 = vmatpush1.bf16.msra.mxu0 %v3134
      %3147 = vmatprep.subr.bf16.mxu0 0
      %3148 = vmatpush1.bf16.msra.mxu0 0
      %3149 = vmatprep.subr.bf16.mxu0 0
      %3150 = vmatpush1.bf16.msra.mxu0 0
      %3151 = vmatprep.subr.bf16.mxu0 0
      %3152 = vmatpush1.bf16.msra.mxu0 0
      %3153 = vmatprep.subr.bf16.mxu0 0
      %3154 = vmatpush1.bf16.msra.mxu0 0
      %3155 = vmatprep.subr.bf16.mxu0 0
      %3156 = vmatpush1.bf16.msra.mxu0 0
      %3157 = vmatprep.subr.bf16.mxu0 0
      %3158 = vmatpush1.bf16.msra.mxu0 0
      %3159 = vmatprep.subr.bf16.mxu0 0
      %3160 = vmatpush1.bf16.msra.mxu0 0
      %3161 = vmatprep.subr.bf16.mxu0 0
      %3162 = vmatpush1.bf16.msra.mxu0 0
      %3163 = vmatprep.subr.bf16.mxu0 0
      %3164 = vmatpush1.bf16.msra.mxu0 0
      %3165 = vmatprep.subr.bf16.mxu0 0
      %3166 = vmatpush1.bf16.msra.mxu0 0
      %3167 = vmatprep.subr.bf16.mxu0 0
      %3168 = vmatpush1.bf16.msra.mxu0 0
      %3169 = vmatprep.subr.bf16.mxu0 0
      %3170 = vmatpush1.bf16.msra.mxu0 0
      %3171 = vmatprep.subr.bf16.mxu0 0
      %3172 = vmatpush1.bf16.msra.mxu0 0
      %3173 = vmatprep.subr.bf16.mxu0 0
      %3174 = vmatpush1.bf16.msra.mxu0 0
      %3175 = vmatprep.mubr.bf16.mxu0 0
      %3176 = vmatmul.mubr.bf16.gmra.mrb[0].mxu0 %v3138
      %v3177 = vpop.f32.mrb[0].mxu0
      %v3178 = vadd.f32 %v3111, %v3177
      %v3179 = vpop.f32.mrb[0].mxu0
      %v3180 = vpop.f32.mrb[0].mxu0
      %v3181 = vadd.f32 %v3114, %v3180
      %v3182 = vpop.f32.mrb[0].mxu0
      %3183 = vmatprep.mubr.bf16.mxu0 0
      %3184 = vmatmul.mubr.bf16.gmra.mrb[0].mxu0 %v3141
      %v3185 = vpop.f32.mrb[0].mxu0
      %v3186 = vadd.f32 %v3119, %v3185
      %v3187 = vpop.f32.mrb[0].mxu0
      %v3188 = vpop.f32.mrb[0].mxu0
      %v3189 = vadd.f32 %v3122, %v3188
      %v3190 = vpop.f32.mrb[0].mxu0
      %3191 = vdwg.mxu0
      %v3192 = vrot.slane %v3028, 1
      %v3193 = vrot.slane %v3029, 1
      %v3194 = vrot.slane %v3030, 1
      %v3195 = vrot.slane %v3031, 1
      %v3196 = vsel %vm716, %v3194, %v3195
      %v3197 = vsel %vm716, %v3193, %v3194
      %v3198 = vsel %vm716, %v3192, %v3193
      %v3199 = vsel %vm716, %v3195, %v3192
      %v3200 = vmul.f32 %v3198, %v729
      %v3201 = vmul.f32 %v3197, %v730
      %v3202 = vmul.f32 %v3196, %v731
      %v3203 = vmul.f32 %v3199, %v732
      %v3204 = vpack.c.bf16 %v3201, %v3200
      %v3205 = vpack.c.bf16 %v3203, %v3202
      %s3206 = scalar_lea.vmem %s13, 32
      %v3207 = vld [vmem:[%s3206] sm:$0xf]
      %v3208 = vld [vmem:[%s3206 + $0x4] sm:$0xf]
      %v3209 = vld [vmem:[%s3206 + $0x8] sm:$0xf]
      %v3210 = vld [vmem:[%s3206 + $0xc] sm:$0xf]
      %v3215 = vunpack.c.l.b16 %v3207
      %v3216 = vunpack.c.l.b16 %v3208
      %v3217 = vunpack.c.l.b16 %v3209
      %v3218 = vunpack.c.l.b16 %v3210
      %v3219 = vpack.c.b16 %v3216, %v3215
      %v3220 = vpack.c.b16 %v3218, %v3217
      %v3224 = vsel %vm817, %v3204, 0
      %v3227 = vsel %vm817, %v3205, 0
      %3229 = vmatprep.subr.bf16.mxu0 0
      %3230 = vmatpush1.bf16.msra.mxu0 %v3219
      %3231 = vmatprep.subr.bf16.mxu0 0
      %3232 = vmatpush1.bf16.msra.mxu0 %v3220
      %3233 = vmatprep.subr.bf16.mxu0 0
      %3234 = vmatpush1.bf16.msra.mxu0 0
      %3235 = vmatprep.subr.bf16.mxu0 0
      %3236 = vmatpush1.bf16.msra.mxu0 0
      %3237 = vmatprep.subr.bf16.mxu0 0
      %3238 = vmatpush1.bf16.msra.mxu0 0
      %3239 = vmatprep.subr.bf16.mxu0 0
      %3240 = vmatpush1.bf16.msra.mxu0 0
      %3241 = vmatprep.subr.bf16.mxu0 0
      %3242 = vmatpush1.bf16.msra.mxu0 0
      %3243 = vmatprep.subr.bf16.mxu0 0
      %3244 = vmatpush1.bf16.msra.mxu0 0
      %3245 = vmatprep.subr.bf16.mxu0 0
      %3246 = vmatpush1.bf16.msra.mxu0 0
      %3247 = vmatprep.subr.bf16.mxu0 0
      %3248 = vmatpush1.bf16.msra.mxu0 0
      %3249 = vmatprep.subr.bf16.mxu0 0
      %3250 = vmatpush1.bf16.msra.mxu0 0
      %3251 = vmatprep.subr.bf16.mxu0 0
      %3252 = vmatpush1.bf16.msra.mxu0 0
      %3253 = vmatprep.subr.bf16.mxu0 0
      %3254 = vmatpush1.bf16.msra.mxu0 0
      %3255 = vmatprep.subr.bf16.mxu0 0
      %3256 = vmatpush1.bf16.msra.mxu0 0
      %3257 = vmatprep.subr.bf16.mxu0 0
      %3258 = vmatpush1.bf16.msra.mxu0 0
      %3259 = vmatprep.subr.bf16.mxu0 0
      %3260 = vmatpush1.bf16.msra.mxu0 0
      %3261 = vmatprep.mubr.bf16.mxu0 0
      %3262 = vmatmul.mubr.bf16.gmra.mrb[0].mxu0 %v3224
      %v3263 = vpop.f32.mrb[0].mxu0
      %v3264 = vadd.f32 0.0, %v3263
      %v3265 = vpop.f32.mrb[0].mxu0
      %v3266 = vpop.f32.mrb[0].mxu0
      %v3267 = vadd.f32 0.0, %v3266
      %v3268 = vpop.f32.mrb[0].mxu0
      %3269 = vmatprep.mubr.bf16.mxu0 0
      %3270 = vmatmul.mubr.bf16.gmra.mrb[0].mxu0 %v3227
      %v3271 = vpop.f32.mrb[0].mxu0
      %v3272 = vadd.f32 0.0, %v3271
      %v3273 = vpop.f32.mrb[0].mxu0
      %v3274 = vpop.f32.mrb[0].mxu0
      %v3275 = vadd.f32 0.0, %v3274
      %v3276 = vpop.f32.mrb[0].mxu0
      %3277 = vdwg.mxu0
      %v3278 = vadd.f32 %v3178, %v3264
      %v3279 = vadd.f32 %v3181, %v3267
      %v3280 = vadd.f32 %v3186, %v3272
      %v3281 = vadd.f32 %v3189, %v3275
      %v3283 = vlaneseq
      %v3284 = vshrl.u32 %v3283, 7
      %v3285 = vsub.s32 0, %v3284
      %v3286 = vrot.slane %v3032, %v3285
      %v3288 = vadd.f32 %v3278, %v3286
      %v3289 = vadd.f32 %v3279, %v3286
      %v3290 = vadd.f32 %v3280, %v3286
      %v3291 = vadd.f32 %v3281, %v3286
      %3292 = vst.msk [vmem:[%s501] sm:$0xff] %vm594, %v3288
      %3293 = vst.msk [vmem:[%s501 + $0x8] sm:$0xff] %vm594, %v3289
      %3294 = vst.msk [vmem:[%s501 + $0x10] sm:$0xff] %vm594, %v3290
      %3295 = vst.msk [vmem:[%s501 + $0x18] sm:$0xff] %vm594, %v3291
      %s3296 = smul.u32 2, %s26
      %p3297 = scmp.lt.s32.totalorder %s3296, 3
      %s3298 = scalar_select %p3297, %s3296, 3
      %s3299 = smul.addr %s3298, 2
      %s3300 = smul.addr %s3299, 8
      %s3301 = scalar_lea.vmem %s15, %s3300
      // Predicated region
      $region81: #{unet_mid_forward.1} parent=79 // pred_check
        %p3302 = pneg %p364
      $region82: #{unet_mid_forward.1} parent=79 // pred_check_branch
        %3304 = sbr.rel (%p3302) target = $region84
      $region83: #{unet_mid_forward.1} parent=79 // pred_region
        %s3305 = smul.u32 2, %s26
      $region84: #{unet_mid_forward.1} parent=79 // pred_fallthru
        _
    $region80: #{unet_mid_forward.1} parent=5 // pred_fallthru
      _
    %p3306 = scmp.le.s32.totalorder 2, %s21
    // Predicated region
    $region85: #{unet_mid_forward.1} parent=5 // pred_check
      %p3307 = pneg %p3306
    $region86: #{unet_mid_forward.1} parent=5 // pred_check_branch
      %3309 = sbr.rel (%p3307) target = $region88
    $region87: #{unet_mid_forward.1} parent=5 // pred_region
      %s3310 = ssub.s32 %s21, 2
      // Predicated region
      $region89: #{unet_mid_forward.1} parent=87 // pred_check
        %p3311 = pneg %p370
      $region90: #{unet_mid_forward.1} parent=87 // pred_check_branch
        %3313 = sbr.rel (%p3311) target = $region92
      $region91: #{unet_mid_forward.1} parent=87 // pred_region
        %s3314 = smul.u32 2, %s27
        %p3315 = scmp.lt.s32.totalorder %s3314, 3
        %s3316 = scalar_select %p3315, %s3314, 3
        %s3317 = smul.addr %s3316, 2
        %s3318 = smul.addr %s3317, 8
        %s3319 = scalar_lea.vmem %s15, %s3318
      $region92: #{unet_mid_forward.1} parent=87 // pred_fallthru
        _
    $region88: #{unet_mid_forward.1} parent=5 // pred_fallthru
      _
  $region6: #{unet_mid_forward.1} parent=0 // loop_footer
    %s25 = sadd.s32 1, %s21
  $region7: #{unet_mid_forward.1} parent=0 // loop_footer_branch
    %20 = sbr.rel target = $region3
  $region8: #{unet_mid_forward.1} parent=0 // loop_exit
    _

</llo_original>
